<compile_context>
chip_gen: v6e
topology: v6e:2x2x1
jax: 0.10.0
libtpu: 0.0.40
codegen_flags: <defaults>
</compile_context>

<pallas_src>
import math
import functools

import jax
import jax.numpy as jnp
from jax import lax
from jax.experimental import pallas as pl
from jax.experimental.pallas import tpu as pltpu


# ---------------------------------------------------------------------------
# Helpers
# ---------------------------------------------------------------------------

def _pick_row_tile(n, max_tile=512):
    """Largest multiple-of-8 divisor of n (<= max_tile), preferring >=2 grid steps."""
    cands = [t for t in range(8, min(n, max_tile) + 1, 8) if n % t == 0]
    if not cands:
        raise ValueError("token count (seq_len * batch) must be a multiple of 8")
    multi = [t for t in cands if n // t >= 2]   # >=2 steps -> v7x dual-TC sharding
    return max(multi) if multi else max(cands)


def _resident(shape):
    """BlockSpec for a VMEM-resident (constant index_map) parameter."""
    return pl.BlockSpec(shape, lambda i: tuple(0 for _ in shape))


def _parallel():
    return pltpu.CompilerParams(dimension_semantics=("parallel",))


# ---------------------------------------------------------------------------
# Kernel A: LayerNorm + fused QKV projection
#   qkv = LN(x) @ Wqkv + bqkv        (Wqkv = [Wq | Wk | Wv], shape [D, 3D])
# ---------------------------------------------------------------------------

def _ln_qkv_kernel(x_ref, g_ref, b_ref, w_ref, wb_ref, qkv_ref, *, eps):
    x = x_ref[...].astype(jnp.float32)
    mean = jnp.mean(x, axis=-1, keepdims=True)
    xc = x - mean
    var = jnp.mean(xc * xc, axis=-1, keepdims=True)
    z = xc * lax.rsqrt(var + eps) * g_ref[...] + b_ref[...]
    acc = jnp.dot(z, w_ref[...], preferred_element_type=jnp.float32) + wb_ref[...]
    qkv_ref[...] = acc.astype(qkv_ref.dtype)


def ln_qkv(x2, gamma, beta, wqkv, bqkv, *, row_tile, eps=1e-5):
    n, d = x2.shape
    d3 = wqkv.shape[1]
    return pl.pallas_call(
        functools.partial(_ln_qkv_kernel, eps=eps),
        grid_spec=pltpu.PrefetchScalarGridSpec(
            num_scalar_prefetch=0,
            grid=(n // row_tile,),
            in_specs=[
                pl.BlockSpec((row_tile, d), lambda i: (i, 0)),
                _resident((1, d)),        # gamma
                _resident((1, d)),        # beta
                _resident((d, d3)),       # Wqkv
                _resident((1, d3)),       # bqkv
            ],
            out_specs=pl.BlockSpec((row_tile, d3), lambda i: (i, 0)),
        ),
        out_shape=jax.ShapeDtypeStruct((n, d3), x2.dtype),
        compiler_params=_parallel(),
    )(x2, gamma.reshape(1, d), beta.reshape(1, d), wqkv, bqkv.reshape(1, d3))


# ---------------------------------------------------------------------------
# Kernel B: fused attention, one batch (all heads) per grid step.
#   qkv: [B, S, 3D];  bias: [B, S, S] additive mask bias;  out: [B, S, D]
# ---------------------------------------------------------------------------

def _attention_kernel(qkv_ref, bias_ref, o_ref, *, heads, d_model, scale):
    qkv = qkv_ref[0].astype(jnp.float32)          # (S, 3D)
    bias = bias_ref[0]                            # (S, S)
    dk = d_model // heads
    outs = []
    for h in range(heads):                        # static unroll (small H); all-2D ops
        lo = h * dk
        qh = qkv[:, lo:lo + dk]
        kh = qkv[:, d_model + lo:d_model + lo + dk]
        vh = qkv[:, 2 * d_model + lo:2 * d_model + lo + dk]
        # scores[i, j] = sum_d q[i, d] * k[j, d]   (contract last dims)
        s = lax.dot_general(qh, kh, (((1,), (1,)), ((), ())),
                            preferred_element_type=jnp.float32) * scale + bias
        s_max = jnp.max(s, axis=-1, keepdims=True)
        p = jnp.exp(s - s_max)
        denom = jnp.sum(p, axis=-1, keepdims=True)
        p = p * pl.reciprocal(denom, approx=True)           # divide -> EUP slot
        outs.append(jnp.dot(p, vh, preferred_element_type=jnp.float32))
    o_ref[0] = jnp.concatenate(outs, axis=-1).astype(o_ref.dtype)  # lane-dense store


def attention(qkv_b, bias_b, *, heads, d_model):
    batch, s, d3 = qkv_b.shape
    return pl.pallas_call(
        functools.partial(_attention_kernel, heads=heads, d_model=d_model,
                          scale=1.0 / math.sqrt(d_model // heads)),
        grid_spec=pltpu.PrefetchScalarGridSpec(
            num_scalar_prefetch=0,
            grid=(batch,),
            in_specs=[
                pl.BlockSpec((1, s, d3), lambda b: (b, 0, 0)),
                pl.BlockSpec((1, s, s), lambda b: (b, 0, 0)),
            ],
            out_specs=pl.BlockSpec((1, s, d_model), lambda b: (b, 0, 0)),
        ),
        out_shape=jax.ShapeDtypeStruct((batch, s, d_model), qkv_b.dtype),
        compiler_params=_parallel(),
    )(qkv_b, bias_b)


# ---------------------------------------------------------------------------
# Kernel C: attention-output projection + residual + LN2 + FF1(ReLU) + FF2
#           + residual. The [rows, d_ff] intermediate never leaves VMEM.
# ---------------------------------------------------------------------------

def _attnout_ffn_kernel(o_ref, x_ref, wo_ref, bo_ref, g_ref, b_ref,
                        w1_ref, b1_ref, w2_ref, b2_ref, y_ref, *, eps):
    x = x_ref[...].astype(jnp.float32)
    x = x + jnp.dot(o_ref[...], wo_ref[...],
                    preferred_element_type=jnp.float32) + bo_ref[...]
    mean = jnp.mean(x, axis=-1, keepdims=True)
    xc = x - mean
    var = jnp.mean(xc * xc, axis=-1, keepdims=True)
    z = xc * lax.rsqrt(var + eps) * g_ref[...] + b_ref[...]
    h = jnp.maximum(jnp.dot(z, w1_ref[...],
                            preferred_element_type=jnp.float32) + b1_ref[...], 0.0)
    y = x + jnp.dot(h, w2_ref[...],
                    preferred_element_type=jnp.float32) + b2_ref[...]
    y_ref[...] = y.astype(y_ref.dtype)


def attnout_ffn(o2, x2, wo, bo, gamma, beta, w1, b1, w2, b2, *, row_tile, eps=1e-5):
    n, d = x2.shape
    d_ff = w1.shape[1]
    return pl.pallas_call(
        functools.partial(_attnout_ffn_kernel, eps=eps),
        grid_spec=pltpu.PrefetchScalarGridSpec(
            num_scalar_prefetch=0,
            grid=(n // row_tile,),
            in_specs=[
                pl.BlockSpec((row_tile, d), lambda i: (i, 0)),   # attention output
                pl.BlockSpec((row_tile, d), lambda i: (i, 0)),   # residual x
                _resident((d, d)),      # Wo
                _resident((1, d)),      # bo
                _resident((1, d)),      # ln2 gamma
                _resident((1, d)),      # ln2 beta
                _resident((d, d_ff)),   # W1
                _resident((1, d_ff)),   # b1
                _resident((d_ff, d)),   # W2
                _resident((1, d)),      # b2
            ],
            out_specs=pl.BlockSpec((row_tile, d), lambda i: (i, 0)),
        ),
        out_shape=jax.ShapeDtypeStruct((n, d), x2.dtype),
        compiler_params=_parallel(),
    )(o2, x2, wo, bo.reshape(1, d), gamma.reshape(1, d), beta.reshape(1, d),
      w1, b1.reshape(1, d_ff), w2, b2.reshape(1, d))


# ---------------------------------------------------------------------------
# Final LayerNorm kernel
# ---------------------------------------------------------------------------

def _layernorm_kernel(x_ref, g_ref, b_ref, o_ref, *, eps):
    x = x_ref[...].astype(jnp.float32)
    mean = jnp.mean(x, axis=-1, keepdims=True)
    xc = x - mean
    var = jnp.mean(xc * xc, axis=-1, keepdims=True)
    o_ref[...] = (xc * lax.rsqrt(var + eps) * g_ref[...] + b_ref[...]).astype(o_ref.dtype)


def layernorm(x2, gamma, beta, *, row_tile, eps=1e-5):
    n, d = x2.shape
    return pl.pallas_call(
        functools.partial(_layernorm_kernel, eps=eps),
        grid_spec=pltpu.PrefetchScalarGridSpec(
            num_scalar_prefetch=0,
            grid=(n // row_tile,),
            in_specs=[
                pl.BlockSpec((row_tile, d), lambda i: (i, 0)),
                _resident((1, d)),
                _resident((1, d)),
            ],
            out_specs=pl.BlockSpec((row_tile, d), lambda i: (i, 0)),
        ),
        out_shape=jax.ShapeDtypeStruct((n, d), x2.dtype),
        compiler_params=_parallel(),
    )(x2, gamma.reshape(1, d), beta.reshape(1, d))


# ---------------------------------------------------------------------------
# Encoder forward (wrapper)
# ---------------------------------------------------------------------------

def _transformer_layer(x2, bias_b, p, *, batch, seq_len, d_model, heads, row_tile):
    n = x2.shape[0]
    # Fused QKV weights (one MXU matmul, N=3D fill instead of 3x N=D).
    wqkv = jnp.concatenate([p["wq"], p["wk"], p["wv"]], axis=1)
    bqkv = jnp.concatenate([p["bq"], p["bk"], p["bv"]])

    qkv = ln_qkv(x2, p["ln1_g"], p["ln1_b"], wqkv, bqkv, row_tile=row_tile)
    # Tokens are B-major, so this reshape is free (no transpose / HBM shuffle).
    qkv_b = qkv.reshape(batch, seq_len, 3 * d_model)
    o = attention(qkv_b, bias_b, heads=heads, d_model=d_model)
    o2 = o.reshape(n, d_model)
    # Dropout is identity at inference.
    return attnout_ffn(o2, x2, p["wo"], p["bo"], p["ln2_g"], p["ln2_b"],
                       p["w1"], p["b1"], p["w2"], p["b2"], row_tile=row_tile)


def encoder_forward(x, mask, params, *, heads):
    """x: [S, B, D] f32; mask: [S, S, B] (1 = attend, 0 = masked)."""
    seq_len, batch, d_model = x.shape
    n = batch * seq_len
    row_tile = _pick_row_tile(n)
    # Single layout change at entry: [S, B, D] -> [B*S, D] (B-major tokens).
    x2 = jnp.transpose(x, (1, 0, 2)).reshape(n, d_model)
    # Additive mask bias computed once for the whole encoder: [B, S, S].
    bias_b = jnp.where(jnp.transpose(mask, (2, 0, 1)) > 0.5, 0.0, -1e30).astype(jnp.float32)
    for p in params["layers"]:
        x2 = _transformer_layer(x2, bias_b, p, batch=batch, seq_len=seq_len,
                                d_model=d_model, heads=heads, row_tile=row_tile)
    x2 = layernorm(x2, params["norm_g"], params["norm_b"], row_tile=row_tile)
    return jnp.transpose(x2.reshape(batch, seq_len, d_model), (1, 0, 2))


# ---------------------------------------------------------------------------
# Parameter init (PyTorch-like) and pure-JAX reference of the PyTorch forward
# ---------------------------------------------------------------------------

def init_params(key, *, n_layers, d_model, d_ff):
    def linear_init(k, fan_in, fan_out):
        kw, kb = jax.random.split(k)
        bound = 1.0 / math.sqrt(fan_in)
        w = jax.random.uniform(kw, (fan_in, fan_out), jnp.float32, -bound, bound)
        b = jax.random.uniform(kb, (fan_out,), jnp.float32, -bound, bound)
        return w, b

    layers = []
    keys = jax.random.split(key, n_layers + 1)
    for lk in keys[:-1]:
        ks = jax.random.split(lk, 10)
        wq, bq = linear_init(ks[0], d_model, d_model)
        wk, bk = linear_init(ks[1], d_model, d_model)
        wv, bv = linear_init(ks[2], d_model, d_model)
        wo, bo = linear_init(ks[3], d_model, d_model)
        w1, b1 = linear_init(ks[4], d_model, d_ff)
        w2, b2 = linear_init(ks[5], d_ff, d_model)
        layers.append(dict(
            wq=wq, bq=bq, wk=wk, bk=bk, wv=wv, bv=bv, wo=wo, bo=bo,
            w1=w1, b1=b1, w2=w2, b2=b2,
            ln1_g=1.0 + 0.1 * jax.random.normal(ks[6], (d_model,)),
            ln1_b=0.1 * jax.random.normal(ks[7], (d_model,)),
            ln2_g=1.0 + 0.1 * jax.random.normal(ks[8], (d_model,)),
            ln2_b=0.1 * jax.random.normal(ks[9], (d_model,)),
        ))
    kf1, kf2 = jax.random.split(keys[-1])
    return {
        "layers": layers,
        "norm_g": 1.0 + 0.1 * jax.random.normal(kf1, (d_model,)),
        "norm_b": 0.1 * jax.random.normal(kf2, (d_model,)),
    }


def _ref_layernorm(x, g, b, eps=1e-5):
    mean = x.mean(-1, keepdims=True)
    xc = x - mean
    var = (xc * xc).mean(-1, keepdims=True)
    return xc / jnp.sqrt(var + eps) * g + b


def _ref_mha(z, p, mask, heads):
    s_len, b_sz, d = z.shape
    dk = d // heads
    hp = lax.Precision.HIGHEST

    def proj(w, bias):
        return (jnp.einsum("sbd,de->sbe", z, w, precision=hp) + bias).reshape(
            s_len, b_sz, heads, dk)

    q, k, v = proj(p["wq"], p["bq"]), proj(p["wk"], p["bk"]), proj(p["wv"], p["bv"])
    scores = jnp.einsum("ibhd,jbhd->ijbh", q, k, precision=hp) / math.sqrt(dk)
    scores = jnp.where(mask[:, :, :, None] > 0.5, scores, -1e30)
    attn = jax.nn.softmax(scores, axis=1)
    out = jnp.einsum("ijbh,jbhd->ibhd", attn, v, precision=hp).reshape(s_len, b_sz, d)
    return jnp.einsum("sbd,de->sbe", out, p["wo"], precision=hp) + p["bo"]


def _ref_ff(z, p):
    hp = lax.Precision.HIGHEST
    h = jnp.maximum(jnp.einsum("sbd,df->sbf", z, p["w1"], precision=hp) + p["b1"], 0.0)
    return jnp.einsum("sbf,fd->sbd", h, p["w2"], precision=hp) + p["b2"]


def ref_encoder(x, mask, params, *, heads):
    for p in params["layers"]:
        z = _ref_layernorm(x, p["ln1_g"], p["ln1_b"])
        x = x + _ref_mha(z, p, mask, heads)
        z = _ref_layernorm(x, p["ln2_g"], p["ln2_b"])
        x = x + _ref_ff(z, p)
    return _ref_layernorm(x, params["norm_g"], params["norm_b"])


# ---------------------------------------------------------------------------
# Demo / correctness check
# ---------------------------------------------------------------------------

if __name__ == "__main__":
    seq_len, batch = 16, 2
    d_model, heads, d_ff, n_layers = 128, 4, 256, 2

    key = jax.random.PRNGKey(0)
    kx, kp = jax.random.split(key)
    x = jax.random.normal(kx, (seq_len, batch, d_model), dtype=jnp.float32)
    mask = jnp.ones((seq_len, seq_len, batch), dtype=jnp.float32)  # all-attend mask
    params = init_params(kp, n_layers=n_layers, d_model=d_model, d_ff=d_ff)

    fwd = jax.jit(functools.partial(encoder_forward, heads=heads))
    out = jax.block_until_ready(fwd(x, mask, params))

    ref = ref_encoder(x, mask, params, heads=heads)
    assert out.shape == (seq_len, batch, d_model)
    max_err = float(jnp.max(jnp.abs(out - ref)))
    # Tolerance covers default-precision MXU dots + approx reciprocal vs the
    # HIGHEST-precision pure-JAX reference.
    assert jnp.allclose(out, ref, atol=1e-2, rtol=1e-2), f"mismatch vs reference: {max_err}"

    print("KERNEL_OK")
</pallas_src>

<mosaic_0001>
module attributes {stable_mosaic.version = 11 : i64} {
  func.func @_ln_qkv_kernel(%arg0: i32, %arg1: memref<16x128xf32, #tpu.memory_space<vmem>>, %arg2: memref<1x128xf32, #tpu.memory_space<vmem>>, %arg3: memref<1x128xf32, #tpu.memory_space<vmem>>, %arg4: memref<128x384xf32, #tpu.memory_space<vmem>>, %arg5: memref<1x384xf32, #tpu.memory_space<vmem>>, %arg6: memref<16x384xf32, #tpu.memory_space<vmem>>) attributes {dimension_semantics = [#tpu.dimension_semantics<parallel>], iteration_bounds = array<i64: 2>, scalar_prefetch = 0 : i64, scratch_operands = 0 : i64, tpu.core_type = #tpu.core_type<tc>, window_params = [{transform_indices = @transform_0, window_bounds = array<i64: 16, 128>}, {pipeline_mode = #tpu.pipeline_mode<synchronous>, transform_indices = @transform_1, window_bounds = array<i64: 1, 128>}, {pipeline_mode = #tpu.pipeline_mode<synchronous>, transform_indices = @transform_2, window_bounds = array<i64: 1, 128>}, {pipeline_mode = #tpu.pipeline_mode<synchronous>, transform_indices = @transform_3, window_bounds = array<i64: 128, 384>}, {pipeline_mode = #tpu.pipeline_mode<synchronous>, transform_indices = @transform_4, window_bounds = array<i64: 1, 384>}, {transform_indices = @transform_5, window_bounds = array<i64: 16, 384>}]} {
    %c0 = arith.constant 0 : index
    %c0_0 = arith.constant 0 : index
    %0 = vector.load %arg1[%c0, %c0_0] : memref<16x128xf32, #tpu.memory_space<vmem>>, vector<16x128xf32>
    %cst = arith.constant dense<0.000000e+00> : vector<16xf32>
    %1 = vector.multi_reduction <add>, %0, %cst [1] : vector<16x128xf32> to vector<16xf32>
    %2 = vector.shape_cast %1 : vector<16xf32> to vector<16x1xf32>
    %cst_1 = arith.constant 1.280000e+02 : f32
    %3 = vector.broadcast %cst_1 : f32 to vector<16x1xf32>
    %4 = arith.divf %2, %3 : vector<16x1xf32>
    %5 = vector.broadcast %4 : vector<16x1xf32> to vector<16x128xf32>
    %6 = arith.subf %0, %5 : vector<16x128xf32>
    %7 = arith.mulf %6, %6 : vector<16x128xf32>
    %cst_2 = arith.constant dense<0.000000e+00> : vector<16xf32>
    %8 = vector.multi_reduction <add>, %7, %cst_2 [1] : vector<16x128xf32> to vector<16xf32>
    %9 = vector.shape_cast %8 : vector<16xf32> to vector<16x1xf32>
    %cst_3 = arith.constant 1.280000e+02 : f32
    %10 = vector.broadcast %cst_3 : f32 to vector<16x1xf32>
    %11 = arith.divf %9, %10 : vector<16x1xf32>
    %cst_4 = arith.constant 9.99999974E-6 : f32
    %12 = vector.broadcast %cst_4 : f32 to vector<16x1xf32>
    %13 = arith.addf %11, %12 : vector<16x1xf32>
    %14 = math.rsqrt %13 : vector<16x1xf32>
    %15 = vector.broadcast %14 : vector<16x1xf32> to vector<16x128xf32>
    %16 = arith.mulf %6, %15 : vector<16x128xf32>
    %c0_5 = arith.constant 0 : index
    %c0_6 = arith.constant 0 : index
    %17 = vector.load %arg2[%c0_5, %c0_6] : memref<1x128xf32, #tpu.memory_space<vmem>>, vector<1x128xf32>
    %18 = vector.broadcast %17 : vector<1x128xf32> to vector<16x128xf32>
    %19 = arith.mulf %16, %18 : vector<16x128xf32>
    %c0_7 = arith.constant 0 : index
    %c0_8 = arith.constant 0 : index
    %20 = vector.load %arg3[%c0_7, %c0_8] : memref<1x128xf32, #tpu.memory_space<vmem>>, vector<1x128xf32>
    %21 = vector.broadcast %20 : vector<1x128xf32> to vector<16x128xf32>
    %22 = arith.addf %19, %21 : vector<16x128xf32>
    %c0_9 = arith.constant 0 : index
    %c0_10 = arith.constant 0 : index
    %23 = vector.load %arg4[%c0_9, %c0_10] : memref<128x384xf32, #tpu.memory_space<vmem>>, vector<128x384xf32>
    %cst_11 = arith.constant dense<0.000000e+00> : vector<16x384xf32>
    %24 = tpu.matmul %22, %23, %cst_11 {dimension_numbers = #tpu.dot_dimension_numbers<[1], [0], [0], [1], [0, 0, 1, 1], [], []>} : vector<16x128xf32>, vector<128x384xf32>, vector<16x384xf32> -> vector<16x384xf32>
    %c0_12 = arith.constant 0 : index
    %c0_13 = arith.constant 0 : index
    %25 = vector.load %arg5[%c0_12, %c0_13] : memref<1x384xf32, #tpu.memory_space<vmem>>, vector<1x384xf32>
    %26 = vector.broadcast %25 : vector<1x384xf32> to vector<16x384xf32>
    %27 = arith.addf %24, %26 : vector<16x384xf32>
    %c0_14 = arith.constant 0 : index
    %c0_15 = arith.constant 0 : index
    %28 = vector.load %arg6[%c0_14, %c0_15] : memref<16x384xf32, #tpu.memory_space<vmem>>, vector<16x384xf32>
    tpu.vector_store %arg6[%c0_14, %c0_15], %27 {strides = array<i32>} : memref<16x384xf32, #tpu.memory_space<vmem>>, vector<16x384xf32>,
    return
  }
  func.func @transform_0(%arg0: i32) -> (i32, i32) {
    %c0_i32 = arith.constant 0 : i32
    %c0_i32_0 = arith.constant 0 : i32
    return %arg0, %c0_i32 : i32, i32
  }
  func.func @transform_1(%arg0: i32) -> (i32, i32) {
    %c0_i32 = arith.constant 0 : i32
    %c0_i32_0 = arith.constant 0 : i32
    %c0_i32_1 = arith.constant 0 : i32
    return %c0_i32, %c0_i32_0 : i32, i32
  }
  func.func @transform_2(%arg0: i32) -> (i32, i32) {
    %c0_i32 = arith.constant 0 : i32
    %c0_i32_0 = arith.constant 0 : i32
    %c0_i32_1 = arith.constant 0 : i32
    return %c0_i32, %c0_i32_0 : i32, i32
  }
  func.func @transform_3(%arg0: i32) -> (i32, i32) {
    %c0_i32 = arith.constant 0 : i32
    %c0_i32_0 = arith.constant 0 : i32
    %c0_i32_1 = arith.constant 0 : i32
    return %c0_i32, %c0_i32_0 : i32, i32
  }
  func.func @transform_4(%arg0: i32) -> (i32, i32) {
    %c0_i32 = arith.constant 0 : i32
    %c0_i32_0 = arith.constant 0 : i32
    %c0_i32_1 = arith.constant 0 : i32
    return %c0_i32, %c0_i32_0 : i32, i32
  }
  func.func @transform_5(%arg0: i32) -> (i32, i32) {
    %c0_i32 = arith.constant 0 : i32
    %c0_i32_0 = arith.constant 0 : i32
    return %arg0, %c0_i32 : i32, i32
  }
}

module attributes {stable_mosaic.version = 11 : i64} {
  func.func @_attention_kernel(%arg0: i32, %arg1: memref<1x16x384xf32, #tpu.memory_space<vmem>>, %arg2: memref<1x16x16xf32, #tpu.memory_space<vmem>>, %arg3: memref<1x16x128xf32, #tpu.memory_space<vmem>>) attributes {dimension_semantics = [#tpu.dimension_semantics<parallel>], iteration_bounds = array<i64: 2>, scalar_prefetch = 0 : i64, scratch_operands = 0 : i64, tpu.core_type = #tpu.core_type<tc>, window_params = [{transform_indices = @transform_0, window_bounds = array<i64: 1, 16, 384>}, {transform_indices = @transform_1, window_bounds = array<i64: 1, 16, 16>}, {transform_indices = @transform_2, window_bounds = array<i64: 1, 16, 128>}]} {
    %c0 = arith.constant 0 : index
    %c0_0 = arith.constant 0 : index
    %c0_1 = arith.constant 0 : index
    %0 = vector.load %arg1[%c0, %c0_0, %c0_1] : memref<1x16x384xf32, #tpu.memory_space<vmem>>, vector<1x16x384xf32>
    %1 = vector.shape_cast %0 : vector<1x16x384xf32> to vector<16x384xf32>
    %c0_2 = arith.constant 0 : index
    %c0_3 = arith.constant 0 : index
    %c0_4 = arith.constant 0 : index
    %2 = vector.load %arg2[%c0_2, %c0_3, %c0_4] : memref<1x16x16xf32, #tpu.memory_space<vmem>>, vector<1x16x16xf32>
    %3 = vector.shape_cast %2 : vector<1x16x16xf32> to vector<16x16xf32>
    %4 = vector.extract_strided_slice %1 {offsets = [0, 0], sizes = [16, 32], strides = [1, 1]} : vector<16x384xf32> to vector<16x32xf32>
    %5 = vector.extract_strided_slice %1 {offsets = [0, 128], sizes = [16, 32], strides = [1, 1]} : vector<16x384xf32> to vector<16x32xf32>
    %6 = vector.extract_strided_slice %1 {offsets = [0, 256], sizes = [16, 32], strides = [1, 1]} : vector<16x384xf32> to vector<16x32xf32>
    %cst = arith.constant dense<0.000000e+00> : vector<16x16xf32>
    %7 = tpu.matmul %4, %5, %cst {dimension_numbers = #tpu.dot_dimension_numbers<[1], [1], [0], [0], [0, 0, 1, 0], [], []>} : vector<16x32xf32>, vector<16x32xf32>, vector<16x16xf32> -> vector<16x16xf32>
    %cst_5 = arith.constant 0.176776692 : f32
    %8 = vector.broadcast %cst_5 : f32 to vector<16x16xf32>
    %9 = arith.mulf %7, %8 : vector<16x16xf32>
    %10 = arith.addf %9, %3 : vector<16x16xf32>
    %cst_6 = arith.constant dense<0xFF800000> : vector<16xf32>
    %11 = vector.multi_reduction <maximumf>, %10, %cst_6 [1] : vector<16x16xf32> to vector<16xf32>
    %12 = vector.shape_cast %11 : vector<16xf32> to vector<16x1xf32>
    %13 = vector.broadcast %12 : vector<16x1xf32> to vector<16x16xf32>
    %14 = arith.subf %10, %13 : vector<16x16xf32>
    %15 = math.exp %14 : vector<16x16xf32>
    %cst_7 = arith.constant dense<0.000000e+00> : vector<16xf32>
    %16 = vector.multi_reduction <add>, %15, %cst_7 [1] : vector<16x16xf32> to vector<16xf32>
    %17 = vector.shape_cast %16 : vector<16xf32> to vector<16x1xf32>
    %18 = tpu.reciprocal %17 {approx = true} : vector<16x1xf32> -> vector<16x1xf32>
    %19 = vector.broadcast %18 : vector<16x1xf32> to vector<16x16xf32>
    %20 = arith.mulf %15, %19 : vector<16x16xf32>
    %cst_8 = arith.constant dense<0.000000e+00> : vector<16x32xf32>
    %21 = tpu.matmul %20, %6, %cst_8 {dimension_numbers = #tpu.dot_dimension_numbers<[1], [0], [0], [1], [0, 0, 1, 1], [], []>} : vector<16x16xf32>, vector<16x32xf32>, vector<16x32xf32> -> vector<16x32xf32>
    %22 = vector.extract_strided_slice %1 {offsets = [0, 32], sizes = [16, 32], strides = [1, 1]} : vector<16x384xf32> to vector<16x32xf32>
    %23 = vector.extract_strided_slice %1 {offsets = [0, 160], sizes = [16, 32], strides = [1, 1]} : vector<16x384xf32> to vector<16x32xf32>
    %24 = vector.extract_strided_slice %1 {offsets = [0, 288], sizes = [16, 32], strides = [1, 1]} : vector<16x384xf32> to vector<16x32xf32>
    %cst_9 = arith.constant dense<0.000000e+00> : vector<16x16xf32>
    %25 = tpu.matmul %22, %23, %cst_9 {dimension_numbers = #tpu.dot_dimension_numbers<[1], [1], [0], [0], [0, 0, 1, 0], [], []>} : vector<16x32xf32>, vector<16x32xf32>, vector<16x16xf32> -> vector<16x16xf32>
    %cst_10 = arith.constant 0.176776692 : f32
    %26 = vector.broadcast %cst_10 : f32 to vector<16x16xf32>
    %27 = arith.mulf %25, %26 : vector<16x16xf32>
    %28 = arith.addf %27, %3 : vector<16x16xf32>
    %cst_11 = arith.constant dense<0xFF800000> : vector<16xf32>
    %29 = vector.multi_reduction <maximumf>, %28, %cst_11 [1] : vector<16x16xf32> to vector<16xf32>
    %30 = vector.shape_cast %29 : vector<16xf32> to vector<16x1xf32>
    %31 = vector.broadcast %30 : vector<16x1xf32> to vector<16x16xf32>
    %32 = arith.subf %28, %31 : vector<16x16xf32>
    %33 = math.exp %32 : vector<16x16xf32>
    %cst_12 = arith.constant dense<0.000000e+00> : vector<16xf32>
    %34 = vector.multi_reduction <add>, %33, %cst_12 [1] : vector<16x16xf32> to vector<16xf32>
    %35 = vector.shape_cast %34 : vector<16xf32> to vector<16x1xf32>
    %36 = tpu.reciprocal %35 {approx = true} : vector<16x1xf32> -> vector<16x1xf32>
    %37 = vector.broadcast %36 : vector<16x1xf32> to vector<16x16xf32>
    %38 = arith.mulf %33, %37 : vector<16x16xf32>
    %cst_13 = arith.constant dense<0.000000e+00> : vector<16x32xf32>
    %39 = tpu.matmul %38, %24, %cst_13 {dimension_numbers = #tpu.dot_dimension_numbers<[1], [0], [0], [1], [0, 0, 1, 1], [], []>} : vector<16x16xf32>, vector<16x32xf32>, vector<16x32xf32> -> vector<16x32xf32>
    %40 = vector.extract_strided_slice %1 {offsets = [0, 64], sizes = [16, 32], strides = [1, 1]} : vector<16x384xf32> to vector<16x32xf32>
    %41 = vector.extract_strided_slice %1 {offsets = [0, 192], sizes = [16, 32], strides = [1, 1]} : vector<16x384xf32> to vector<16x32xf32>
    %42 = vector.extract_strided_slice %1 {offsets = [0, 320], sizes = [16, 32], strides = [1, 1]} : vector<16x384xf32> to vector<16x32xf32>
    %cst_14 = arith.constant dense<0.000000e+00> : vector<16x16xf32>
    %43 = tpu.matmul %40, %41, %cst_14 {dimension_numbers = #tpu.dot_dimension_numbers<[1], [1], [0], [0], [0, 0, 1, 0], [], []>} : vector<16x32xf32>, vector<16x32xf32>, vector<16x16xf32> -> vector<16x16xf32>
    %cst_15 = arith.constant 0.176776692 : f32
    %44 = vector.broadcast %cst_15 : f32 to vector<16x16xf32>
    %45 = arith.mulf %43, %44 : vector<16x16xf32>
    %46 = arith.addf %45, %3 : vector<16x16xf32>
    %cst_16 = arith.constant dense<0xFF800000> : vector<16xf32>
    %47 = vector.multi_reduction <maximumf>, %46, %cst_16 [1] : vector<16x16xf32> to vector<16xf32>
    %48 = vector.shape_cast %47 : vector<16xf32> to vector<16x1xf32>
    %49 = vector.broadcast %48 : vector<16x1xf32> to vector<16x16xf32>
    %50 = arith.subf %46, %49 : vector<16x16xf32>
    %51 = math.exp %50 : vector<16x16xf32>
    %cst_17 = arith.constant dense<0.000000e+00> : vector<16xf32>
    %52 = vector.multi_reduction <add>, %51, %cst_17 [1] : vector<16x16xf32> to vector<16xf32>
    %53 = vector.shape_cast %52 : vector<16xf32> to vector<16x1xf32>
    %54 = tpu.reciprocal %53 {approx = true} : vector<16x1xf32> -> vector<16x1xf32>
    %55 = vector.broadcast %54 : vector<16x1xf32> to vector<16x16xf32>
    %56 = arith.mulf %51, %55 : vector<16x16xf32>
    %cst_18 = arith.constant dense<0.000000e+00> : vector<16x32xf32>
    %57 = tpu.matmul %56, %42, %cst_18 {dimension_numbers = #tpu.dot_dimension_numbers<[1], [0], [0], [1], [0, 0, 1, 1], [], []>} : vector<16x16xf32>, vector<16x32xf32>, vector<16x32xf32> -> vector<16x32xf32>
    %58 = vector.extract_strided_slice %1 {offsets = [0, 96], sizes = [16, 32], strides = [1, 1]} : vector<16x384xf32> to vector<16x32xf32>
    %59 = vector.extract_strided_slice %1 {offsets = [0, 224], sizes = [16, 32], strides = [1, 1]} : vector<16x384xf32> to vector<16x32xf32>
    %60 = vector.extract_strided_slice %1 {offsets = [0, 352], sizes = [16, 32], strides = [1, 1]} : vector<16x384xf32> to vector<16x32xf32>
    %cst_19 = arith.constant dense<0.000000e+00> : vector<16x16xf32>
    %61 = tpu.matmul %58, %59, %cst_19 {dimension_numbers = #tpu.dot_dimension_numbers<[1], [1], [0], [0], [0, 0, 1, 0], [], []>} : vector<16x32xf32>, vector<16x32xf32>, vector<16x16xf32> -> vector<16x16xf32>
    %cst_20 = arith.constant 0.176776692 : f32
    %62 = vector.broadcast %cst_20 : f32 to vector<16x16xf32>
    %63 = arith.mulf %61, %62 : vector<16x16xf32>
    %64 = arith.addf %63, %3 : vector<16x16xf32>
    %cst_21 = arith.constant dense<0xFF800000> : vector<16xf32>
    %65 = vector.multi_reduction <maximumf>, %64, %cst_21 [1] : vector<16x16xf32> to vector<16xf32>
    %66 = vector.shape_cast %65 : vector<16xf32> to vector<16x1xf32>
    %67 = vector.broadcast %66 : vector<16x1xf32> to vector<16x16xf32>
    %68 = arith.subf %64, %67 : vector<16x16xf32>
    %69 = math.exp %68 : vector<16x16xf32>
    %cst_22 = arith.constant dense<0.000000e+00> : vector<16xf32>
    %70 = vector.multi_reduction <add>, %69, %cst_22 [1] : vector<16x16xf32> to vector<16xf32>
    %71 = vector.shape_cast %70 : vector<16xf32> to vector<16x1xf32>
    %72 = tpu.reciprocal %71 {approx = true} : vector<16x1xf32> -> vector<16x1xf32>
    %73 = vector.broadcast %72 : vector<16x1xf32> to vector<16x16xf32>
    %74 = arith.mulf %69, %73 : vector<16x16xf32>
    %cst_23 = arith.constant dense<0.000000e+00> : vector<16x32xf32>
    %75 = tpu.matmul %74, %60, %cst_23 {dimension_numbers = #tpu.dot_dimension_numbers<[1], [0], [0], [1], [0, 0, 1, 1], [], []>} : vector<16x16xf32>, vector<16x32xf32>, vector<16x32xf32> -> vector<16x32xf32>
    %76 = tpu.concatenate %21, %39, %57, %75 in 1 : vector<16x32xf32>, vector<16x32xf32>, vector<16x32xf32>, vector<16x32xf32> -> vector<16x128xf32>
    %c0_24 = arith.constant 0 : index
    %c0_25 = arith.constant 0 : index
    %c0_26 = arith.constant 0 : index
    %77 = vector.load %arg3[%c0_24, %c0_25, %c0_26] : memref<1x16x128xf32, #tpu.memory_space<vmem>>, vector<1x16x128xf32>
    %78 = vector.shape_cast %77 : vector<1x16x128xf32> to vector<16x128xf32>
    %79 = vector.shape_cast %76 : vector<16x128xf32> to vector<1x16x128xf32>
    tpu.vector_store %arg3[%c0_24, %c0_25, %c0_26], %79 {strides = array<i32>} : memref<1x16x128xf32, #tpu.memory_space<vmem>>, vector<1x16x128xf32>,
    return
  }
  func.func @transform_0(%arg0: i32) -> (i32, i32, i32) {
    %c0_i32 = arith.constant 0 : i32
    %c0_i32_0 = arith.constant 0 : i32
    %c0_i32_1 = arith.constant 0 : i32
    return %arg0, %c0_i32, %c0_i32_0 : i32, i32, i32
  }
  func.func @transform_1(%arg0: i32) -> (i32, i32, i32) {
    %c0_i32 = arith.constant 0 : i32
    %c0_i32_0 = arith.constant 0 : i32
    %c0_i32_1 = arith.constant 0 : i32
    return %arg0, %c0_i32, %c0_i32_0 : i32, i32, i32
  }
  func.func @transform_2(%arg0: i32) -> (i32, i32, i32) {
    %c0_i32 = arith.constant 0 : i32
    %c0_i32_0 = arith.constant 0 : i32
    %c0_i32_1 = arith.constant 0 : i32
    return %arg0, %c0_i32, %c0_i32_0 : i32, i32, i32
  }
}

module attributes {stable_mosaic.version = 11 : i64} {
  func.func @_attnout_ffn_kernel(%arg0: i32, %arg1: memref<16x128xf32, #tpu.memory_space<vmem>>, %arg2: memref<16x128xf32, #tpu.memory_space<vmem>>, %arg3: memref<128x128xf32, #tpu.memory_space<vmem>>, %arg4: memref<1x128xf32, #tpu.memory_space<vmem>>, %arg5: memref<1x128xf32, #tpu.memory_space<vmem>>, %arg6: memref<1x128xf32, #tpu.memory_space<vmem>>, %arg7: memref<128x256xf32, #tpu.memory_space<vmem>>, %arg8: memref<1x256xf32, #tpu.memory_space<vmem>>, %arg9: memref<256x128xf32, #tpu.memory_space<vmem>>, %arg10: memref<1x128xf32, #tpu.memory_space<vmem>>, %arg11: memref<16x128xf32, #tpu.memory_space<vmem>>) attributes {dimension_semantics = [#tpu.dimension_semantics<parallel>], iteration_bounds = array<i64: 2>, scalar_prefetch = 0 : i64, scratch_operands = 0 : i64, tpu.core_type = #tpu.core_type<tc>, window_params = [{transform_indices = @transform_0, window_bounds = array<i64: 16, 128>}, {transform_indices = @transform_1, window_bounds = array<i64: 16, 128>}, {pipeline_mode = #tpu.pipeline_mode<synchronous>, transform_indices = @transform_2, window_bounds = array<i64: 128, 128>}, {pipeline_mode = #tpu.pipeline_mode<synchronous>, transform_indices = @transform_3, window_bounds = array<i64: 1, 128>}, {pipeline_mode = #tpu.pipeline_mode<synchronous>, transform_indices = @transform_4, window_bounds = array<i64: 1, 128>}, {pipeline_mode = #tpu.pipeline_mode<synchronous>, transform_indices = @transform_5, window_bounds = array<i64: 1, 128>}, {pipeline_mode = #tpu.pipeline_mode<synchronous>, transform_indices = @transform_6, window_bounds = array<i64: 128, 256>}, {pipeline_mode = #tpu.pipeline_mode<synchronous>, transform_indices = @transform_7, window_bounds = array<i64: 1, 256>}, {pipeline_mode = #tpu.pipeline_mode<synchronous>, transform_indices = @transform_8, window_bounds = array<i64: 256, 128>}, {pipeline_mode = #tpu.pipeline_mode<synchronous>, transform_indices = @transform_9, window_bounds = array<i64: 1, 128>}, {transform_indices = @transform_10, window_bounds = array<i64: 16, 128>}]} {
    %c0 = arith.constant 0 : index
    %c0_0 = arith.constant 0 : index
    %0 = vector.load %arg2[%c0, %c0_0] : memref<16x128xf32, #tpu.memory_space<vmem>>, vector<16x128xf32>
    %c0_1 = arith.constant 0 : index
    %c0_2 = arith.constant 0 : index
    %1 = vector.load %arg1[%c0_1, %c0_2] : memref<16x128xf32, #tpu.memory_space<vmem>>, vector<16x128xf32>
    %c0_3 = arith.constant 0 : index
    %c0_4 = arith.constant 0 : index
    %2 = vector.load %arg3[%c0_3, %c0_4] : memref<128x128xf32, #tpu.memory_space<vmem>>, vector<128x128xf32>
    %cst = arith.constant dense<0.000000e+00> : vector<16x128xf32>
    %3 = tpu.matmul %1, %2, %cst {dimension_numbers = #tpu.dot_dimension_numbers<[1], [0], [0], [1], [0, 0, 1, 1], [], []>} : vector<16x128xf32>, vector<128x128xf32>, vector<16x128xf32> -> vector<16x128xf32>
    %4 = arith.addf %0, %3 : vector<16x128xf32>
    %c0_5 = arith.constant 0 : index
    %c0_6 = arith.constant 0 : index
    %5 = vector.load %arg4[%c0_5, %c0_6] : memref<1x128xf32, #tpu.memory_space<vmem>>, vector<1x128xf32>
    %6 = vector.broadcast %5 : vector<1x128xf32> to vector<16x128xf32>
    %7 = arith.addf %4, %6 : vector<16x128xf32>
    %cst_7 = arith.constant dense<0.000000e+00> : vector<16xf32>
    %8 = vector.multi_reduction <add>, %7, %cst_7 [1] : vector<16x128xf32> to vector<16xf32>
    %9 = vector.shape_cast %8 : vector<16xf32> to vector<16x1xf32>
    %cst_8 = arith.constant 1.280000e+02 : f32
    %10 = vector.broadcast %cst_8 : f32 to vector<16x1xf32>
    %11 = arith.divf %9, %10 : vector<16x1xf32>
    %12 = vector.broadcast %11 : vector<16x1xf32> to vector<16x128xf32>
    %13 = arith.subf %7, %12 : vector<16x128xf32>
    %14 = arith.mulf %13, %13 : vector<16x128xf32>
    %cst_9 = arith.constant dense<0.000000e+00> : vector<16xf32>
    %15 = vector.multi_reduction <add>, %14, %cst_9 [1] : vector<16x128xf32> to vector<16xf32>
    %16 = vector.shape_cast %15 : vector<16xf32> to vector<16x1xf32>
    %cst_10 = arith.constant 1.280000e+02 : f32
    %17 = vector.broadcast %cst_10 : f32 to vector<16x1xf32>
    %18 = arith.divf %16, %17 : vector<16x1xf32>
    %cst_11 = arith.constant 9.99999974E-6 : f32
    %19 = vector.broadcast %cst_11 : f32 to vector<16x1xf32>
    %20 = arith.addf %18, %19 : vector<16x1xf32>
    %21 = math.rsqrt %20 : vector<16x1xf32>
    %22 = vector.broadcast %21 : vector<16x1xf32> to vector<16x128xf32>
    %23 = arith.mulf %13, %22 : vector<16x128xf32>
    %c0_12 = arith.constant 0 : index
    %c0_13 = arith.constant 0 : index
    %24 = vector.load %arg5[%c0_12, %c0_13] : memref<1x128xf32, #tpu.memory_space<vmem>>, vector<1x128xf32>
    %25 = vector.broadcast %24 : vector<1x128xf32> to vector<16x128xf32>
    %26 = arith.mulf %23, %25 : vector<16x128xf32>
    %c0_14 = arith.constant 0 : index
    %c0_15 = arith.constant 0 : index
    %27 = vector.load %arg6[%c0_14, %c0_15] : memref<1x128xf32, #tpu.memory_space<vmem>>, vector<1x128xf32>
    %28 = vector.broadcast %27 : vector<1x128xf32> to vector<16x128xf32>
    %29 = arith.addf %26, %28 : vector<16x128xf32>
    %c0_16 = arith.constant 0 : index
    %c0_17 = arith.constant 0 : index
    %30 = vector.load %arg7[%c0_16, %c0_17] : memref<128x256xf32, #tpu.memory_space<vmem>>, vector<128x256xf32>
    %cst_18 = arith.constant dense<0.000000e+00> : vector<16x256xf32>
    %31 = tpu.matmul %29, %30, %cst_18 {dimension_numbers = #tpu.dot_dimension_numbers<[1], [0], [0], [1], [0, 0, 1, 1], [], []>} : vector<16x128xf32>, vector<128x256xf32>, vector<16x256xf32> -> vector<16x256xf32>
    %c0_19 = arith.constant 0 : index
    %c0_20 = arith.constant 0 : index
    %32 = vector.load %arg8[%c0_19, %c0_20] : memref<1x256xf32, #tpu.memory_space<vmem>>, vector<1x256xf32>
    %33 = vector.broadcast %32 : vector<1x256xf32> to vector<16x256xf32>
    %34 = arith.addf %31, %33 : vector<16x256xf32>
    %cst_21 = arith.constant 0.000000e+00 : f32
    %35 = vector.broadcast %cst_21 : f32 to vector<16x256xf32>
    %36 = arith.maximumf %34, %35 : vector<16x256xf32>
    %c0_22 = arith.constant 0 : index
    %c0_23 = arith.constant 0 : index
    %37 = vector.load %arg9[%c0_22, %c0_23] : memref<256x128xf32, #tpu.memory_space<vmem>>, vector<256x128xf32>
    %cst_24 = arith.constant dense<0.000000e+00> : vector<16x128xf32>
    %38 = tpu.matmul %36, %37, %cst_24 {dimension_numbers = #tpu.dot_dimension_numbers<[1], [0], [0], [1], [0, 0, 1, 1], [], []>} : vector<16x256xf32>, vector<256x128xf32>, vector<16x128xf32> -> vector<16x128xf32>
    %39 = arith.addf %7, %38 : vector<16x128xf32>
    %c0_25 = arith.constant 0 : index
    %c0_26 = arith.constant 0 : index
    %40 = vector.load %arg10[%c0_25, %c0_26] : memref<1x128xf32, #tpu.memory_space<vmem>>, vector<1x128xf32>
    %41 = vector.broadcast %40 : vector<1x128xf32> to vector<16x128xf32>
    %42 = arith.addf %39, %41 : vector<16x128xf32>
    %c0_27 = arith.constant 0 : index
    %c0_28 = arith.constant 0 : index
    %43 = vector.load %arg11[%c0_27, %c0_28] : memref<16x128xf32, #tpu.memory_space<vmem>>, vector<16x128xf32>
    tpu.vector_store %arg11[%c0_27, %c0_28], %42 {strides = array<i32>} : memref<16x128xf32, #tpu.memory_space<vmem>>, vector<16x128xf32>,
    return
  }
  func.func @transform_0(%arg0: i32) -> (i32, i32) {
    %c0_i32 = arith.constant 0 : i32
    %c0_i32_0 = arith.constant 0 : i32
    return %arg0, %c0_i32 : i32, i32
  }
  func.func @transform_1(%arg0: i32) -> (i32, i32) {
    %c0_i32 = arith.constant 0 : i32
    %c0_i32_0 = arith.constant 0 : i32
    return %arg0, %c0_i32 : i32, i32
  }
  func.func @transform_2(%arg0: i32) -> (i32, i32) {
    %c0_i32 = arith.constant 0 : i32
    %c0_i32_0 = arith.constant 0 : i32
    %c0_i32_1 = arith.constant 0 : i32
    return %c0_i32, %c0_i32_0 : i32, i32
  }
  func.func @transform_3(%arg0: i32) -> (i32, i32) {
    %c0_i32 = arith.constant 0 : i32
    %c0_i32_0 = arith.constant 0 : i32
    %c0_i32_1 = arith.constant 0 : i32
    return %c0_i32, %c0_i32_0 : i32, i32
  }
  func.func @transform_4(%arg0: i32) -> (i32, i32) {
    %c0_i32 = arith.constant 0 : i32
    %c0_i32_0 = arith.constant 0 : i32
    %c0_i32_1 = arith.constant 0 : i32
    return %c0_i32, %c0_i32_0 : i32, i32
  }
  func.func @transform_5(%arg0: i32) -> (i32, i32) {
    %c0_i32 = arith.constant 0 : i32
    %c0_i32_0 = arith.constant 0 : i32
    %c0_i32_1 = arith.constant 0 : i32
    return %c0_i32, %c0_i32_0 : i32, i32
  }
  func.func @transform_6(%arg0: i32) -> (i32, i32) {
    %c0_i32 = arith.constant 0 : i32
    %c0_i32_0 = arith.constant 0 : i32
    %c0_i32_1 = arith.constant 0 : i32
    return %c0_i32, %c0_i32_0 : i32, i32
  }
  func.func @transform_7(%arg0: i32) -> (i32, i32) {
    %c0_i32 = arith.constant 0 : i32
    %c0_i32_0 = arith.constant 0 : i32
    %c0_i32_1 = arith.constant 0 : i32
    return %c0_i32, %c0_i32_0 : i32, i32
  }
  func.func @transform_8(%arg0: i32) -> (i32, i32) {
    %c0_i32 = arith.constant 0 : i32
    %c0_i32_0 = arith.constant 0 : i32
    %c0_i32_1 = arith.constant 0 : i32
    return %c0_i32, %c0_i32_0 : i32, i32
  }
  func.func @transform_9(%arg0: i32) -> (i32, i32) {
    %c0_i32 = arith.constant 0 : i32
    %c0_i32_0 = arith.constant 0 : i32
    %c0_i32_1 = arith.constant 0 : i32
    return %c0_i32, %c0_i32_0 : i32, i32
  }
  func.func @transform_10(%arg0: i32) -> (i32, i32) {
    %c0_i32 = arith.constant 0 : i32
    %c0_i32_0 = arith.constant 0 : i32
    return %arg0, %c0_i32 : i32, i32
  }
}

module attributes {stable_mosaic.version = 11 : i64} {
  func.func @_layernorm_kernel(%arg0: i32, %arg1: memref<16x128xf32, #tpu.memory_space<vmem>>, %arg2: memref<1x128xf32, #tpu.memory_space<vmem>>, %arg3: memref<1x128xf32, #tpu.memory_space<vmem>>, %arg4: memref<16x128xf32, #tpu.memory_space<vmem>>) attributes {dimension_semantics = [#tpu.dimension_semantics<parallel>], iteration_bounds = array<i64: 2>, scalar_prefetch = 0 : i64, scratch_operands = 0 : i64, tpu.core_type = #tpu.core_type<tc>, window_params = [{transform_indices = @transform_0, window_bounds = array<i64: 16, 128>}, {pipeline_mode = #tpu.pipeline_mode<synchronous>, transform_indices = @transform_1, window_bounds = array<i64: 1, 128>}, {pipeline_mode = #tpu.pipeline_mode<synchronous>, transform_indices = @transform_2, window_bounds = array<i64: 1, 128>}, {transform_indices = @transform_3, window_bounds = array<i64: 16, 128>}]} {
    %c0 = arith.constant 0 : index
    %c0_0 = arith.constant 0 : index
    %0 = vector.load %arg1[%c0, %c0_0] : memref<16x128xf32, #tpu.memory_space<vmem>>, vector<16x128xf32>
    %cst = arith.constant dense<0.000000e+00> : vector<16xf32>
    %1 = vector.multi_reduction <add>, %0, %cst [1] : vector<16x128xf32> to vector<16xf32>
    %2 = vector.shape_cast %1 : vector<16xf32> to vector<16x1xf32>
    %cst_1 = arith.constant 1.280000e+02 : f32
    %3 = vector.broadcast %cst_1 : f32 to vector<16x1xf32>
    %4 = arith.divf %2, %3 : vector<16x1xf32>
    %5 = vector.broadcast %4 : vector<16x1xf32> to vector<16x128xf32>
    %6 = arith.subf %0, %5 : vector<16x128xf32>
    %7 = arith.mulf %6, %6 : vector<16x128xf32>
    %cst_2 = arith.constant dense<0.000000e+00> : vector<16xf32>
    %8 = vector.multi_reduction <add>, %7, %cst_2 [1] : vector<16x128xf32> to vector<16xf32>
    %9 = vector.shape_cast %8 : vector<16xf32> to vector<16x1xf32>
    %cst_3 = arith.constant 1.280000e+02 : f32
    %10 = vector.broadcast %cst_3 : f32 to vector<16x1xf32>
    %11 = arith.divf %9, %10 : vector<16x1xf32>
    %cst_4 = arith.constant 9.99999974E-6 : f32
    %12 = vector.broadcast %cst_4 : f32 to vector<16x1xf32>
    %13 = arith.addf %11, %12 : vector<16x1xf32>
    %14 = math.rsqrt %13 : vector<16x1xf32>
    %15 = vector.broadcast %14 : vector<16x1xf32> to vector<16x128xf32>
    %16 = arith.mulf %6, %15 : vector<16x128xf32>
    %c0_5 = arith.constant 0 : index
    %c0_6 = arith.constant 0 : index
    %17 = vector.load %arg2[%c0_5, %c0_6] : memref<1x128xf32, #tpu.memory_space<vmem>>, vector<1x128xf32>
    %18 = vector.broadcast %17 : vector<1x128xf32> to vector<16x128xf32>
    %19 = arith.mulf %16, %18 : vector<16x128xf32>
    %c0_7 = arith.constant 0 : index
    %c0_8 = arith.constant 0 : index
    %20 = vector.load %arg3[%c0_7, %c0_8] : memref<1x128xf32, #tpu.memory_space<vmem>>, vector<1x128xf32>
    %21 = vector.broadcast %20 : vector<1x128xf32> to vector<16x128xf32>
    %22 = arith.addf %19, %21 : vector<16x128xf32>
    %c0_9 = arith.constant 0 : index
    %c0_10 = arith.constant 0 : index
    %23 = vector.load %arg4[%c0_9, %c0_10] : memref<16x128xf32, #tpu.memory_space<vmem>>, vector<16x128xf32>
    tpu.vector_store %arg4[%c0_9, %c0_10], %22 {strides = array<i32>} : memref<16x128xf32, #tpu.memory_space<vmem>>, vector<16x128xf32>,
    return
  }
  func.func @transform_0(%arg0: i32) -> (i32, i32) {
    %c0_i32 = arith.constant 0 : i32
    %c0_i32_0 = arith.constant 0 : i32
    return %arg0, %c0_i32 : i32, i32
  }
  func.func @transform_1(%arg0: i32) -> (i32, i32) {
    %c0_i32 = arith.constant 0 : i32
    %c0_i32_0 = arith.constant 0 : i32
    %c0_i32_1 = arith.constant 0 : i32
    return %c0_i32, %c0_i32_0 : i32, i32
  }
  func.func @transform_2(%arg0: i32) -> (i32, i32) {
    %c0_i32 = arith.constant 0 : i32
    %c0_i32_0 = arith.constant 0 : i32
    %c0_i32_1 = arith.constant 0 : i32
    return %c0_i32, %c0_i32_0 : i32, i32
  }
  func.func @transform_3(%arg0: i32) -> (i32, i32) {
    %c0_i32 = arith.constant 0 : i32
    %c0_i32_0 = arith.constant 0 : i32
    return %arg0, %c0_i32 : i32, i32
  }
}

</mosaic_0001>

<llo_original>
// kernel: encoder_forward.13
$region0: #{encoder_forward.13}
  #allocation0 [shape = 'u32[]', space=smem, size = 0x4, offset = 0x4, fixed_abs, tag = 'smem constant byte address 0x4 - core index']
  #allocation1 [shape = 'u32[144,128]{1,0:T(1,128)}', space=vmem, size = 0x12000, scoped, tag = 'internal scratch']
  %s0 = inlined_call_operand.vmem [shape: f32[32,128], index: 0, kind: input, shape index: {}]
  %s1 = inlined_call_operand.vmem [shape: f32[1,128], index: 1, kind: input, shape index: {}]
  %s2 = inlined_call_operand.vmem [shape: f32[1,128], index: 2, kind: input, shape index: {}]
  %s3 = inlined_call_operand.vmem [shape: f32[32,128], index: 3, kind: output, shape index: {}]
  %s4 = sld [smem:[#allocation0]]
  $region45: #{encoder_forward.13} parent=0
    _
  %s6 = ssub.s32 1, %s4
  %s7 = scalar_select 0, %s6, %s4
  loop: start=0, step=1, limit=4
  $region2: #{encoder_forward.13} parent=0 // loop_pre_header
    _
  $region3: #{encoder_forward.13} parent=0 // loop_header
    %s9 = sphi 0, %s13
    %p10 = scmp.ge.s32.totalorder %s9, 4
    %s19 = sphi 0, %s21
    %s22 = sphi 0, %s19
    %s23 = sphi 0, %s22
    %s39 = sphi 0, %s23
    %s43 = sphi 0, %s43
    %s45 = sphi 0, %s43
    %s46 = sphi 0, %s45
    %s60 = sphi 0, %s46
    %s64 = sphi 0, %s64
    %s66 = sphi 0, %s64
    %s67 = sphi 0, %s66
    %s81 = sphi 0, %s67
    %s87 = sphi 0, %s89
    %s90 = sphi 0, %s87
    %s91 = sphi 0, %s90
    %s107 = sphi 0, %s91
  $region4: #{encoder_forward.13} parent=0 // loop_header_branch
    %12 = sbr.rel (%p10) target = $region8
  $region5: #{encoder_forward.13} parent=0 // loop_body
    %s14 = ssub.s32 %s9, 1
    %s15 = ssub.s32 %s9, 2
    %s16 = sadd.s32 %s9, 1
    %s17 = ssub.s32 %s9, %s16
    %p18 = scmp.eq.s32.totalorder %s17, 0
    %s20 = sadd.s32 %s19, 1
    %s21 = scalar_select %p18, %s19, %s20
    %p24 = pneg %p18
    %p25 = scmp.eq.s32.totalorder %s9, 1
    %p26 = por %p24, %p25
    %p27 = scmp.ne.s32.totalorder %s19, %s22
    %p28 = scmp.eq.s32.totalorder %s9, 0
    %p29 = por %p27, %p28
    %p30 = scmp.ne.s32.totalorder %s19, %s22
    %p31 = scmp.eq.s32.totalorder %s14, 1
    %p32 = por %p30, %p31
    %p33 = scmp.ne.s32.totalorder %s22, %s23
    %p34 = scmp.eq.s32.totalorder %s14, 0
    %p35 = por %p33, %p34
    %p36 = scmp.ne.s32.totalorder %s22, %s23
    %p37 = scmp.eq.s32.totalorder %s15, 1
    %p38 = por %p36, %p37
    %p40 = scmp.ne.s32.totalorder %s23, %s39
    %p41 = scmp.eq.s32.totalorder %s15, 0
    %p42 = por %p40, %p41
    %s44 = sadd.s32 %s43, 1
    %p47 = scmp.eq.s32.totalorder %s9, 1
    %p48 = scmp.ne.s32.totalorder %s43, %s45
    %p49 = scmp.eq.s32.totalorder %s9, 0
    %p50 = por %p48, %p49
    %p51 = scmp.ne.s32.totalorder %s43, %s45
    %p52 = scmp.eq.s32.totalorder %s14, 1
    %p53 = por %p51, %p52
    %p54 = scmp.ne.s32.totalorder %s45, %s46
    %p55 = scmp.eq.s32.totalorder %s14, 0
    %p56 = por %p54, %p55
    %p57 = scmp.ne.s32.totalorder %s45, %s46
    %p58 = scmp.eq.s32.totalorder %s15, 1
    %p59 = por %p57, %p58
    %p61 = scmp.ne.s32.totalorder %s46, %s60
    %p62 = scmp.eq.s32.totalorder %s15, 0
    %p63 = por %p61, %p62
    %s65 = sadd.s32 %s64, 1
    %p68 = scmp.eq.s32.totalorder %s9, 1
    %p69 = scmp.ne.s32.totalorder %s64, %s66
    %p70 = scmp.eq.s32.totalorder %s9, 0
    %p71 = por %p69, %p70
    %p72 = scmp.ne.s32.totalorder %s64, %s66
    %p73 = scmp.eq.s32.totalorder %s14, 1
    %p74 = por %p72, %p73
    %p75 = scmp.ne.s32.totalorder %s66, %s67
    %p76 = scmp.eq.s32.totalorder %s14, 0
    %p77 = por %p75, %p76
    %p78 = scmp.ne.s32.totalorder %s66, %s67
    %p79 = scmp.eq.s32.totalorder %s15, 1
    %p80 = por %p78, %p79
    %p82 = scmp.ne.s32.totalorder %s67, %s81
    %p83 = scmp.eq.s32.totalorder %s15, 0
    %p84 = por %p82, %p83
    %s85 = ssub.s32 %s9, %s16
    %p86 = scmp.eq.s32.totalorder %s85, 0
    %s88 = sadd.s32 %s87, 1
    %s89 = scalar_select %p86, %s87, %s88
    %p92 = pneg %p86
    %p93 = scmp.eq.s32.totalorder %s9, 1
    %p94 = por %p92, %p93
    %p95 = scmp.ne.s32.totalorder %s87, %s90
    %p96 = scmp.eq.s32.totalorder %s9, 0
    %p97 = por %p95, %p96
    %p98 = scmp.ne.s32.totalorder %s87, %s90
    %p99 = scmp.eq.s32.totalorder %s14, 1
    %p100 = por %p98, %p99
    %p101 = scmp.ne.s32.totalorder %s90, %s91
    %p102 = scmp.eq.s32.totalorder %s14, 0
    %p103 = por %p101, %p102
    %p104 = scmp.ne.s32.totalorder %s90, %s91
    %p105 = scmp.eq.s32.totalorder %s15, 1
    %p106 = por %p104, %p105
    %p108 = scmp.ne.s32.totalorder %s91, %s107
    %p109 = scmp.eq.s32.totalorder %s15, 0
    %p110 = por %p108, %p109
    %p111 = scmp.le.s32.totalorder 1, %s9
    %p112 = scmp.lt.s32.totalorder %s9, 3
    %p113 = pnand %p111, %p112
    %p114 = pneg %p113
    // Predicated region
    $region9: #{encoder_forward.13} parent=5 // pred_check
      _
    $region10: #{encoder_forward.13} parent=5 // pred_check_branch
      %116 = sbr.rel (%p113) target = $region12
    $region11: #{encoder_forward.13} parent=5 // pred_region
      %s117 = ssub.s32 %s9, 1
      // Predicated region
      $region13: #{encoder_forward.13} parent=11 // pred_check
        %p118 = pneg %p56
      $region14: #{encoder_forward.13} parent=11 // pred_check_branch
        %120 = sbr.rel (%p118) target = $region16
      $region15: #{encoder_forward.13} parent=11 // pred_region
        _
      $region16: #{encoder_forward.13} parent=11 // pred_fallthru
        _
      // Predicated region
      $region17: #{encoder_forward.13} parent=11 // pred_check
        %p121 = pneg %p77
      $region18: #{encoder_forward.13} parent=11 // pred_check_branch
        %123 = sbr.rel (%p121) target = $region20
      $region19: #{encoder_forward.13} parent=11 // pred_region
        _
      $region20: #{encoder_forward.13} parent=11 // pred_fallthru
        _
    $region12: #{encoder_forward.13} parent=5 // pred_fallthru
      _
    %p124 = scmp.lt.s32.totalorder %s9, 2
    // Predicated region
    $region21: #{encoder_forward.13} parent=5 // pred_check
      %p125 = pneg %p124
    $region22: #{encoder_forward.13} parent=5 // pred_check_branch
      %127 = sbr.rel (%p125) target = $region24
    $region23: #{encoder_forward.13} parent=5 // pred_region
      // Predicated region
      $region25: #{encoder_forward.13} parent=23 // pred_check
        %p128 = pneg %p29
      $region26: #{encoder_forward.13} parent=23 // pred_check_branch
        %130 = sbr.rel (%p128) target = $region28
      $region27: #{encoder_forward.13} parent=23 // pred_region
        %s131 = smul.u32 2, %s9
        %p132 = scmp.lt.s32.totalorder %s131, 3
        %s133 = scalar_select %p132, %s131, 3
        %s134 = smul.addr %s133, 8
        %s135 = scalar_lea.vmem %s0, %s134
        %s136 = smul.u32 2, %s9
      $region28: #{encoder_forward.13} parent=23 // pred_fallthru
        _
    $region24: #{encoder_forward.13} parent=5 // pred_fallthru
      _
    %p137 = scmp.le.s32.totalorder 1, %s9
    %p138 = scmp.lt.s32.totalorder %s9, 3
    %p139 = pnand %p137, %p138
    %p140 = pneg %p139
    // Predicated region
    $region29: #{encoder_forward.13} parent=5 // pred_check
      _
    $region30: #{encoder_forward.13} parent=5 // pred_check_branch
      %142 = sbr.rel (%p139) target = $region32
    $region31: #{encoder_forward.13} parent=5 // pred_region
      %s143 = ssub.s32 %s9, 1
      %s144 = smul.u32 2, %s14
      %p145 = scmp.lt.s32.totalorder %s144, 3
      %s146 = scalar_select %p145, %s144, 3
      %s147 = smul.addr %s146, 8
      %s148 = scalar_lea.vmem %s0, %s147
      %p149 = pneg %p35
      %p150 = pneg %p32
      %p151 = pneg %p56
      %p152 = pneg %p53
      %p153 = pneg %p77
      %p154 = pneg %p74
      %p155 = pneg %p103
      %p156 = pneg %p100
      %s157 = smul.u32 2, %s14
      %p158 = scmp.lt.s32.totalorder %s157, 3
      %s159 = scalar_select %p158, %s157, 3
      %s160 = smul.addr %s159, 8
      %s161 = scalar_lea.vmem %s3, %s160
      %s162 = smul.u32 2, %s14
      %p163 = scmp.lt.s32.totalorder %s162, 3
      %s164 = scalar_select %p163, %s162, 3
      %s165 = smul.addr %s164, 8
      %s166 = scalar_lea.vmem %s0, %s165
      %s167 = smul.u32 2, %s14
      %s168 = smul.u32 2, %s14
      %p169 = scmp.lt.s32.totalorder %s168, 3
      %s170 = scalar_select %p169, %s168, 3
      %s171 = smul.addr %s170, 8
      %s172 = scalar_lea.vmem %s3, %s171
      %s173 = smul.u32 2, %s14
      %v174 = vld [vmem:[%s166] sm:$0xff]
      %v175 = vld [vmem:[%s166 + $0x8] sm:$0xff]
      %176 = vadd.xlane.f32.xlu0 %v174
      %v177 = vpop.xlane.xlu0 %176
      %178 = vadd.xlane.f32.xlu0 %v175
      %v179 = vpop.xlane.xlu0 %178
      %v180 = vrcp.pop 128.0
      %v181 = vmul.f32 %v177, %v180
      %v182 = vmul.f32 %v179, %v180
      %v183 = vsub.f32 %v174, %v181
      %v184 = vsub.f32 %v175, %v182
      %v185 = vmul.f32 %v183, %v183
      %v186 = vmul.f32 %v184, %v184
      %187 = vadd.xlane.f32.xlu0 %v185
      %v188 = vpop.xlane.xlu0 %187
      %189 = vadd.xlane.f32.xlu0 %v186
      %v190 = vpop.xlane.xlu0 %189
      %v191 = vmul.f32 %v188, %v180
      %v192 = vmul.f32 %v190, %v180
      %v193 = vadd.f32 %v191, 1e-05
      %v194 = vadd.f32 %v192, 1e-05
      %v195 = vrsqrt.pop %v193
      %v196 = vrsqrt.pop %v194
      %v197 = vmul.f32 %v183, %v195
      %v198 = vmul.f32 %v184, %v196
      %v199 = vld [vmem:[%s1] sm:$0x1]
      %v201 = vlaneseq
      %v202 = vshrl.u32 %v201, 7
      %v203 = vsub.s32 0, %v202
      %v204 = vrot.slane %v199, %v203
      %v206 = vmul.f32 %v197, %v204
      %v207 = vmul.f32 %v198, %v204
      %v208 = vld [vmem:[%s2] sm:$0x1]
      %v210 = vlaneseq
      %v211 = vshrl.u32 %v210, 7
      %v212 = vsub.s32 0, %v211
      %v213 = vrot.slane %v208, %v212
      %v215 = vadd.f32 %v206, %v213
      %v216 = vadd.f32 %v207, %v213
      %217 = vst [vmem:[%s172] sm:$0xff] %v215
      %218 = vst [vmem:[%s172 + $0x8] sm:$0xff] %v216
      %s219 = smul.u32 2, %s14
      %p220 = scmp.lt.s32.totalorder %s219, 3
      %s221 = scalar_select %p220, %s219, 3
      %s222 = smul.addr %s221, 8
      %s223 = scalar_lea.vmem %s3, %s222
      // Predicated region
      $region33: #{encoder_forward.13} parent=31 // pred_check
        %p224 = pneg %p100
      $region34: #{encoder_forward.13} parent=31 // pred_check_branch
        %226 = sbr.rel (%p224) target = $region36
      $region35: #{encoder_forward.13} parent=31 // pred_region
        %s227 = smul.u32 2, %s14
      $region36: #{encoder_forward.13} parent=31 // pred_fallthru
        _
    $region32: #{encoder_forward.13} parent=5 // pred_fallthru
      _
    %p228 = scmp.le.s32.totalorder 2, %s9
    // Predicated region
    $region37: #{encoder_forward.13} parent=5 // pred_check
      %p229 = pneg %p228
    $region38: #{encoder_forward.13} parent=5 // pred_check_branch
      %231 = sbr.rel (%p229) target = $region40
    $region39: #{encoder_forward.13} parent=5 // pred_region
      %s232 = ssub.s32 %s9, 2
      // Predicated region
      $region41: #{encoder_forward.13} parent=39 // pred_check
        %p233 = pneg %p106
      $region42: #{encoder_forward.13} parent=39 // pred_check_branch
        %235 = sbr.rel (%p233) target = $region44
      $region43: #{encoder_forward.13} parent=39 // pred_region
        %s236 = smul.u32 2, %s15
        %p237 = scmp.lt.s32.totalorder %s236, 3
        %s238 = scalar_select %p237, %s236, 3
        %s239 = smul.addr %s238, 8
        %s240 = scalar_lea.vmem %s3, %s239
      $region44: #{encoder_forward.13} parent=39 // pred_fallthru
        _
    $region40: #{encoder_forward.13} parent=5 // pred_fallthru
      _
  $region6: #{encoder_forward.13} parent=0 // loop_footer
    %s13 = sadd.s32 1, %s9
  $region7: #{encoder_forward.13} parent=0 // loop_footer_branch
    %8 = sbr.rel target = $region3
  $region8: #{encoder_forward.13} parent=0 // loop_exit
    _

// kernel: encoder_forward.7
$region0: #{encoder_forward.7}
  #allocation0 [shape = 'u32[]', space=smem, size = 0x4, offset = 0x4, fixed_abs, tag = 'smem constant byte address 0x4 - core index']
  #allocation1 [shape = 'u32[144,128]{1,0:T(1,128)}', space=vmem, size = 0x12000, scoped, tag = 'internal scratch']
  %s0 = inlined_call_operand.vmem [shape: f32[32,128], index: 0, kind: input, shape index: {}]
  %s1 = inlined_call_operand.vmem [shape: f32[1,128], index: 1, kind: input, shape index: {}]
  %s2 = inlined_call_operand.vmem [shape: f32[1,128], index: 2, kind: input, shape index: {}]
  %s3 = inlined_call_operand.vmem [shape: f32[128,384], index: 3, kind: input, shape index: {}]
  %s4 = inlined_call_operand.vmem [shape: f32[1,384], index: 4, kind: input, shape index: {}]
  %s5 = inlined_call_operand.vmem [shape: f32[32,384], index: 5, kind: output, shape index: {}]
  %s6 = sld [smem:[#allocation0]]
  $region53: #{encoder_forward.7} parent=0
    _
  %s8 = ssub.s32 1, %s6
  %s9 = scalar_select 0, %s8, %s6
  loop: start=0, step=1, limit=4
  $region2: #{encoder_forward.7} parent=0 // loop_pre_header
    _
  $region3: #{encoder_forward.7} parent=0 // loop_header
    %s11 = sphi 0, %s15
    %p12 = scmp.ge.s32.totalorder %s11, 4
    %s21 = sphi 0, %s23
    %s24 = sphi 0, %s21
    %s25 = sphi 0, %s24
    %s41 = sphi 0, %s25
    %s45 = sphi 0, %s45
    %s47 = sphi 0, %s45
    %s48 = sphi 0, %s47
    %s62 = sphi 0, %s48
    %s66 = sphi 0, %s66
    %s68 = sphi 0, %s66
    %s69 = sphi 0, %s68
    %s83 = sphi 0, %s69
    %s87 = sphi 0, %s87
    %s89 = sphi 0, %s87
    %s90 = sphi 0, %s89
    %s104 = sphi 0, %s90
    %s108 = sphi 0, %s108
    %s110 = sphi 0, %s108
    %s111 = sphi 0, %s110
    %s125 = sphi 0, %s111
    %s131 = sphi 0, %s133
    %s134 = sphi 0, %s131
    %s135 = sphi 0, %s134
    %s151 = sphi 0, %s135
  $region4: #{encoder_forward.7} parent=0 // loop_header_branch
    %14 = sbr.rel (%p12) target = $region8
  $region5: #{encoder_forward.7} parent=0 // loop_body
    %s16 = ssub.s32 %s11, 1
    %s17 = ssub.s32 %s11, 2
    %s18 = sadd.s32 %s11, 1
    %s19 = ssub.s32 %s11, %s18
    %p20 = scmp.eq.s32.totalorder %s19, 0
    %s22 = sadd.s32 %s21, 1
    %s23 = scalar_select %p20, %s21, %s22
    %p26 = pneg %p20
    %p27 = scmp.eq.s32.totalorder %s11, 1
    %p28 = por %p26, %p27
    %p29 = scmp.ne.s32.totalorder %s21, %s24
    %p30 = scmp.eq.s32.totalorder %s11, 0
    %p31 = por %p29, %p30
    %p32 = scmp.ne.s32.totalorder %s21, %s24
    %p33 = scmp.eq.s32.totalorder %s16, 1
    %p34 = por %p32, %p33
    %p35 = scmp.ne.s32.totalorder %s24, %s25
    %p36 = scmp.eq.s32.totalorder %s16, 0
    %p37 = por %p35, %p36
    %p38 = scmp.ne.s32.totalorder %s24, %s25
    %p39 = scmp.eq.s32.totalorder %s17, 1
    %p40 = por %p38, %p39
    %p42 = scmp.ne.s32.totalorder %s25, %s41
    %p43 = scmp.eq.s32.totalorder %s17, 0
    %p44 = por %p42, %p43
    %s46 = sadd.s32 %s45, 1
    %p49 = scmp.eq.s32.totalorder %s11, 1
    %p50 = scmp.ne.s32.totalorder %s45, %s47
    %p51 = scmp.eq.s32.totalorder %s11, 0
    %p52 = por %p50, %p51
    %p53 = scmp.ne.s32.totalorder %s45, %s47
    %p54 = scmp.eq.s32.totalorder %s16, 1
    %p55 = por %p53, %p54
    %p56 = scmp.ne.s32.totalorder %s47, %s48
    %p57 = scmp.eq.s32.totalorder %s16, 0
    %p58 = por %p56, %p57
    %p59 = scmp.ne.s32.totalorder %s47, %s48
    %p60 = scmp.eq.s32.totalorder %s17, 1
    %p61 = por %p59, %p60
    %p63 = scmp.ne.s32.totalorder %s48, %s62
    %p64 = scmp.eq.s32.totalorder %s17, 0
    %p65 = por %p63, %p64
    %s67 = sadd.s32 %s66, 1
    %p70 = scmp.eq.s32.totalorder %s11, 1
    %p71 = scmp.ne.s32.totalorder %s66, %s68
    %p72 = scmp.eq.s32.totalorder %s11, 0
    %p73 = por %p71, %p72
    %p74 = scmp.ne.s32.totalorder %s66, %s68
    %p75 = scmp.eq.s32.totalorder %s16, 1
    %p76 = por %p74, %p75
    %p77 = scmp.ne.s32.totalorder %s68, %s69
    %p78 = scmp.eq.s32.totalorder %s16, 0
    %p79 = por %p77, %p78
    %p80 = scmp.ne.s32.totalorder %s68, %s69
    %p81 = scmp.eq.s32.totalorder %s17, 1
    %p82 = por %p80, %p81
    %p84 = scmp.ne.s32.totalorder %s69, %s83
    %p85 = scmp.eq.s32.totalorder %s17, 0
    %p86 = por %p84, %p85
    %s88 = sadd.s32 %s87, 1
    %p91 = scmp.eq.s32.totalorder %s11, 1
    %p92 = scmp.ne.s32.totalorder %s87, %s89
    %p93 = scmp.eq.s32.totalorder %s11, 0
    %p94 = por %p92, %p93
    %p95 = scmp.ne.s32.totalorder %s87, %s89
    %p96 = scmp.eq.s32.totalorder %s16, 1
    %p97 = por %p95, %p96
    %p98 = scmp.ne.s32.totalorder %s89, %s90
    %p99 = scmp.eq.s32.totalorder %s16, 0
    %p100 = por %p98, %p99
    %p101 = scmp.ne.s32.totalorder %s89, %s90
    %p102 = scmp.eq.s32.totalorder %s17, 1
    %p103 = por %p101, %p102
    %p105 = scmp.ne.s32.totalorder %s90, %s104
    %p106 = scmp.eq.s32.totalorder %s17, 0
    %p107 = por %p105, %p106
    %s109 = sadd.s32 %s108, 1
    %p112 = scmp.eq.s32.totalorder %s11, 1
    %p113 = scmp.ne.s32.totalorder %s108, %s110
    %p114 = scmp.eq.s32.totalorder %s11, 0
    %p115 = por %p113, %p114
    %p116 = scmp.ne.s32.totalorder %s108, %s110
    %p117 = scmp.eq.s32.totalorder %s16, 1
    %p118 = por %p116, %p117
    %p119 = scmp.ne.s32.totalorder %s110, %s111
    %p120 = scmp.eq.s32.totalorder %s16, 0
    %p121 = por %p119, %p120
    %p122 = scmp.ne.s32.totalorder %s110, %s111
    %p123 = scmp.eq.s32.totalorder %s17, 1
    %p124 = por %p122, %p123
    %p126 = scmp.ne.s32.totalorder %s111, %s125
    %p127 = scmp.eq.s32.totalorder %s17, 0
    %p128 = por %p126, %p127
    %s129 = ssub.s32 %s11, %s18
    %p130 = scmp.eq.s32.totalorder %s129, 0
    %s132 = sadd.s32 %s131, 1
    %s133 = scalar_select %p130, %s131, %s132
    %p136 = pneg %p130
    %p137 = scmp.eq.s32.totalorder %s11, 1
    %p138 = por %p136, %p137
    %p139 = scmp.ne.s32.totalorder %s131, %s134
    %p140 = scmp.eq.s32.totalorder %s11, 0
    %p141 = por %p139, %p140
    %p142 = scmp.ne.s32.totalorder %s131, %s134
    %p143 = scmp.eq.s32.totalorder %s16, 1
    %p144 = por %p142, %p143
    %p145 = scmp.ne.s32.totalorder %s134, %s135
    %p146 = scmp.eq.s32.totalorder %s16, 0
    %p147 = por %p145, %p146
    %p148 = scmp.ne.s32.totalorder %s134, %s135
    %p149 = scmp.eq.s32.totalorder %s17, 1
    %p150 = por %p148, %p149
    %p152 = scmp.ne.s32.totalorder %s135, %s151
    %p153 = scmp.eq.s32.totalorder %s17, 0
    %p154 = por %p152, %p153
    %p155 = scmp.le.s32.totalorder 1, %s11
    %p156 = scmp.lt.s32.totalorder %s11, 3
    %p157 = pnand %p155, %p156
    %p158 = pneg %p157
    // Predicated region
    $region9: #{encoder_forward.7} parent=5 // pred_check
      _
    $region10: #{encoder_forward.7} parent=5 // pred_check_branch
      %160 = sbr.rel (%p157) target = $region12
    $region11: #{encoder_forward.7} parent=5 // pred_region
      %s161 = ssub.s32 %s11, 1
      // Predicated region
      $region13: #{encoder_forward.7} parent=11 // pred_check
        %p162 = pneg %p58
      $region14: #{encoder_forward.7} parent=11 // pred_check_branch
        %164 = sbr.rel (%p162) target = $region16
      $region15: #{encoder_forward.7} parent=11 // pred_region
        _
      $region16: #{encoder_forward.7} parent=11 // pred_fallthru
        _
      // Predicated region
      $region17: #{encoder_forward.7} parent=11 // pred_check
        %p165 = pneg %p79
      $region18: #{encoder_forward.7} parent=11 // pred_check_branch
        %167 = sbr.rel (%p165) target = $region20
      $region19: #{encoder_forward.7} parent=11 // pred_region
        _
      $region20: #{encoder_forward.7} parent=11 // pred_fallthru
        _
      // Predicated region
      $region21: #{encoder_forward.7} parent=11 // pred_check
        %p168 = pneg %p100
      $region22: #{encoder_forward.7} parent=11 // pred_check_branch
        %170 = sbr.rel (%p168) target = $region24
      $region23: #{encoder_forward.7} parent=11 // pred_region
        _
      $region24: #{encoder_forward.7} parent=11 // pred_fallthru
        _
      // Predicated region
      $region25: #{encoder_forward.7} parent=11 // pred_check
        %p171 = pneg %p121
      $region26: #{encoder_forward.7} parent=11 // pred_check_branch
        %173 = sbr.rel (%p171) target = $region28
      $region27: #{encoder_forward.7} parent=11 // pred_region
        _
      $region28: #{encoder_forward.7} parent=11 // pred_fallthru
        _
    $region12: #{encoder_forward.7} parent=5 // pred_fallthru
      _
    %p174 = scmp.lt.s32.totalorder %s11, 2
    // Predicated region
    $region29: #{encoder_forward.7} parent=5 // pred_check
      %p175 = pneg %p174
    $region30: #{encoder_forward.7} parent=5 // pred_check_branch
      %177 = sbr.rel (%p175) target = $region32
    $region31: #{encoder_forward.7} parent=5 // pred_region
      // Predicated region
      $region33: #{encoder_forward.7} parent=31 // pred_check
        %p178 = pneg %p31
      $region34: #{encoder_forward.7} parent=31 // pred_check_branch
        %180 = sbr.rel (%p178) target = $region36
      $region35: #{encoder_forward.7} parent=31 // pred_region
        %s181 = smul.u32 2, %s11
        %p182 = scmp.lt.s32.totalorder %s181, 3
        %s183 = scalar_select %p182, %s181, 3
        %s184 = smul.addr %s183, 8
        %s185 = scalar_lea.vmem %s0, %s184
        %s186 = smul.u32 2, %s11
      $region36: #{encoder_forward.7} parent=31 // pred_fallthru
        _
    $region32: #{encoder_forward.7} parent=5 // pred_fallthru
      _
    %p187 = scmp.le.s32.totalorder 1, %s11
    %p188 = scmp.lt.s32.totalorder %s11, 3
    %p189 = pnand %p187, %p188
    %p190 = pneg %p189
    // Predicated region
    $region37: #{encoder_forward.7} parent=5 // pred_check
      _
    $region38: #{encoder_forward.7} parent=5 // pred_check_branch
      %192 = sbr.rel (%p189) target = $region40
    $region39: #{encoder_forward.7} parent=5 // pred_region
      %s193 = ssub.s32 %s11, 1
      %s194 = smul.u32 2, %s16
      %p195 = scmp.lt.s32.totalorder %s194, 3
      %s196 = scalar_select %p195, %s194, 3
      %s197 = smul.addr %s196, 8
      %s198 = scalar_lea.vmem %s0, %s197
      %p199 = pneg %p37
      %p200 = pneg %p34
      %p201 = pneg %p58
      %p202 = pneg %p55
      %p203 = pneg %p79
      %p204 = pneg %p76
      %p205 = pneg %p100
      %p206 = pneg %p97
      %p207 = pneg %p121
      %p208 = pneg %p118
      %p209 = pneg %p147
      %p210 = pneg %p144
      %s211 = smul.u32 2, %s16
      %p212 = scmp.lt.s32.totalorder %s211, 3
      %s213 = scalar_select %p212, %s211, 3
      %s214 = smul.addr %s213, 3
      %s215 = smul.addr %s214, 8
      %s216 = scalar_lea.vmem %s5, %s215
      %s217 = smul.u32 2, %s16
      %p218 = scmp.lt.s32.totalorder %s217, 3
      %s219 = scalar_select %p218, %s217, 3
      %s220 = smul.addr %s219, 8
      %s221 = scalar_lea.vmem %s0, %s220
      %s222 = smul.u32 2, %s16
      %s223 = smul.u32 2, %s16
      %p224 = scmp.lt.s32.totalorder %s223, 3
      %s225 = scalar_select %p224, %s223, 3
      %s226 = smul.addr %s225, 3
      %s227 = smul.addr %s226, 8
      %s228 = scalar_lea.vmem %s5, %s227
      %s229 = smul.u32 2, %s16
      %v230 = vld [vmem:[%s221] sm:$0xff]
      %v231 = vld [vmem:[%s221 + $0x8] sm:$0xff]
      %232 = vadd.xlane.f32.xlu0 %v230
      %v233 = vpop.xlane.xlu0 %232
      %234 = vadd.xlane.f32.xlu0 %v231
      %v235 = vpop.xlane.xlu0 %234
      %v236 = vrcp.pop 128.0
      %v237 = vmul.f32 %v233, %v236
      %v238 = vmul.f32 %v235, %v236
      %v239 = vsub.f32 %v230, %v237
      %v240 = vsub.f32 %v231, %v238
      %v241 = vmul.f32 %v239, %v239
      %v242 = vmul.f32 %v240, %v240
      %243 = vadd.xlane.f32.xlu0 %v241
      %v244 = vpop.xlane.xlu0 %243
      %245 = vadd.xlane.f32.xlu0 %v242
      %v246 = vpop.xlane.xlu0 %245
      %v247 = vmul.f32 %v244, %v236
      %v248 = vmul.f32 %v246, %v236
      %v249 = vadd.f32 %v247, 1e-05
      %v250 = vadd.f32 %v248, 1e-05
      %v251 = vrsqrt.pop %v249
      %v252 = vrsqrt.pop %v250
      %v253 = vmul.f32 %v239, %v251
      %v254 = vmul.f32 %v240, %v252
      %v255 = vld [vmem:[%s1] sm:$0x1]
      %v257 = vlaneseq
      %v258 = vshrl.u32 %v257, 7
      %v259 = vsub.s32 0, %v258
      %v260 = vrot.slane %v255, %v259
      %v262 = vmul.f32 %v253, %v260
      %v263 = vmul.f32 %v254, %v260
      %v264 = vld [vmem:[%s2] sm:$0x1]
      %v266 = vlaneseq
      %v267 = vshrl.u32 %v266, 7
      %v268 = vsub.s32 0, %v267
      %v269 = vrot.slane %v264, %v268
      %v271 = vadd.f32 %v262, %v269
      %v272 = vadd.f32 %v263, %v269
      %v273 = vld [vmem:[%s3] sm:$0xff]
      %v274 = vld [vmem:[%s3 + $0x8] sm:$0xff]
      %v275 = vld [vmem:[%s3 + $0x10] sm:$0xff]
      %v276 = vld [vmem:[%s3 + $0x18] sm:$0xff]
      %v277 = vld [vmem:[%s3 + $0x20] sm:$0xff]
      %v278 = vld [vmem:[%s3 + $0x28] sm:$0xff]
      %v279 = vld [vmem:[%s3 + $0x30] sm:$0xff]
      %v280 = vld [vmem:[%s3 + $0x38] sm:$0xff]
      %v281 = vld [vmem:[%s3 + $0x40] sm:$0xff]
      %v282 = vld [vmem:[%s3 + $0x48] sm:$0xff]
      %v283 = vld [vmem:[%s3 + $0x50] sm:$0xff]
      %v284 = vld [vmem:[%s3 + $0x58] sm:$0xff]
      %v285 = vld [vmem:[%s3 + $0x60] sm:$0xff]
      %v286 = vld [vmem:[%s3 + $0x68] sm:$0xff]
      %v287 = vld [vmem:[%s3 + $0x70] sm:$0xff]
      %v288 = vld [vmem:[%s3 + $0x78] sm:$0xff]
      %v289 = vld [vmem:[%s3 + $0x80] sm:$0xff]
      %v290 = vld [vmem:[%s3 + $0x88] sm:$0xff]
      %v291 = vld [vmem:[%s3 + $0x90] sm:$0xff]
      %v292 = vld [vmem:[%s3 + $0x98] sm:$0xff]
      %v293 = vld [vmem:[%s3 + $0xa0] sm:$0xff]
      %v294 = vld [vmem:[%s3 + $0xa8] sm:$0xff]
      %v295 = vld [vmem:[%s3 + $0xb0] sm:$0xff]
      %v296 = vld [vmem:[%s3 + $0xb8] sm:$0xff]
      %v297 = vld [vmem:[%s3 + $0xc0] sm:$0xff]
      %v298 = vld [vmem:[%s3 + $0xc8] sm:$0xff]
      %v299 = vld [vmem:[%s3 + $0xd0] sm:$0xff]
      %v300 = vld [vmem:[%s3 + $0xd8] sm:$0xff]
      %v301 = vld [vmem:[%s3 + $0xe0] sm:$0xff]
      %v302 = vld [vmem:[%s3 + $0xe8] sm:$0xff]
      %v303 = vld [vmem:[%s3 + $0xf0] sm:$0xff]
      %v304 = vld [vmem:[%s3 + $0xf8] sm:$0xff]
      %v305 = vld [vmem:[%s3 + $0x100] sm:$0xff]
      %v306 = vld [vmem:[%s3 + $0x108] sm:$0xff]
      %v307 = vld [vmem:[%s3 + $0x110] sm:$0xff]
      %v308 = vld [vmem:[%s3 + $0x118] sm:$0xff]
      %v309 = vld [vmem:[%s3 + $0x120] sm:$0xff]
      %v310 = vld [vmem:[%s3 + $0x128] sm:$0xff]
      %v311 = vld [vmem:[%s3 + $0x130] sm:$0xff]
      %v312 = vld [vmem:[%s3 + $0x138] sm:$0xff]
      %v313 = vld [vmem:[%s3 + $0x140] sm:$0xff]
      %v314 = vld [vmem:[%s3 + $0x148] sm:$0xff]
      %v315 = vld [vmem:[%s3 + $0x150] sm:$0xff]
      %v316 = vld [vmem:[%s3 + $0x158] sm:$0xff]
      %v317 = vld [vmem:[%s3 + $0x160] sm:$0xff]
      %v318 = vld [vmem:[%s3 + $0x168] sm:$0xff]
      %v319 = vld [vmem:[%s3 + $0x170] sm:$0xff]
      %v320 = vld [vmem:[%s3 + $0x178] sm:$0xff]
      %v321 = vld [vmem:[%s4] sm:$0x7]
      %v323 = vlaneseq
      %v324 = vshrl.u32 %v323, 7
      %v325 = vsub.s32 0, %v324
      %v326 = vrot.slane %v321, %v325
      %v327 = vlaneseq
      %v328 = vshrl.u32 %v327, 7
      %v329 = vsub.s32 1, %v328
      %v330 = vrot.slane %v321, %v329
      %v331 = vlaneseq
      %v332 = vshrl.u32 %v331, 7
      %v333 = vsub.s32 2, %v332
      %v334 = vrot.slane %v321, %v333
      %338 = vmatprep.subr.mxu0 %v319
      %339 = vmatpush1.msra.mxu0 %v318
      %340 = vmatprep.subr.mxu0 %v316
      %341 = vmatpush1.msra.mxu0 %v315
      %342 = vmatprep.subr.mxu0 %v313
      %343 = vmatpush1.msra.mxu0 %v312
      %344 = vmatprep.subr.mxu0 %v310
      %345 = vmatpush1.msra.mxu0 %v309
      %346 = vmatprep.subr.mxu0 %v307
      %347 = vmatpush1.msra.mxu0 %v306
      %348 = vmatprep.subr.mxu0 %v304
      %349 = vmatpush1.msra.mxu0 %v303
      %350 = vmatprep.subr.mxu0 %v301
      %351 = vmatpush1.msra.mxu0 %v300
      %352 = vmatprep.subr.mxu0 %v298
      %353 = vmatpush1.msra.mxu0 %v297
      %354 = vmatprep.subr.mxu0 %v295
      %355 = vmatpush1.msra.mxu0 %v294
      %356 = vmatprep.subr.mxu0 %v292
      %357 = vmatpush1.msra.mxu0 %v291
      %358 = vmatprep.subr.mxu0 %v289
      %359 = vmatpush1.msra.mxu0 %v288
      %360 = vmatprep.subr.mxu0 %v286
      %361 = vmatpush1.msra.mxu0 %v285
      %362 = vmatprep.subr.mxu0 %v283
      %363 = vmatpush1.msra.mxu0 %v282
      %364 = vmatprep.subr.mxu0 %v280
      %365 = vmatpush1.msra.mxu0 %v279
      %366 = vmatprep.subr.mxu0 %v277
      %367 = vmatpush1.msra.mxu0 %v276
      %368 = vmatprep.subr.mxu0 %v274
      %369 = vmatpush1.msra.mxu0 %v273
      %370 = vmatprep.subr.mxu0 0.0
      %371 = vmatpush2.msra.mxu0 0.0
      %372 = vmatprep.subr.mxu0 0.0
      %373 = vmatpush2.msra.mxu0 0.0
      %374 = vmatprep.subr.mxu0 0.0
      %375 = vmatpush2.msra.mxu0 0.0
      %376 = vmatprep.subr.mxu0 0.0
      %377 = vmatpush2.msra.mxu0 0.0
      %378 = vmatprep.subr.mxu0 0.0
      %379 = vmatpush2.msra.mxu0 0.0
      %380 = vmatprep.subr.mxu0 0.0
      %381 = vmatpush2.msra.mxu0 0.0
      %382 = vmatprep.subr.mxu0 0.0
      %383 = vmatpush2.msra.mxu0 0.0
      %384 = vmatprep.subr.mxu0 0.0
      %385 = vmatpush2.msra.mxu0 0.0
      %386 = vmatprep.subr.mxu0 0.0
      %387 = vmatpush2.msra.mxu0 0.0
      %388 = vmatprep.subr.mxu0 0.0
      %389 = vmatpush2.msra.mxu0 0.0
      %390 = vmatprep.subr.mxu0 0.0
      %391 = vmatpush2.msra.mxu0 0.0
      %392 = vmatprep.subr.mxu0 0.0
      %393 = vmatpush2.msra.mxu0 0.0
      %394 = vmatprep.subr.mxu0 0.0
      %395 = vmatpush2.msra.mxu0 0.0
      %396 = vmatprep.subr.mxu0 0.0
      %397 = vmatpush2.msra.mxu0 0.0
      %398 = vmatprep.subr.mxu0 0.0
      %399 = vmatpush2.msra.mxu0 0.0
      %400 = vmatprep.subr.mxu0 0.0
      %401 = vmatpush2.msra.mxu0 0.0
      %402 = vmatprep.mubr.f32.mxu0 0.0
      %403 = vmatmul.mubr.f32.gmra.mxu0 %v271
      %v404 = vpop.f32.mrf.mxu0
      %v405 = vadd.f32 %v326, %v404
      %v406 = vpop.f32.mrf.mxu0
      %v407 = vadd.f32 %v330, %v406
      %408 = vmatprep.mubr.f32.mxu0 0.0
      %409 = vmatmul.mubr.f32.gmra.mxu0 %v272
      %v410 = vpop.f32.mrf.mxu0
      %v411 = vadd.f32 %v326, %v410
      %v412 = vpop.f32.mrf.mxu0
      %v413 = vadd.f32 %v330, %v412
      %414 = vdwg.mxu0
      %415 = vmatprep.subr.mxu0 0.0
      %416 = vmatpush1.msra.mxu0 %v320
      %417 = vmatprep.subr.mxu0 0.0
      %418 = vmatpush1.msra.mxu0 %v317
      %419 = vmatprep.subr.mxu0 0.0
      %420 = vmatpush1.msra.mxu0 %v314
      %421 = vmatprep.subr.mxu0 0.0
      %422 = vmatpush1.msra.mxu0 %v311
      %423 = vmatprep.subr.mxu0 0.0
      %424 = vmatpush1.msra.mxu0 %v308
      %425 = vmatprep.subr.mxu0 0.0
      %426 = vmatpush1.msra.mxu0 %v305
      %427 = vmatprep.subr.mxu0 0.0
      %428 = vmatpush1.msra.mxu0 %v302
      %429 = vmatprep.subr.mxu0 0.0
      %430 = vmatpush1.msra.mxu0 %v299
      %431 = vmatprep.subr.mxu0 0.0
      %432 = vmatpush1.msra.mxu0 %v296
      %433 = vmatprep.subr.mxu0 0.0
      %434 = vmatpush1.msra.mxu0 %v293
      %435 = vmatprep.subr.mxu0 0.0
      %436 = vmatpush1.msra.mxu0 %v290
      %437 = vmatprep.subr.mxu0 0.0
      %438 = vmatpush1.msra.mxu0 %v287
      %439 = vmatprep.subr.mxu0 0.0
      %440 = vmatpush1.msra.mxu0 %v284
      %441 = vmatprep.subr.mxu0 0.0
      %442 = vmatpush1.msra.mxu0 %v281
      %443 = vmatprep.subr.mxu0 0.0
      %444 = vmatpush1.msra.mxu0 %v278
      %445 = vmatprep.subr.mxu0 0.0
      %446 = vmatpush1.msra.mxu0 %v275
      %447 = vmatprep.subr.mxu0 0.0
      %448 = vmatpush2.msra.mxu0 0.0
      %449 = vmatprep.subr.mxu0 0.0
      %450 = vmatpush2.msra.mxu0 0.0
      %451 = vmatprep.subr.mxu0 0.0
      %452 = vmatpush2.msra.mxu0 0.0
      %453 = vmatprep.subr.mxu0 0.0
      %454 = vmatpush2.msra.mxu0 0.0
      %455 = vmatprep.subr.mxu0 0.0
      %456 = vmatpush2.msra.mxu0 0.0
      %457 = vmatprep.subr.mxu0 0.0
      %458 = vmatpush2.msra.mxu0 0.0
      %459 = vmatprep.subr.mxu0 0.0
      %460 = vmatpush2.msra.mxu0 0.0
      %461 = vmatprep.subr.mxu0 0.0
      %462 = vmatpush2.msra.mxu0 0.0
      %463 = vmatprep.subr.mxu0 0.0
      %464 = vmatpush2.msra.mxu0 0.0
      %465 = vmatprep.subr.mxu0 0.0
      %466 = vmatpush2.msra.mxu0 0.0
      %467 = vmatprep.subr.mxu0 0.0
      %468 = vmatpush2.msra.mxu0 0.0
      %469 = vmatprep.subr.mxu0 0.0
      %470 = vmatpush2.msra.mxu0 0.0
      %471 = vmatprep.subr.mxu0 0.0
      %472 = vmatpush2.msra.mxu0 0.0
      %473 = vmatprep.subr.mxu0 0.0
      %474 = vmatpush2.msra.mxu0 0.0
      %475 = vmatprep.subr.mxu0 0.0
      %476 = vmatpush2.msra.mxu0 0.0
      %477 = vmatprep.subr.mxu0 0.0
      %478 = vmatpush2.msra.mxu0 0.0
      %479 = vmatprep.mubr.f32.mxu0 0.0
      %480 = vmatmul.mubr.f32.gmra.mxu0 %v271
      %v481 = vpop.f32.mrf.mxu0
      %v482 = vadd.f32 %v334, %v481
      %v483 = vpop.f32.mrf.mxu0
      %484 = vmatprep.mubr.f32.mxu0 0.0
      %485 = vmatmul.mubr.f32.gmra.mxu0 %v272
      %v486 = vpop.f32.mrf.mxu0
      %v487 = vadd.f32 %v334, %v486
      %v488 = vpop.f32.mrf.mxu0
      %489 = vdwg.mxu0
      %490 = vst [vmem:[%s228] sm:$0xff] %v405
      %491 = vst [vmem:[%s228 + $0x8] sm:$0xff] %v407
      %492 = vst [vmem:[%s228 + $0x10] sm:$0xff] %v482
      %493 = vst [vmem:[%s228 + $0x18] sm:$0xff] %v411
      %494 = vst [vmem:[%s228 + $0x20] sm:$0xff] %v413
      %495 = vst [vmem:[%s228 + $0x28] sm:$0xff] %v487
      %s496 = smul.u32 2, %s16
      %p497 = scmp.lt.s32.totalorder %s496, 3
      %s498 = scalar_select %p497, %s496, 3
      %s499 = smul.addr %s498, 3
      %s500 = smul.addr %s499, 8
      %s501 = scalar_lea.vmem %s5, %s500
      // Predicated region
      $region41: #{encoder_forward.7} parent=39 // pred_check
        %p502 = pneg %p144
      $region42: #{encoder_forward.7} parent=39 // pred_check_branch
        %504 = sbr.rel (%p502) target = $region44
      $region43: #{encoder_forward.7} parent=39 // pred_region
        %s505 = smul.u32 2, %s16
      $region44: #{encoder_forward.7} parent=39 // pred_fallthru
        _
    $region40: #{encoder_forward.7} parent=5 // pred_fallthru
      _
    %p506 = scmp.le.s32.totalorder 2, %s11
    // Predicated region
    $region45: #{encoder_forward.7} parent=5 // pred_check
      %p507 = pneg %p506
    $region46: #{encoder_forward.7} parent=5 // pred_check_branch
      %509 = sbr.rel (%p507) target = $region48
    $region47: #{encoder_forward.7} parent=5 // pred_region
      %s510 = ssub.s32 %s11, 2
      // Predicated region
      $region49: #{encoder_forward.7} parent=47 // pred_check
        %p511 = pneg %p150
      $region50: #{encoder_forward.7} parent=47 // pred_check_branch
        %513 = sbr.rel (%p511) target = $region52
      $region51: #{encoder_forward.7} parent=47 // pred_region
        %s514 = smul.u32 2, %s17
        %p515 = scmp.lt.s32.totalorder %s514, 3
        %s516 = scalar_select %p515, %s514, 3
        %s517 = smul.addr %s516, 3
        %s518 = smul.addr %s517, 8
        %s519 = scalar_lea.vmem %s5, %s518
      $region52: #{encoder_forward.7} parent=47 // pred_fallthru
        _
    $region48: #{encoder_forward.7} parent=5 // pred_fallthru
      _
  $region6: #{encoder_forward.7} parent=0 // loop_footer
    %s15 = sadd.s32 1, %s11
  $region7: #{encoder_forward.7} parent=0 // loop_footer_branch
    %10 = sbr.rel target = $region3
  $region8: #{encoder_forward.7} parent=0 // loop_exit
    _

// kernel: encoder_forward.9
$region0: #{encoder_forward.9}
  #allocation0 [shape = 'u32[]', space=smem, size = 0x4, offset = 0x4, fixed_abs, tag = 'smem constant byte address 0x4 - core index']
  #allocation1 [shape = 'u32[144,128]{1,0:T(1,128)}', space=vmem, size = 0x12000, scoped, tag = 'internal scratch']
  %s0 = inlined_call_operand.vmem [shape: f32[32,128], index: 0, kind: input, shape index: {}]
  %s1 = inlined_call_operand.vmem [shape: f32[32,128], index: 1, kind: input, shape index: {}]
  %s2 = inlined_call_operand.vmem [shape: f32[128,128], index: 2, kind: input, shape index: {}]
  %s3 = inlined_call_operand.vmem [shape: f32[1,128], index: 3, kind: input, shape index: {}]
  %s4 = inlined_call_operand.vmem [shape: f32[1,128], index: 4, kind: input, shape index: {}]
  %s5 = inlined_call_operand.vmem [shape: f32[1,128], index: 5, kind: input, shape index: {}]
  %s6 = inlined_call_operand.vmem [shape: f32[128,256], index: 6, kind: input, shape index: {}]
  %s7 = inlined_call_operand.vmem [shape: f32[1,256], index: 7, kind: input, shape index: {}]
  %s8 = inlined_call_operand.vmem [shape: f32[256,128], index: 8, kind: input, shape index: {}]
  %s9 = inlined_call_operand.vmem [shape: f32[1,128], index: 9, kind: input, shape index: {}]
  %s10 = inlined_call_operand.vmem [shape: f32[32,128], index: 10, kind: output, shape index: {}]
  %s11 = sld [smem:[#allocation0]]
  $region73: #{encoder_forward.9} parent=0
    _
  %s13 = ssub.s32 1, %s11
  %s14 = scalar_select 0, %s13, %s11
  loop: start=0, step=1, limit=4
  $region2: #{encoder_forward.9} parent=0 // loop_pre_header
    _
  $region3: #{encoder_forward.9} parent=0 // loop_header
    %s16 = sphi 0, %s20
    %p17 = scmp.ge.s32.totalorder %s16, 4
    %s26 = sphi 0, %s28
    %s29 = sphi 0, %s26
    %s30 = sphi 0, %s29
    %s46 = sphi 0, %s30
    %s52 = sphi 0, %s54
    %s55 = sphi 0, %s52
    %s56 = sphi 0, %s55
    %s72 = sphi 0, %s56
    %s76 = sphi 0, %s76
    %s78 = sphi 0, %s76
    %s79 = sphi 0, %s78
    %s93 = sphi 0, %s79
    %s97 = sphi 0, %s97
    %s99 = sphi 0, %s97
    %s100 = sphi 0, %s99
    %s114 = sphi 0, %s100
    %s118 = sphi 0, %s118
    %s120 = sphi 0, %s118
    %s121 = sphi 0, %s120
    %s135 = sphi 0, %s121
    %s139 = sphi 0, %s139
    %s141 = sphi 0, %s139
    %s142 = sphi 0, %s141
    %s156 = sphi 0, %s142
    %s160 = sphi 0, %s160
    %s162 = sphi 0, %s160
    %s163 = sphi 0, %s162
    %s177 = sphi 0, %s163
    %s181 = sphi 0, %s181
    %s183 = sphi 0, %s181
    %s184 = sphi 0, %s183
    %s198 = sphi 0, %s184
    %s202 = sphi 0, %s202
    %s204 = sphi 0, %s202
    %s205 = sphi 0, %s204
    %s219 = sphi 0, %s205
    %s223 = sphi 0, %s223
    %s225 = sphi 0, %s223
    %s226 = sphi 0, %s225
    %s240 = sphi 0, %s226
    %s246 = sphi 0, %s248
    %s249 = sphi 0, %s246
    %s250 = sphi 0, %s249
    %s266 = sphi 0, %s250
  $region4: #{encoder_forward.9} parent=0 // loop_header_branch
    %19 = sbr.rel (%p17) target = $region8
  $region5: #{encoder_forward.9} parent=0 // loop_body
    %s21 = ssub.s32 %s16, 1
    %s22 = ssub.s32 %s16, 2
    %s23 = sadd.s32 %s16, 1
    %s24 = ssub.s32 %s16, %s23
    %p25 = scmp.eq.s32.totalorder %s24, 0
    %s27 = sadd.s32 %s26, 1
    %s28 = scalar_select %p25, %s26, %s27
    %p31 = pneg %p25
    %p32 = scmp.eq.s32.totalorder %s16, 1
    %p33 = por %p31, %p32
    %p34 = scmp.ne.s32.totalorder %s26, %s29
    %p35 = scmp.eq.s32.totalorder %s16, 0
    %p36 = por %p34, %p35
    %p37 = scmp.ne.s32.totalorder %s26, %s29
    %p38 = scmp.eq.s32.totalorder %s21, 1
    %p39 = por %p37, %p38
    %p40 = scmp.ne.s32.totalorder %s29, %s30
    %p41 = scmp.eq.s32.totalorder %s21, 0
    %p42 = por %p40, %p41
    %p43 = scmp.ne.s32.totalorder %s29, %s30
    %p44 = scmp.eq.s32.totalorder %s22, 1
    %p45 = por %p43, %p44
    %p47 = scmp.ne.s32.totalorder %s30, %s46
    %p48 = scmp.eq.s32.totalorder %s22, 0
    %p49 = por %p47, %p48
    %s50 = ssub.s32 %s16, %s23
    %p51 = scmp.eq.s32.totalorder %s50, 0
    %s53 = sadd.s32 %s52, 1
    %s54 = scalar_select %p51, %s52, %s53
    %p57 = pneg %p51
    %p58 = scmp.eq.s32.totalorder %s16, 1
    %p59 = por %p57, %p58
    %p60 = scmp.ne.s32.totalorder %s52, %s55
    %p61 = scmp.eq.s32.totalorder %s16, 0
    %p62 = por %p60, %p61
    %p63 = scmp.ne.s32.totalorder %s52, %s55
    %p64 = scmp.eq.s32.totalorder %s21, 1
    %p65 = por %p63, %p64
    %p66 = scmp.ne.s32.totalorder %s55, %s56
    %p67 = scmp.eq.s32.totalorder %s21, 0
    %p68 = por %p66, %p67
    %p69 = scmp.ne.s32.totalorder %s55, %s56
    %p70 = scmp.eq.s32.totalorder %s22, 1
    %p71 = por %p69, %p70
    %p73 = scmp.ne.s32.totalorder %s56, %s72
    %p74 = scmp.eq.s32.totalorder %s22, 0
    %p75 = por %p73, %p74
    %s77 = sadd.s32 %s76, 1
    %p80 = scmp.eq.s32.totalorder %s16, 1
    %p81 = scmp.ne.s32.totalorder %s76, %s78
    %p82 = scmp.eq.s32.totalorder %s16, 0
    %p83 = por %p81, %p82
    %p84 = scmp.ne.s32.totalorder %s76, %s78
    %p85 = scmp.eq.s32.totalorder %s21, 1
    %p86 = por %p84, %p85
    %p87 = scmp.ne.s32.totalorder %s78, %s79
    %p88 = scmp.eq.s32.totalorder %s21, 0
    %p89 = por %p87, %p88
    %p90 = scmp.ne.s32.totalorder %s78, %s79
    %p91 = scmp.eq.s32.totalorder %s22, 1
    %p92 = por %p90, %p91
    %p94 = scmp.ne.s32.totalorder %s79, %s93
    %p95 = scmp.eq.s32.totalorder %s22, 0
    %p96 = por %p94, %p95
    %s98 = sadd.s32 %s97, 1
    %p101 = scmp.eq.s32.totalorder %s16, 1
    %p102 = scmp.ne.s32.totalorder %s97, %s99
    %p103 = scmp.eq.s32.totalorder %s16, 0
    %p104 = por %p102, %p103
    %p105 = scmp.ne.s32.totalorder %s97, %s99
    %p106 = scmp.eq.s32.totalorder %s21, 1
    %p107 = por %p105, %p106
    %p108 = scmp.ne.s32.totalorder %s99, %s100
    %p109 = scmp.eq.s32.totalorder %s21, 0
    %p110 = por %p108, %p109
    %p111 = scmp.ne.s32.totalorder %s99, %s100
    %p112 = scmp.eq.s32.totalorder %s22, 1
    %p113 = por %p111, %p112
    %p115 = scmp.ne.s32.totalorder %s100, %s114
    %p116 = scmp.eq.s32.totalorder %s22, 0
    %p117 = por %p115, %p116
    %s119 = sadd.s32 %s118, 1
    %p122 = scmp.eq.s32.totalorder %s16, 1
    %p123 = scmp.ne.s32.totalorder %s118, %s120
    %p124 = scmp.eq.s32.totalorder %s16, 0
    %p125 = por %p123, %p124
    %p126 = scmp.ne.s32.totalorder %s118, %s120
    %p127 = scmp.eq.s32.totalorder %s21, 1
    %p128 = por %p126, %p127
    %p129 = scmp.ne.s32.totalorder %s120, %s121
    %p130 = scmp.eq.s32.totalorder %s21, 0
    %p131 = por %p129, %p130
    %p132 = scmp.ne.s32.totalorder %s120, %s121
    %p133 = scmp.eq.s32.totalorder %s22, 1
    %p134 = por %p132, %p133
    %p136 = scmp.ne.s32.totalorder %s121, %s135
    %p137 = scmp.eq.s32.totalorder %s22, 0
    %p138 = por %p136, %p137
    %s140 = sadd.s32 %s139, 1
    %p143 = scmp.eq.s32.totalorder %s16, 1
    %p144 = scmp.ne.s32.totalorder %s139, %s141
    %p145 = scmp.eq.s32.totalorder %s16, 0
    %p146 = por %p144, %p145
    %p147 = scmp.ne.s32.totalorder %s139, %s141
    %p148 = scmp.eq.s32.totalorder %s21, 1
    %p149 = por %p147, %p148
    %p150 = scmp.ne.s32.totalorder %s141, %s142
    %p151 = scmp.eq.s32.totalorder %s21, 0
    %p152 = por %p150, %p151
    %p153 = scmp.ne.s32.totalorder %s141, %s142
    %p154 = scmp.eq.s32.totalorder %s22, 1
    %p155 = por %p153, %p154
    %p157 = scmp.ne.s32.totalorder %s142, %s156
    %p158 = scmp.eq.s32.totalorder %s22, 0
    %p159 = por %p157, %p158
    %s161 = sadd.s32 %s160, 1
    %p164 = scmp.eq.s32.totalorder %s16, 1
    %p165 = scmp.ne.s32.totalorder %s160, %s162
    %p166 = scmp.eq.s32.totalorder %s16, 0
    %p167 = por %p165, %p166
    %p168 = scmp.ne.s32.totalorder %s160, %s162
    %p169 = scmp.eq.s32.totalorder %s21, 1
    %p170 = por %p168, %p169
    %p171 = scmp.ne.s32.totalorder %s162, %s163
    %p172 = scmp.eq.s32.totalorder %s21, 0
    %p173 = por %p171, %p172
    %p174 = scmp.ne.s32.totalorder %s162, %s163
    %p175 = scmp.eq.s32.totalorder %s22, 1
    %p176 = por %p174, %p175
    %p178 = scmp.ne.s32.totalorder %s163, %s177
    %p179 = scmp.eq.s32.totalorder %s22, 0
    %p180 = por %p178, %p179
    %s182 = sadd.s32 %s181, 1
    %p185 = scmp.eq.s32.totalorder %s16, 1
    %p186 = scmp.ne.s32.totalorder %s181, %s183
    %p187 = scmp.eq.s32.totalorder %s16, 0
    %p188 = por %p186, %p187
    %p189 = scmp.ne.s32.totalorder %s181, %s183
    %p190 = scmp.eq.s32.totalorder %s21, 1
    %p191 = por %p189, %p190
    %p192 = scmp.ne.s32.totalorder %s183, %s184
    %p193 = scmp.eq.s32.totalorder %s21, 0
    %p194 = por %p192, %p193
    %p195 = scmp.ne.s32.totalorder %s183, %s184
    %p196 = scmp.eq.s32.totalorder %s22, 1
    %p197 = por %p195, %p196
    %p199 = scmp.ne.s32.totalorder %s184, %s198
    %p200 = scmp.eq.s32.totalorder %s22, 0
    %p201 = por %p199, %p200
    %s203 = sadd.s32 %s202, 1
    %p206 = scmp.eq.s32.totalorder %s16, 1
    %p207 = scmp.ne.s32.totalorder %s202, %s204
    %p208 = scmp.eq.s32.totalorder %s16, 0
    %p209 = por %p207, %p208
    %p210 = scmp.ne.s32.totalorder %s202, %s204
    %p211 = scmp.eq.s32.totalorder %s21, 1
    %p212 = por %p210, %p211
    %p213 = scmp.ne.s32.totalorder %s204, %s205
    %p214 = scmp.eq.s32.totalorder %s21, 0
    %p215 = por %p213, %p214
    %p216 = scmp.ne.s32.totalorder %s204, %s205
    %p217 = scmp.eq.s32.totalorder %s22, 1
    %p218 = por %p216, %p217
    %p220 = scmp.ne.s32.totalorder %s205, %s219
    %p221 = scmp.eq.s32.totalorder %s22, 0
    %p222 = por %p220, %p221
    %s224 = sadd.s32 %s223, 1
    %p227 = scmp.eq.s32.totalorder %s16, 1
    %p228 = scmp.ne.s32.totalorder %s223, %s225
    %p229 = scmp.eq.s32.totalorder %s16, 0
    %p230 = por %p228, %p229
    %p231 = scmp.ne.s32.totalorder %s223, %s225
    %p232 = scmp.eq.s32.totalorder %s21, 1
    %p233 = por %p231, %p232
    %p234 = scmp.ne.s32.totalorder %s225, %s226
    %p235 = scmp.eq.s32.totalorder %s21, 0
    %p236 = por %p234, %p235
    %p237 = scmp.ne.s32.totalorder %s225, %s226
    %p238 = scmp.eq.s32.totalorder %s22, 1
    %p239 = por %p237, %p238
    %p241 = scmp.ne.s32.totalorder %s226, %s240
    %p242 = scmp.eq.s32.totalorder %s22, 0
    %p243 = por %p241, %p242
    %s244 = ssub.s32 %s16, %s23
    %p245 = scmp.eq.s32.totalorder %s244, 0
    %s247 = sadd.s32 %s246, 1
    %s248 = scalar_select %p245, %s246, %s247
    %p251 = pneg %p245
    %p252 = scmp.eq.s32.totalorder %s16, 1
    %p253 = por %p251, %p252
    %p254 = scmp.ne.s32.totalorder %s246, %s249
    %p255 = scmp.eq.s32.totalorder %s16, 0
    %p256 = por %p254, %p255
    %p257 = scmp.ne.s32.totalorder %s246, %s249
    %p258 = scmp.eq.s32.totalorder %s21, 1
    %p259 = por %p257, %p258
    %p260 = scmp.ne.s32.totalorder %s249, %s250
    %p261 = scmp.eq.s32.totalorder %s21, 0
    %p262 = por %p260, %p261
    %p263 = scmp.ne.s32.totalorder %s249, %s250
    %p264 = scmp.eq.s32.totalorder %s22, 1
    %p265 = por %p263, %p264
    %p267 = scmp.ne.s32.totalorder %s250, %s266
    %p268 = scmp.eq.s32.totalorder %s22, 0
    %p269 = por %p267, %p268
    %p270 = scmp.le.s32.totalorder 1, %s16
    %p271 = scmp.lt.s32.totalorder %s16, 3
    %p272 = pnand %p270, %p271
    %p273 = pneg %p272
    // Predicated region
    $region9: #{encoder_forward.9} parent=5 // pred_check
      _
    $region10: #{encoder_forward.9} parent=5 // pred_check_branch
      %275 = sbr.rel (%p272) target = $region12
    $region11: #{encoder_forward.9} parent=5 // pred_region
      %s276 = ssub.s32 %s16, 1
      // Predicated region
      $region13: #{encoder_forward.9} parent=11 // pred_check
        %p277 = pneg %p89
      $region14: #{encoder_forward.9} parent=11 // pred_check_branch
        %279 = sbr.rel (%p277) target = $region16
      $region15: #{encoder_forward.9} parent=11 // pred_region
        _
      $region16: #{encoder_forward.9} parent=11 // pred_fallthru
        _
      // Predicated region
      $region17: #{encoder_forward.9} parent=11 // pred_check
        %p280 = pneg %p110
      $region18: #{encoder_forward.9} parent=11 // pred_check_branch
        %282 = sbr.rel (%p280) target = $region20
      $region19: #{encoder_forward.9} parent=11 // pred_region
        _
      $region20: #{encoder_forward.9} parent=11 // pred_fallthru
        _
      // Predicated region
      $region21: #{encoder_forward.9} parent=11 // pred_check
        %p283 = pneg %p131
      $region22: #{encoder_forward.9} parent=11 // pred_check_branch
        %285 = sbr.rel (%p283) target = $region24
      $region23: #{encoder_forward.9} parent=11 // pred_region
        _
      $region24: #{encoder_forward.9} parent=11 // pred_fallthru
        _
      // Predicated region
      $region25: #{encoder_forward.9} parent=11 // pred_check
        %p286 = pneg %p152
      $region26: #{encoder_forward.9} parent=11 // pred_check_branch
        %288 = sbr.rel (%p286) target = $region28
      $region27: #{encoder_forward.9} parent=11 // pred_region
        _
      $region28: #{encoder_forward.9} parent=11 // pred_fallthru
        _
      // Predicated region
      $region29: #{encoder_forward.9} parent=11 // pred_check
        %p289 = pneg %p173
      $region30: #{encoder_forward.9} parent=11 // pred_check_branch
        %291 = sbr.rel (%p289) target = $region32
      $region31: #{encoder_forward.9} parent=11 // pred_region
        _
      $region32: #{encoder_forward.9} parent=11 // pred_fallthru
        _
      // Predicated region
      $region33: #{encoder_forward.9} parent=11 // pred_check
        %p292 = pneg %p194
      $region34: #{encoder_forward.9} parent=11 // pred_check_branch
        %294 = sbr.rel (%p292) target = $region36
      $region35: #{encoder_forward.9} parent=11 // pred_region
        _
      $region36: #{encoder_forward.9} parent=11 // pred_fallthru
        _
      // Predicated region
      $region37: #{encoder_forward.9} parent=11 // pred_check
        %p295 = pneg %p215
      $region38: #{encoder_forward.9} parent=11 // pred_check_branch
        %297 = sbr.rel (%p295) target = $region40
      $region39: #{encoder_forward.9} parent=11 // pred_region
        _
      $region40: #{encoder_forward.9} parent=11 // pred_fallthru
        _
      // Predicated region
      $region41: #{encoder_forward.9} parent=11 // pred_check
        %p298 = pneg %p236
      $region42: #{encoder_forward.9} parent=11 // pred_check_branch
        %300 = sbr.rel (%p298) target = $region44
      $region43: #{encoder_forward.9} parent=11 // pred_region
        _
      $region44: #{encoder_forward.9} parent=11 // pred_fallthru
        _
    $region12: #{encoder_forward.9} parent=5 // pred_fallthru
      _
    %p301 = scmp.lt.s32.totalorder %s16, 2
    // Predicated region
    $region45: #{encoder_forward.9} parent=5 // pred_check
      %p302 = pneg %p301
    $region46: #{encoder_forward.9} parent=5 // pred_check_branch
      %304 = sbr.rel (%p302) target = $region48
    $region47: #{encoder_forward.9} parent=5 // pred_region
      // Predicated region
      $region49: #{encoder_forward.9} parent=47 // pred_check
        %p305 = pneg %p36
      $region50: #{encoder_forward.9} parent=47 // pred_check_branch
        %307 = sbr.rel (%p305) target = $region52
      $region51: #{encoder_forward.9} parent=47 // pred_region
        %s308 = smul.u32 2, %s16
        %p309 = scmp.lt.s32.totalorder %s308, 3
        %s310 = scalar_select %p309, %s308, 3
        %s311 = smul.addr %s310, 8
        %s312 = scalar_lea.vmem %s0, %s311
        %s313 = smul.u32 2, %s16
      $region52: #{encoder_forward.9} parent=47 // pred_fallthru
        _
      // Predicated region
      $region53: #{encoder_forward.9} parent=47 // pred_check
        %p314 = pneg %p62
      $region54: #{encoder_forward.9} parent=47 // pred_check_branch
        %316 = sbr.rel (%p314) target = $region56
      $region55: #{encoder_forward.9} parent=47 // pred_region
        %s317 = smul.u32 2, %s16
        %p318 = scmp.lt.s32.totalorder %s317, 3
        %s319 = scalar_select %p318, %s317, 3
        %s320 = smul.addr %s319, 8
        %s321 = scalar_lea.vmem %s1, %s320
        %s322 = smul.u32 2, %s16
      $region56: #{encoder_forward.9} parent=47 // pred_fallthru
        _
    $region48: #{encoder_forward.9} parent=5 // pred_fallthru
      _
    %p323 = scmp.le.s32.totalorder 1, %s16
    %p324 = scmp.lt.s32.totalorder %s16, 3
    %p325 = pnand %p323, %p324
    %p326 = pneg %p325
    // Predicated region
    $region57: #{encoder_forward.9} parent=5 // pred_check
      _
    $region58: #{encoder_forward.9} parent=5 // pred_check_branch
      %328 = sbr.rel (%p325) target = $region60
    $region59: #{encoder_forward.9} parent=5 // pred_region
      %s329 = ssub.s32 %s16, 1
      %s330 = smul.u32 2, %s21
      %p331 = scmp.lt.s32.totalorder %s330, 3
      %s332 = scalar_select %p331, %s330, 3
      %s333 = smul.addr %s332, 8
      %s334 = scalar_lea.vmem %s0, %s333
      %p335 = pneg %p42
      %p336 = pneg %p39
      %s337 = smul.u32 2, %s21
      %p338 = scmp.lt.s32.totalorder %s337, 3
      %s339 = scalar_select %p338, %s337, 3
      %s340 = smul.addr %s339, 8
      %s341 = scalar_lea.vmem %s1, %s340
      %p342 = pneg %p68
      %p343 = pneg %p65
      %p344 = pneg %p89
      %p345 = pneg %p86
      %p346 = pneg %p110
      %p347 = pneg %p107
      %p348 = pneg %p131
      %p349 = pneg %p128
      %p350 = pneg %p152
      %p351 = pneg %p149
      %p352 = pneg %p173
      %p353 = pneg %p170
      %p354 = pneg %p194
      %p355 = pneg %p191
      %p356 = pneg %p215
      %p357 = pneg %p212
      %p358 = pneg %p236
      %p359 = pneg %p233
      %p360 = pneg %p262
      %p361 = pneg %p259
      %s362 = smul.u32 2, %s21
      %p363 = scmp.lt.s32.totalorder %s362, 3
      %s364 = scalar_select %p363, %s362, 3
      %s365 = smul.addr %s364, 8
      %s366 = scalar_lea.vmem %s10, %s365
      %s367 = smul.u32 2, %s21
      %p368 = scmp.lt.s32.totalorder %s367, 3
      %s369 = scalar_select %p368, %s367, 3
      %s370 = smul.addr %s369, 8
      %s371 = scalar_lea.vmem %s0, %s370
      %s372 = smul.u32 2, %s21
      %s373 = smul.u32 2, %s21
      %p374 = scmp.lt.s32.totalorder %s373, 3
      %s375 = scalar_select %p374, %s373, 3
      %s376 = smul.addr %s375, 8
      %s377 = scalar_lea.vmem %s1, %s376
      %s378 = smul.u32 2, %s21
      %s379 = smul.u32 2, %s21
      %p380 = scmp.lt.s32.totalorder %s379, 3
      %s381 = scalar_select %p380, %s379, 3
      %s382 = smul.addr %s381, 8
      %s383 = scalar_lea.vmem %s10, %s382
      %s384 = smul.u32 2, %s21
      %v385 = vld [vmem:[%s377] sm:$0xff]
      %v386 = vld [vmem:[%s377 + $0x8] sm:$0xff]
      %v387 = vld [vmem:[%s371] sm:$0xff]
      %v388 = vld [vmem:[%s371 + $0x8] sm:$0xff]
      %v389 = vld [vmem:[%s2] sm:$0xff]
      %v390 = vld [vmem:[%s2 + $0x8] sm:$0xff]
      %v391 = vld [vmem:[%s2 + $0x10] sm:$0xff]
      %v392 = vld [vmem:[%s2 + $0x18] sm:$0xff]
      %v393 = vld [vmem:[%s2 + $0x20] sm:$0xff]
      %v394 = vld [vmem:[%s2 + $0x28] sm:$0xff]
      %v395 = vld [vmem:[%s2 + $0x30] sm:$0xff]
      %v396 = vld [vmem:[%s2 + $0x38] sm:$0xff]
      %v397 = vld [vmem:[%s2 + $0x40] sm:$0xff]
      %v398 = vld [vmem:[%s2 + $0x48] sm:$0xff]
      %v399 = vld [vmem:[%s2 + $0x50] sm:$0xff]
      %v400 = vld [vmem:[%s2 + $0x58] sm:$0xff]
      %v401 = vld [vmem:[%s2 + $0x60] sm:$0xff]
      %v402 = vld [vmem:[%s2 + $0x68] sm:$0xff]
      %v403 = vld [vmem:[%s2 + $0x70] sm:$0xff]
      %v404 = vld [vmem:[%s2 + $0x78] sm:$0xff]
      %405 = vmatprep.subr.mxu0 0.0
      %406 = vmatpush1.msra.mxu0 %v404
      %407 = vmatprep.subr.mxu0 0.0
      %408 = vmatpush1.msra.mxu0 %v403
      %409 = vmatprep.subr.mxu0 0.0
      %410 = vmatpush1.msra.mxu0 %v402
      %411 = vmatprep.subr.mxu0 0.0
      %412 = vmatpush1.msra.mxu0 %v401
      %413 = vmatprep.subr.mxu0 0.0
      %414 = vmatpush1.msra.mxu0 %v400
      %415 = vmatprep.subr.mxu0 0.0
      %416 = vmatpush1.msra.mxu0 %v399
      %417 = vmatprep.subr.mxu0 0.0
      %418 = vmatpush1.msra.mxu0 %v398
      %419 = vmatprep.subr.mxu0 0.0
      %420 = vmatpush1.msra.mxu0 %v397
      %421 = vmatprep.subr.mxu0 0.0
      %422 = vmatpush1.msra.mxu0 %v396
      %423 = vmatprep.subr.mxu0 0.0
      %424 = vmatpush1.msra.mxu0 %v395
      %425 = vmatprep.subr.mxu0 0.0
      %426 = vmatpush1.msra.mxu0 %v394
      %427 = vmatprep.subr.mxu0 0.0
      %428 = vmatpush1.msra.mxu0 %v393
      %429 = vmatprep.subr.mxu0 0.0
      %430 = vmatpush1.msra.mxu0 %v392
      %431 = vmatprep.subr.mxu0 0.0
      %432 = vmatpush1.msra.mxu0 %v391
      %433 = vmatprep.subr.mxu0 0.0
      %434 = vmatpush1.msra.mxu0 %v390
      %435 = vmatprep.subr.mxu0 0.0
      %436 = vmatpush1.msra.mxu0 %v389
      %437 = vmatprep.subr.mxu0 0.0
      %438 = vmatpush2.msra.mxu0 0.0
      %439 = vmatprep.subr.mxu0 0.0
      %440 = vmatpush2.msra.mxu0 0.0
      %441 = vmatprep.subr.mxu0 0.0
      %442 = vmatpush2.msra.mxu0 0.0
      %443 = vmatprep.subr.mxu0 0.0
      %444 = vmatpush2.msra.mxu0 0.0
      %445 = vmatprep.subr.mxu0 0.0
      %446 = vmatpush2.msra.mxu0 0.0
      %447 = vmatprep.subr.mxu0 0.0
      %448 = vmatpush2.msra.mxu0 0.0
      %449 = vmatprep.subr.mxu0 0.0
      %450 = vmatpush2.msra.mxu0 0.0
      %451 = vmatprep.subr.mxu0 0.0
      %452 = vmatpush2.msra.mxu0 0.0
      %453 = vmatprep.subr.mxu0 0.0
      %454 = vmatpush2.msra.mxu0 0.0
      %455 = vmatprep.subr.mxu0 0.0
      %456 = vmatpush2.msra.mxu0 0.0
      %457 = vmatprep.subr.mxu0 0.0
      %458 = vmatpush2.msra.mxu0 0.0
      %459 = vmatprep.subr.mxu0 0.0
      %460 = vmatpush2.msra.mxu0 0.0
      %461 = vmatprep.subr.mxu0 0.0
      %462 = vmatpush2.msra.mxu0 0.0
      %463 = vmatprep.subr.mxu0 0.0
      %464 = vmatpush2.msra.mxu0 0.0
      %465 = vmatprep.subr.mxu0 0.0
      %466 = vmatpush2.msra.mxu0 0.0
      %467 = vmatprep.subr.mxu0 0.0
      %468 = vmatpush2.msra.mxu0 0.0
      %469 = vmatprep.mubr.f32.mxu0 0.0
      %470 = vmatmul.mubr.f32.gmra.mxu0 %v387
      %v471 = vpop.f32.mrf.mxu0
      %v472 = vadd.f32 0.0, %v471
      %v473 = vpop.f32.mrf.mxu0
      %474 = vmatprep.mubr.f32.mxu0 0.0
      %475 = vmatmul.mubr.f32.gmra.mxu0 %v388
      %v476 = vpop.f32.mrf.mxu0
      %v477 = vadd.f32 0.0, %v476
      %v478 = vpop.f32.mrf.mxu0
      %479 = vdwg.mxu0
      %v480 = vadd.f32 %v385, %v472
      %v481 = vadd.f32 %v386, %v477
      %v482 = vld [vmem:[%s3] sm:$0x1]
      %v484 = vlaneseq
      %v485 = vshrl.u32 %v484, 7
      %v486 = vsub.s32 0, %v485
      %v487 = vrot.slane %v482, %v486
      %v489 = vadd.f32 %v480, %v487
      %v490 = vadd.f32 %v481, %v487
      %491 = vadd.xlane.f32.xlu0 %v489
      %v492 = vpop.xlane.xlu0 %491
      %493 = vadd.xlane.f32.xlu0 %v490
      %v494 = vpop.xlane.xlu0 %493
      %v495 = vrcp.pop 128.0
      %v496 = vmul.f32 %v492, %v495
      %v497 = vmul.f32 %v494, %v495
      %v498 = vsub.f32 %v489, %v496
      %v499 = vsub.f32 %v490, %v497
      %v500 = vmul.f32 %v498, %v498
      %v501 = vmul.f32 %v499, %v499
      %502 = vadd.xlane.f32.xlu0 %v500
      %v503 = vpop.xlane.xlu0 %502
      %504 = vadd.xlane.f32.xlu0 %v501
      %v505 = vpop.xlane.xlu0 %504
      %v506 = vmul.f32 %v503, %v495
      %v507 = vmul.f32 %v505, %v495
      %v508 = vadd.f32 %v506, 1e-05
      %v509 = vadd.f32 %v507, 1e-05
      %v510 = vrsqrt.pop %v508
      %v511 = vrsqrt.pop %v509
      %v512 = vmul.f32 %v498, %v510
      %v513 = vmul.f32 %v499, %v511
      %v514 = vld [vmem:[%s4] sm:$0x1]
      %v516 = vlaneseq
      %v517 = vshrl.u32 %v516, 7
      %v518 = vsub.s32 0, %v517
      %v519 = vrot.slane %v514, %v518
      %v521 = vmul.f32 %v512, %v519
      %v522 = vmul.f32 %v513, %v519
      %v523 = vld [vmem:[%s5] sm:$0x1]
      %v525 = vlaneseq
      %v526 = vshrl.u32 %v525, 7
      %v527 = vsub.s32 0, %v526
      %v528 = vrot.slane %v523, %v527
      %v530 = vadd.f32 %v521, %v528
      %v531 = vadd.f32 %v522, %v528
      %v532 = vld [vmem:[%s6] sm:$0xff]
      %v533 = vld [vmem:[%s6 + $0x8] sm:$0xff]
      %v534 = vld [vmem:[%s6 + $0x10] sm:$0xff]
      %v535 = vld [vmem:[%s6 + $0x18] sm:$0xff]
      %v536 = vld [vmem:[%s6 + $0x20] sm:$0xff]
      %v537 = vld [vmem:[%s6 + $0x28] sm:$0xff]
      %v538 = vld [vmem:[%s6 + $0x30] sm:$0xff]
      %v539 = vld [vmem:[%s6 + $0x38] sm:$0xff]
      %v540 = vld [vmem:[%s6 + $0x40] sm:$0xff]
      %v541 = vld [vmem:[%s6 + $0x48] sm:$0xff]
      %v542 = vld [vmem:[%s6 + $0x50] sm:$0xff]
      %v543 = vld [vmem:[%s6 + $0x58] sm:$0xff]
      %v544 = vld [vmem:[%s6 + $0x60] sm:$0xff]
      %v545 = vld [vmem:[%s6 + $0x68] sm:$0xff]
      %v546 = vld [vmem:[%s6 + $0x70] sm:$0xff]
      %v547 = vld [vmem:[%s6 + $0x78] sm:$0xff]
      %v548 = vld [vmem:[%s6 + $0x80] sm:$0xff]
      %v549 = vld [vmem:[%s6 + $0x88] sm:$0xff]
      %v550 = vld [vmem:[%s6 + $0x90] sm:$0xff]
      %v551 = vld [vmem:[%s6 + $0x98] sm:$0xff]
      %v552 = vld [vmem:[%s6 + $0xa0] sm:$0xff]
      %v553 = vld [vmem:[%s6 + $0xa8] sm:$0xff]
      %v554 = vld [vmem:[%s6 + $0xb0] sm:$0xff]
      %v555 = vld [vmem:[%s6 + $0xb8] sm:$0xff]
      %v556 = vld [vmem:[%s6 + $0xc0] sm:$0xff]
      %v557 = vld [vmem:[%s6 + $0xc8] sm:$0xff]
      %v558 = vld [vmem:[%s6 + $0xd0] sm:$0xff]
      %v559 = vld [vmem:[%s6 + $0xd8] sm:$0xff]
      %v560 = vld [vmem:[%s6 + $0xe0] sm:$0xff]
      %v561 = vld [vmem:[%s6 + $0xe8] sm:$0xff]
      %v562 = vld [vmem:[%s6 + $0xf0] sm:$0xff]
      %v563 = vld [vmem:[%s6 + $0xf8] sm:$0xff]
      %v564 = vld [vmem:[%s7] sm:$0x3]
      %v566 = vlaneseq
      %v567 = vshrl.u32 %v566, 7
      %v568 = vsub.s32 0, %v567
      %v569 = vrot.slane %v564, %v568
      %v570 = vlaneseq
      %v571 = vshrl.u32 %v570, 7
      %v572 = vsub.s32 1, %v571
      %v573 = vrot.slane %v564, %v572
      %576 = vmatprep.subr.mxu0 %v563
      %577 = vmatpush1.msra.mxu0 %v562
      %578 = vmatprep.subr.mxu0 %v561
      %579 = vmatpush1.msra.mxu0 %v560
      %580 = vmatprep.subr.mxu0 %v559
      %581 = vmatpush1.msra.mxu0 %v558
      %582 = vmatprep.subr.mxu0 %v557
      %583 = vmatpush1.msra.mxu0 %v556
      %584 = vmatprep.subr.mxu0 %v555
      %585 = vmatpush1.msra.mxu0 %v554
      %586 = vmatprep.subr.mxu0 %v553
      %587 = vmatpush1.msra.mxu0 %v552
      %588 = vmatprep.subr.mxu0 %v551
      %589 = vmatpush1.msra.mxu0 %v550
      %590 = vmatprep.subr.mxu0 %v549
      %591 = vmatpush1.msra.mxu0 %v548
      %592 = vmatprep.subr.mxu0 %v547
      %593 = vmatpush1.msra.mxu0 %v546
      %594 = vmatprep.subr.mxu0 %v545
      %595 = vmatpush1.msra.mxu0 %v544
      %596 = vmatprep.subr.mxu0 %v543
      %597 = vmatpush1.msra.mxu0 %v542
      %598 = vmatprep.subr.mxu0 %v541
      %599 = vmatpush1.msra.mxu0 %v540
      %600 = vmatprep.subr.mxu0 %v539
      %601 = vmatpush1.msra.mxu0 %v538
      %602 = vmatprep.subr.mxu0 %v537
      %603 = vmatpush1.msra.mxu0 %v536
      %604 = vmatprep.subr.mxu0 %v535
      %605 = vmatpush1.msra.mxu0 %v534
      %606 = vmatprep.subr.mxu0 %v533
      %607 = vmatpush1.msra.mxu0 %v532
      %608 = vmatprep.subr.mxu0 0.0
      %609 = vmatpush2.msra.mxu0 0.0
      %610 = vmatprep.subr.mxu0 0.0
      %611 = vmatpush2.msra.mxu0 0.0
      %612 = vmatprep.subr.mxu0 0.0
      %613 = vmatpush2.msra.mxu0 0.0
      %614 = vmatprep.subr.mxu0 0.0
      %615 = vmatpush2.msra.mxu0 0.0
      %616 = vmatprep.subr.mxu0 0.0
      %617 = vmatpush2.msra.mxu0 0.0
      %618 = vmatprep.subr.mxu0 0.0
      %619 = vmatpush2.msra.mxu0 0.0
      %620 = vmatprep.subr.mxu0 0.0
      %621 = vmatpush2.msra.mxu0 0.0
      %622 = vmatprep.subr.mxu0 0.0
      %623 = vmatpush2.msra.mxu0 0.0
      %624 = vmatprep.subr.mxu0 0.0
      %625 = vmatpush2.msra.mxu0 0.0
      %626 = vmatprep.subr.mxu0 0.0
      %627 = vmatpush2.msra.mxu0 0.0
      %628 = vmatprep.subr.mxu0 0.0
      %629 = vmatpush2.msra.mxu0 0.0
      %630 = vmatprep.subr.mxu0 0.0
      %631 = vmatpush2.msra.mxu0 0.0
      %632 = vmatprep.subr.mxu0 0.0
      %633 = vmatpush2.msra.mxu0 0.0
      %634 = vmatprep.subr.mxu0 0.0
      %635 = vmatpush2.msra.mxu0 0.0
      %636 = vmatprep.subr.mxu0 0.0
      %637 = vmatpush2.msra.mxu0 0.0
      %638 = vmatprep.subr.mxu0 0.0
      %639 = vmatpush2.msra.mxu0 0.0
      %640 = vmatprep.mubr.f32.mxu0 0.0
      %641 = vmatmul.mubr.f32.gmra.mxu0 %v530
      %v642 = vpop.f32.mrf.mxu0
      %v643 = vadd.f32 %v569, %v642
      %v644 = vpop.f32.mrf.mxu0
      %v645 = vadd.f32 %v573, %v644
      %646 = vmatprep.mubr.f32.mxu0 0.0
      %647 = vmatmul.mubr.f32.gmra.mxu0 %v531
      %v648 = vpop.f32.mrf.mxu0
      %v649 = vadd.f32 %v569, %v648
      %v650 = vpop.f32.mrf.mxu0
      %v651 = vadd.f32 %v573, %v650
      %652 = vdwg.mxu0
      %v653 = vmax.f32 %v643, 0.0
      %v654 = vmax.f32 %v645, 0.0
      %v655 = vmax.f32 %v649, 0.0
      %v656 = vmax.f32 %v651, 0.0
      %v657 = vld [vmem:[%s8] sm:$0xff]
      %v658 = vld [vmem:[%s8 + $0x8] sm:$0xff]
      %v659 = vld [vmem:[%s8 + $0x10] sm:$0xff]
      %v660 = vld [vmem:[%s8 + $0x18] sm:$0xff]
      %v661 = vld [vmem:[%s8 + $0x20] sm:$0xff]
      %v662 = vld [vmem:[%s8 + $0x28] sm:$0xff]
      %v663 = vld [vmem:[%s8 + $0x30] sm:$0xff]
      %v664 = vld [vmem:[%s8 + $0x38] sm:$0xff]
      %v665 = vld [vmem:[%s8 + $0x40] sm:$0xff]
      %v666 = vld [vmem:[%s8 + $0x48] sm:$0xff]
      %v667 = vld [vmem:[%s8 + $0x50] sm:$0xff]
      %v668 = vld [vmem:[%s8 + $0x58] sm:$0xff]
      %v669 = vld [vmem:[%s8 + $0x60] sm:$0xff]
      %v670 = vld [vmem:[%s8 + $0x68] sm:$0xff]
      %v671 = vld [vmem:[%s8 + $0x70] sm:$0xff]
      %v672 = vld [vmem:[%s8 + $0x78] sm:$0xff]
      %v673 = vld [vmem:[%s8 + $0x80] sm:$0xff]
      %v674 = vld [vmem:[%s8 + $0x88] sm:$0xff]
      %v675 = vld [vmem:[%s8 + $0x90] sm:$0xff]
      %v676 = vld [vmem:[%s8 + $0x98] sm:$0xff]
      %v677 = vld [vmem:[%s8 + $0xa0] sm:$0xff]
      %v678 = vld [vmem:[%s8 + $0xa8] sm:$0xff]
      %v679 = vld [vmem:[%s8 + $0xb0] sm:$0xff]
      %v680 = vld [vmem:[%s8 + $0xb8] sm:$0xff]
      %v681 = vld [vmem:[%s8 + $0xc0] sm:$0xff]
      %v682 = vld [vmem:[%s8 + $0xc8] sm:$0xff]
      %v683 = vld [vmem:[%s8 + $0xd0] sm:$0xff]
      %v684 = vld [vmem:[%s8 + $0xd8] sm:$0xff]
      %v685 = vld [vmem:[%s8 + $0xe0] sm:$0xff]
      %v686 = vld [vmem:[%s8 + $0xe8] sm:$0xff]
      %v687 = vld [vmem:[%s8 + $0xf0] sm:$0xff]
      %v688 = vld [vmem:[%s8 + $0xf8] sm:$0xff]
      %689 = vmatprep.subr.mxu0 0.0
      %690 = vmatpush1.msra.mxu0 %v672
      %691 = vmatprep.subr.mxu0 0.0
      %692 = vmatpush1.msra.mxu0 %v671
      %693 = vmatprep.subr.mxu0 0.0
      %694 = vmatpush1.msra.mxu0 %v670
      %695 = vmatprep.subr.mxu0 0.0
      %696 = vmatpush1.msra.mxu0 %v669
      %697 = vmatprep.subr.mxu0 0.0
      %698 = vmatpush1.msra.mxu0 %v668
      %699 = vmatprep.subr.mxu0 0.0
      %700 = vmatpush1.msra.mxu0 %v667
      %701 = vmatprep.subr.mxu0 0.0
      %702 = vmatpush1.msra.mxu0 %v666
      %703 = vmatprep.subr.mxu0 0.0
      %704 = vmatpush1.msra.mxu0 %v665
      %705 = vmatprep.subr.mxu0 0.0
      %706 = vmatpush1.msra.mxu0 %v664
      %707 = vmatprep.subr.mxu0 0.0
      %708 = vmatpush1.msra.mxu0 %v663
      %709 = vmatprep.subr.mxu0 0.0
      %710 = vmatpush1.msra.mxu0 %v662
      %711 = vmatprep.subr.mxu0 0.0
      %712 = vmatpush1.msra.mxu0 %v661
      %713 = vmatprep.subr.mxu0 0.0
      %714 = vmatpush1.msra.mxu0 %v660
      %715 = vmatprep.subr.mxu0 0.0
      %716 = vmatpush1.msra.mxu0 %v659
      %717 = vmatprep.subr.mxu0 0.0
      %718 = vmatpush1.msra.mxu0 %v658
      %719 = vmatprep.subr.mxu0 0.0
      %720 = vmatpush1.msra.mxu0 %v657
      %721 = vmatprep.subr.mxu0 0.0
      %722 = vmatpush2.msra.mxu0 %v688
      %723 = vmatprep.subr.mxu0 0.0
      %724 = vmatpush2.msra.mxu0 %v687
      %725 = vmatprep.subr.mxu0 0.0
      %726 = vmatpush2.msra.mxu0 %v686
      %727 = vmatprep.subr.mxu0 0.0
      %728 = vmatpush2.msra.mxu0 %v685
      %729 = vmatprep.subr.mxu0 0.0
      %730 = vmatpush2.msra.mxu0 %v684
      %731 = vmatprep.subr.mxu0 0.0
      %732 = vmatpush2.msra.mxu0 %v683
      %733 = vmatprep.subr.mxu0 0.0
      %734 = vmatpush2.msra.mxu0 %v682
      %735 = vmatprep.subr.mxu0 0.0
      %736 = vmatpush2.msra.mxu0 %v681
      %737 = vmatprep.subr.mxu0 0.0
      %738 = vmatpush2.msra.mxu0 %v680
      %739 = vmatprep.subr.mxu0 0.0
      %740 = vmatpush2.msra.mxu0 %v679
      %741 = vmatprep.subr.mxu0 0.0
      %742 = vmatpush2.msra.mxu0 %v678
      %743 = vmatprep.subr.mxu0 0.0
      %744 = vmatpush2.msra.mxu0 %v677
      %745 = vmatprep.subr.mxu0 0.0
      %746 = vmatpush2.msra.mxu0 %v676
      %747 = vmatprep.subr.mxu0 0.0
      %748 = vmatpush2.msra.mxu0 %v675
      %749 = vmatprep.subr.mxu0 0.0
      %750 = vmatpush2.msra.mxu0 %v674
      %751 = vmatprep.subr.mxu0 0.0
      %752 = vmatpush2.msra.mxu0 %v673
      %753 = vmatprep.mubr.f32.mxu0 %v654
      %754 = vmatmul.mubr.f32.gmra.mxu0 %v653
      %v755 = vpop.f32.mrf.mxu0
      %v756 = vadd.f32 0.0, %v755
      %v757 = vpop.f32.mrf.mxu0
      %758 = vmatprep.mubr.f32.mxu0 %v656
      %759 = vmatmul.mubr.f32.gmra.mxu0 %v655
      %v760 = vpop.f32.mrf.mxu0
      %v761 = vadd.f32 0.0, %v760
      %v762 = vpop.f32.mrf.mxu0
      %763 = vdwg.mxu0
      %v764 = vadd.f32 %v489, %v756
      %v765 = vadd.f32 %v490, %v761
      %v766 = vld [vmem:[%s9] sm:$0x1]
      %v768 = vlaneseq
      %v769 = vshrl.u32 %v768, 7
      %v770 = vsub.s32 0, %v769
      %v771 = vrot.slane %v766, %v770
      %v773 = vadd.f32 %v764, %v771
      %v774 = vadd.f32 %v765, %v771
      %775 = vst [vmem:[%s383] sm:$0xff] %v773
      %776 = vst [vmem:[%s383 + $0x8] sm:$0xff] %v774
      %s777 = smul.u32 2, %s21
      %p778 = scmp.lt.s32.totalorder %s777, 3
      %s779 = scalar_select %p778, %s777, 3
      %s780 = smul.addr %s779, 8
      %s781 = scalar_lea.vmem %s10, %s780
      // Predicated region
      $region61: #{encoder_forward.9} parent=59 // pred_check
        %p782 = pneg %p259
      $region62: #{encoder_forward.9} parent=59 // pred_check_branch
        %784 = sbr.rel (%p782) target = $region64
      $region63: #{encoder_forward.9} parent=59 // pred_region
        %s785 = smul.u32 2, %s21
      $region64: #{encoder_forward.9} parent=59 // pred_fallthru
        _
    $region60: #{encoder_forward.9} parent=5 // pred_fallthru
      _
    %p786 = scmp.le.s32.totalorder 2, %s16
    // Predicated region
    $region65: #{encoder_forward.9} parent=5 // pred_check
      %p787 = pneg %p786
    $region66: #{encoder_forward.9} parent=5 // pred_check_branch
      %789 = sbr.rel (%p787) target = $region68
    $region67: #{encoder_forward.9} parent=5 // pred_region
      %s790 = ssub.s32 %s16, 2
      // Predicated region
      $region69: #{encoder_forward.9} parent=67 // pred_check
        %p791 = pneg %p265
      $region70: #{encoder_forward.9} parent=67 // pred_check_branch
        %793 = sbr.rel (%p791) target = $region72
      $region71: #{encoder_forward.9} parent=67 // pred_region
        %s794 = smul.u32 2, %s22
        %p795 = scmp.lt.s32.totalorder %s794, 3
        %s796 = scalar_select %p795, %s794, 3
        %s797 = smul.addr %s796, 8
        %s798 = scalar_lea.vmem %s10, %s797
      $region72: #{encoder_forward.9} parent=67 // pred_fallthru
        _
    $region68: #{encoder_forward.9} parent=5 // pred_fallthru
      _
  $region6: #{encoder_forward.9} parent=0 // loop_footer
    %s20 = sadd.s32 1, %s16
  $region7: #{encoder_forward.9} parent=0 // loop_footer_branch
    %15 = sbr.rel target = $region3
  $region8: #{encoder_forward.9} parent=0 // loop_exit
    _

// kernel: encoder_forward.8
$region0: #{encoder_forward.8}
  #allocation0 [shape = 'u32[]', space=smem, size = 0x4, offset = 0x4, fixed_abs, tag = 'smem constant byte address 0x4 - core index']
  #allocation1 [shape = 'u32[144,128]{1,0:T(1,128)}', space=vmem, size = 0x12000, scoped, tag = 'internal scratch']
  %s0 = inlined_call_operand.vmem [shape: f32[2,16,384], index: 0, kind: input, shape index: {}]
  %s1 = inlined_call_operand.vmem [shape: f32[2,16,16], index: 1, kind: input, shape index: {}]
  %s2 = inlined_call_operand.vmem [shape: f32[2,16,128], index: 2, kind: output, shape index: {}]
  %s3 = sld [smem:[#allocation0]]
  $region41: #{encoder_forward.8} parent=0
    _
  %s5 = ssub.s32 1, %s3
  %s6 = scalar_select 0, %s5, %s3
  loop: start=0, step=1, limit=4
  $region2: #{encoder_forward.8} parent=0 // loop_pre_header
    _
  $region3: #{encoder_forward.8} parent=0 // loop_header
    %s8 = sphi 0, %s12
    %p9 = scmp.ge.s32.totalorder %s8, 4
    %s18 = sphi 0, %s20
    %s21 = sphi 0, %s18
    %s22 = sphi 0, %s21
    %s38 = sphi 0, %s22
    %s44 = sphi 0, %s46
    %s47 = sphi 0, %s44
    %s48 = sphi 0, %s47
    %s64 = sphi 0, %s48
    %s70 = sphi 0, %s72
    %s73 = sphi 0, %s70
    %s74 = sphi 0, %s73
    %s90 = sphi 0, %s74
  $region4: #{encoder_forward.8} parent=0 // loop_header_branch
    %11 = sbr.rel (%p9) target = $region8
  $region5: #{encoder_forward.8} parent=0 // loop_body
    %s13 = ssub.s32 %s8, 1
    %s14 = ssub.s32 %s8, 2
    %s15 = sadd.s32 %s8, 1
    %s16 = ssub.s32 %s8, %s15
    %p17 = scmp.eq.s32.totalorder %s16, 0
    %s19 = sadd.s32 %s18, 1
    %s20 = scalar_select %p17, %s18, %s19
    %p23 = pneg %p17
    %p24 = scmp.eq.s32.totalorder %s8, 1
    %p25 = por %p23, %p24
    %p26 = scmp.ne.s32.totalorder %s18, %s21
    %p27 = scmp.eq.s32.totalorder %s8, 0
    %p28 = por %p26, %p27
    %p29 = scmp.ne.s32.totalorder %s18, %s21
    %p30 = scmp.eq.s32.totalorder %s13, 1
    %p31 = por %p29, %p30
    %p32 = scmp.ne.s32.totalorder %s21, %s22
    %p33 = scmp.eq.s32.totalorder %s13, 0
    %p34 = por %p32, %p33
    %p35 = scmp.ne.s32.totalorder %s21, %s22
    %p36 = scmp.eq.s32.totalorder %s14, 1
    %p37 = por %p35, %p36
    %p39 = scmp.ne.s32.totalorder %s22, %s38
    %p40 = scmp.eq.s32.totalorder %s14, 0
    %p41 = por %p39, %p40
    %s42 = ssub.s32 %s8, %s15
    %p43 = scmp.eq.s32.totalorder %s42, 0
    %s45 = sadd.s32 %s44, 1
    %s46 = scalar_select %p43, %s44, %s45
    %p49 = pneg %p43
    %p50 = scmp.eq.s32.totalorder %s8, 1
    %p51 = por %p49, %p50
    %p52 = scmp.ne.s32.totalorder %s44, %s47
    %p53 = scmp.eq.s32.totalorder %s8, 0
    %p54 = por %p52, %p53
    %p55 = scmp.ne.s32.totalorder %s44, %s47
    %p56 = scmp.eq.s32.totalorder %s13, 1
    %p57 = por %p55, %p56
    %p58 = scmp.ne.s32.totalorder %s47, %s48
    %p59 = scmp.eq.s32.totalorder %s13, 0
    %p60 = por %p58, %p59
    %p61 = scmp.ne.s32.totalorder %s47, %s48
    %p62 = scmp.eq.s32.totalorder %s14, 1
    %p63 = por %p61, %p62
    %p65 = scmp.ne.s32.totalorder %s48, %s64
    %p66 = scmp.eq.s32.totalorder %s14, 0
    %p67 = por %p65, %p66
    %s68 = ssub.s32 %s8, %s15
    %p69 = scmp.eq.s32.totalorder %s68, 0
    %s71 = sadd.s32 %s70, 1
    %s72 = scalar_select %p69, %s70, %s71
    %p75 = pneg %p69
    %p76 = scmp.eq.s32.totalorder %s8, 1
    %p77 = por %p75, %p76
    %p78 = scmp.ne.s32.totalorder %s70, %s73
    %p79 = scmp.eq.s32.totalorder %s8, 0
    %p80 = por %p78, %p79
    %p81 = scmp.ne.s32.totalorder %s70, %s73
    %p82 = scmp.eq.s32.totalorder %s13, 1
    %p83 = por %p81, %p82
    %p84 = scmp.ne.s32.totalorder %s73, %s74
    %p85 = scmp.eq.s32.totalorder %s13, 0
    %p86 = por %p84, %p85
    %p87 = scmp.ne.s32.totalorder %s73, %s74
    %p88 = scmp.eq.s32.totalorder %s14, 1
    %p89 = por %p87, %p88
    %p91 = scmp.ne.s32.totalorder %s74, %s90
    %p92 = scmp.eq.s32.totalorder %s14, 0
    %p93 = por %p91, %p92
    %p94 = scmp.le.s32.totalorder 1, %s8
    %p95 = scmp.lt.s32.totalorder %s8, 3
    %p96 = pnand %p94, %p95
    %p97 = pneg %p96
    // Predicated region
    $region9: #{encoder_forward.8} parent=5 // pred_check
      _
    $region10: #{encoder_forward.8} parent=5 // pred_check_branch
      %99 = sbr.rel (%p96) target = $region12
    $region11: #{encoder_forward.8} parent=5 // pred_region
      %s100 = ssub.s32 %s8, 1
    $region12: #{encoder_forward.8} parent=5 // pred_fallthru
      _
    %p101 = scmp.lt.s32.totalorder %s8, 2
    // Predicated region
    $region13: #{encoder_forward.8} parent=5 // pred_check
      %p102 = pneg %p101
    $region14: #{encoder_forward.8} parent=5 // pred_check_branch
      %104 = sbr.rel (%p102) target = $region16
    $region15: #{encoder_forward.8} parent=5 // pred_region
      // Predicated region
      $region17: #{encoder_forward.8} parent=15 // pred_check
        %p105 = pneg %p28
      $region18: #{encoder_forward.8} parent=15 // pred_check_branch
        %107 = sbr.rel (%p105) target = $region20
      $region19: #{encoder_forward.8} parent=15 // pred_region
        %p108 = scmp.lt.s32.totalorder %s8, 1
        %s109 = scalar_select %p108, %s8, 1
        %s110 = smul.addr %s109, 6
        %s111 = smul.addr %s110, 8
        %s112 = scalar_lea.vmem %s0, %s111
      $region20: #{encoder_forward.8} parent=15 // pred_fallthru
        _
      // Predicated region
      $region21: #{encoder_forward.8} parent=15 // pred_check
        %p113 = pneg %p54
      $region22: #{encoder_forward.8} parent=15 // pred_check_branch
        %115 = sbr.rel (%p113) target = $region24
      $region23: #{encoder_forward.8} parent=15 // pred_region
        %p116 = scmp.lt.s32.totalorder %s8, 1
        %s117 = scalar_select %p116, %s8, 1
        %s118 = smul.addr %s117, 2
        %s119 = smul.addr %s118, 8
        %s120 = scalar_lea.vmem %s1, %s119
      $region24: #{encoder_forward.8} parent=15 // pred_fallthru
        _
    $region16: #{encoder_forward.8} parent=5 // pred_fallthru
      _
    %p121 = scmp.le.s32.totalorder 1, %s8
    %p122 = scmp.lt.s32.totalorder %s8, 3
    %p123 = pnand %p121, %p122
    %p124 = pneg %p123
    // Predicated region
    $region25: #{encoder_forward.8} parent=5 // pred_check
      _
    $region26: #{encoder_forward.8} parent=5 // pred_check_branch
      %126 = sbr.rel (%p123) target = $region28
    $region27: #{encoder_forward.8} parent=5 // pred_region
      %s127 = ssub.s32 %s8, 1
      %p128 = scmp.lt.s32.totalorder %s13, 1
      %s129 = scalar_select %p128, %s13, 1
      %s130 = smul.addr %s129, 6
      %s131 = smul.addr %s130, 8
      %s132 = scalar_lea.vmem %s0, %s131
      %p133 = pneg %p34
      %p134 = pneg %p31
      %p135 = scmp.lt.s32.totalorder %s13, 1
      %s136 = scalar_select %p135, %s13, 1
      %s137 = smul.addr %s136, 2
      %s138 = smul.addr %s137, 8
      %s139 = scalar_lea.vmem %s1, %s138
      %p140 = pneg %p60
      %p141 = pneg %p57
      %p142 = pneg %p86
      %p143 = pneg %p83
      %p144 = scmp.lt.s32.totalorder %s13, 1
      %s145 = scalar_select %p144, %s13, 1
      %s146 = smul.addr %s145, 2
      %s147 = smul.addr %s146, 8
      %s148 = scalar_lea.vmem %s2, %s147
      %p149 = scmp.lt.s32.totalorder %s13, 1
      %s150 = scalar_select %p149, %s13, 1
      %s151 = smul.addr %s150, 6
      %s152 = smul.addr %s151, 8
      %s153 = scalar_lea.vmem %s0, %s152
      %p154 = scmp.lt.s32.totalorder %s13, 1
      %s155 = scalar_select %p154, %s13, 1
      %s156 = smul.addr %s155, 2
      %s157 = smul.addr %s156, 8
      %s158 = scalar_lea.vmem %s1, %s157
      %p159 = scmp.lt.s32.totalorder %s13, 1
      %s160 = scalar_select %p159, %s13, 1
      %s161 = smul.addr %s160, 2
      %s162 = smul.addr %s161, 8
      %s163 = scalar_lea.vmem %s2, %s162
      %v164 = vld [vmem:[%s153] sm:$0xff]
      %v165 = vld [vmem:[%s153 + $0x8] sm:$0xff]
      %v166 = vld [vmem:[%s153 + $0x10] sm:$0xff]
      %v167 = vld [vmem:[%s153 + $0x18] sm:$0xff]
      %v168 = vld [vmem:[%s153 + $0x20] sm:$0xff]
      %v169 = vld [vmem:[%s153 + $0x28] sm:$0xff]
      %v170 = vld [vmem:[%s158] sm:$0xff]
      %v171 = vld [vmem:[%s158 + $0x8] sm:$0xff]
      %vm172 = vcmask 261120
      %v174 = vsel %vm172, %v164, 0
      %v177 = vsel %vm172, %v167, 0
      %v180 = vsel %vm172, %v165, 0
      %v183 = vsel %vm172, %v168, 0
      %185 = vmatprep.subr.mxu0 0.0
      %186 = vmatpush1.xpose.msra.mxu0 0.0
      %187 = vmatprep.subr.mxu0 0.0
      %188 = vmatpush1.xpose.msra.mxu0 0.0
      %189 = vmatprep.subr.mxu0 0.0
      %190 = vmatpush1.xpose.msra.mxu0 0.0
      %191 = vmatprep.subr.mxu0 0.0
      %192 = vmatpush1.xpose.msra.mxu0 0.0
      %193 = vmatprep.subr.mxu0 0.0
      %194 = vmatpush1.xpose.msra.mxu0 0.0
      %195 = vmatprep.subr.mxu0 0.0
      %196 = vmatpush1.xpose.msra.mxu0 0.0
      %197 = vmatprep.subr.mxu0 0.0
      %198 = vmatpush1.xpose.msra.mxu0 0.0
      %199 = vmatprep.subr.mxu0 0.0
      %200 = vmatpush1.xpose.msra.mxu0 0.0
      %201 = vmatprep.subr.mxu0 0.0
      %202 = vmatpush1.xpose.msra.mxu0 0.0
      %203 = vmatprep.subr.mxu0 0.0
      %204 = vmatpush1.xpose.msra.mxu0 0.0
      %205 = vmatprep.subr.mxu0 0.0
      %206 = vmatpush1.xpose.msra.mxu0 0.0
      %207 = vmatprep.subr.mxu0 0.0
      %208 = vmatpush1.xpose.msra.mxu0 0.0
      %209 = vmatprep.subr.mxu0 0.0
      %210 = vmatpush1.xpose.msra.mxu0 0.0
      %211 = vmatprep.subr.mxu0 0.0
      %212 = vmatpush1.xpose.msra.mxu0 0.0
      %213 = vmatprep.subr.mxu0 0.0
      %214 = vmatpush1.xpose.msra.mxu0 %v183
      %215 = vmatprep.subr.mxu0 0.0
      %216 = vmatpush1.xpose.msra.mxu0 %v180
      %217 = vmatprep.subr.mxu0 0.0
      %218 = vmatpush2.xpose.msra.mxu0 0.0
      %219 = vmatprep.subr.mxu0 0.0
      %220 = vmatpush2.xpose.msra.mxu0 0.0
      %221 = vmatprep.subr.mxu0 0.0
      %222 = vmatpush2.xpose.msra.mxu0 0.0
      %223 = vmatprep.subr.mxu0 0.0
      %224 = vmatpush2.xpose.msra.mxu0 0.0
      %225 = vmatprep.subr.mxu0 0.0
      %226 = vmatpush2.xpose.msra.mxu0 0.0
      %227 = vmatprep.subr.mxu0 0.0
      %228 = vmatpush2.xpose.msra.mxu0 0.0
      %229 = vmatprep.subr.mxu0 0.0
      %230 = vmatpush2.xpose.msra.mxu0 0.0
      %231 = vmatprep.subr.mxu0 0.0
      %232 = vmatpush2.xpose.msra.mxu0 0.0
      %233 = vmatprep.subr.mxu0 0.0
      %234 = vmatpush2.xpose.msra.mxu0 0.0
      %235 = vmatprep.subr.mxu0 0.0
      %236 = vmatpush2.xpose.msra.mxu0 0.0
      %237 = vmatprep.subr.mxu0 0.0
      %238 = vmatpush2.xpose.msra.mxu0 0.0
      %239 = vmatprep.subr.mxu0 0.0
      %240 = vmatpush2.xpose.msra.mxu0 0.0
      %241 = vmatprep.subr.mxu0 0.0
      %242 = vmatpush2.xpose.msra.mxu0 0.0
      %243 = vmatprep.subr.mxu0 0.0
      %244 = vmatpush2.xpose.msra.mxu0 0.0
      %245 = vmatprep.subr.mxu0 0.0
      %246 = vmatpush2.xpose.msra.mxu0 0.0
      %247 = vmatprep.subr.mxu0 0.0
      %248 = vmatpush2.xpose.msra.mxu0 0.0
      %249 = vmatprep.mubr.f32.mxu0 0.0
      %250 = vmatmul.mubr.f32.gmra.mxu0 %v174
      %v251 = vpop.f32.mrf.mxu0
      %v252 = vadd.f32 0.0, %v251
      %v253 = vpop.f32.mrf.mxu0
      %254 = vmatprep.mubr.f32.mxu0 0.0
      %255 = vmatmul.mubr.f32.gmra.mxu0 %v177
      %v256 = vpop.f32.mrf.mxu0
      %v257 = vadd.f32 0.0, %v256
      %v258 = vpop.f32.mrf.mxu0
      %259 = vdwg.mxu0
      %v260 = vmul.f32 %v252, 0.17677669
      %v261 = vmul.f32 %v257, 0.17677669
      %v262 = vadd.f32 %v260, %v170
      %v263 = vadd.f32 %v261, %v171
      %vm264 = vcmask 130048
      %v265 = vsel %vm264, %v262, -inf
      %266 = vmax.xlane.f32.xlu0 %v265
      %v267 = vpop.xlane.xlu0 %266
      %v268 = vsel %vm264, %v263, -inf
      %269 = vmax.xlane.f32.xlu0 %v268
      %v270 = vpop.xlane.xlu0 %269
      %v271 = vsub.f32 %v262, %v267
      %v272 = vsub.f32 %v263, %v270
      %v273 = vmul.f32 %v271, 1.442695
      %v274 = vpow.pop %v273
      %v275 = vmul.f32 %v272, 1.442695
      %v276 = vpow.pop %v275
      %v277 = vsel %vm264, %v274, 0.0
      %278 = vadd.xlane.f32.xlu0 %v277
      %v279 = vpop.xlane.xlu0 %278
      %v280 = vsel %vm264, %v276, 0.0
      %281 = vadd.xlane.f32.xlu0 %v280
      %v282 = vpop.xlane.xlu0 %281
      %v283 = vrcp.pop %v279
      %v284 = vrcp.pop %v282
      %v285 = vmul.f32 %v274, %v283
      %v286 = vmul.f32 %v276, %v284
      %v288 = vsel %vm264, %v285, 0
      %v291 = vsel %vm264, %v286, 0
      %293 = vmatprep.subr.mxu0 0.0
      %294 = vmatpush1.msra.mxu0 0.0
      %295 = vmatprep.subr.mxu0 0.0
      %296 = vmatpush1.msra.mxu0 0.0
      %297 = vmatprep.subr.mxu0 0.0
      %298 = vmatpush1.msra.mxu0 0.0
      %299 = vmatprep.subr.mxu0 0.0
      %300 = vmatpush1.msra.mxu0 0.0
      %301 = vmatprep.subr.mxu0 0.0
      %302 = vmatpush1.msra.mxu0 0.0
      %303 = vmatprep.subr.mxu0 0.0
      %304 = vmatpush1.msra.mxu0 0.0
      %305 = vmatprep.subr.mxu0 0.0
      %306 = vmatpush1.msra.mxu0 0.0
      %307 = vmatprep.subr.mxu0 0.0
      %308 = vmatpush1.msra.mxu0 0.0
      %309 = vmatprep.subr.mxu0 0.0
      %310 = vmatpush1.msra.mxu0 0.0
      %311 = vmatprep.subr.mxu0 0.0
      %312 = vmatpush1.msra.mxu0 0.0
      %313 = vmatprep.subr.mxu0 0.0
      %314 = vmatpush1.msra.mxu0 0.0
      %315 = vmatprep.subr.mxu0 0.0
      %316 = vmatpush1.msra.mxu0 0.0
      %317 = vmatprep.subr.mxu0 0.0
      %318 = vmatpush1.msra.mxu0 0.0
      %319 = vmatprep.subr.mxu0 0.0
      %320 = vmatpush1.msra.mxu0 0.0
      %321 = vmatprep.subr.mxu0 0.0
      %322 = vmatpush1.msra.mxu0 %v169
      %323 = vmatprep.subr.mxu0 0.0
      %324 = vmatpush1.msra.mxu0 %v166
      %325 = vmatprep.subr.mxu0 0.0
      %326 = vmatpush2.msra.mxu0 0.0
      %327 = vmatprep.subr.mxu0 0.0
      %328 = vmatpush2.msra.mxu0 0.0
      %329 = vmatprep.subr.mxu0 0.0
      %330 = vmatpush2.msra.mxu0 0.0
      %331 = vmatprep.subr.mxu0 0.0
      %332 = vmatpush2.msra.mxu0 0.0
      %333 = vmatprep.subr.mxu0 0.0
      %334 = vmatpush2.msra.mxu0 0.0
      %335 = vmatprep.subr.mxu0 0.0
      %336 = vmatpush2.msra.mxu0 0.0
      %337 = vmatprep.subr.mxu0 0.0
      %338 = vmatpush2.msra.mxu0 0.0
      %339 = vmatprep.subr.mxu0 0.0
      %340 = vmatpush2.msra.mxu0 0.0
      %341 = vmatprep.subr.mxu0 0.0
      %342 = vmatpush2.msra.mxu0 0.0
      %343 = vmatprep.subr.mxu0 0.0
      %344 = vmatpush2.msra.mxu0 0.0
      %345 = vmatprep.subr.mxu0 0.0
      %346 = vmatpush2.msra.mxu0 0.0
      %347 = vmatprep.subr.mxu0 0.0
      %348 = vmatpush2.msra.mxu0 0.0
      %349 = vmatprep.subr.mxu0 0.0
      %350 = vmatpush2.msra.mxu0 0.0
      %351 = vmatprep.subr.mxu0 0.0
      %352 = vmatpush2.msra.mxu0 0.0
      %353 = vmatprep.subr.mxu0 0.0
      %354 = vmatpush2.msra.mxu0 0.0
      %355 = vmatprep.subr.mxu0 0.0
      %356 = vmatpush2.msra.mxu0 0.0
      %357 = vmatprep.mubr.f32.mxu0 0.0
      %358 = vmatmul.mubr.f32.gmra.mxu0 %v288
      %v359 = vpop.f32.mrf.mxu0
      %v360 = vadd.f32 0.0, %v359
      %v361 = vpop.f32.mrf.mxu0
      %362 = vmatprep.mubr.f32.mxu0 0.0
      %363 = vmatmul.mubr.f32.gmra.mxu0 %v291
      %v364 = vpop.f32.mrf.mxu0
      %v365 = vadd.f32 0.0, %v364
      %v366 = vpop.f32.mrf.mxu0
      %367 = vdwg.mxu0
      %368 = vrot.lane.b32.xlu0 %v164, 96
      %v369 = vpop.permute.xlu0 %368
      %370 = vrot.lane.b32.xlu0 %v167, 96
      %v371 = vpop.permute.xlu0 %370
      %372 = vrot.lane.b32.xlu0 %v165, 96
      %v373 = vpop.permute.xlu0 %372
      %374 = vrot.lane.b32.xlu0 %v168, 96
      %v375 = vpop.permute.xlu0 %374
      %v376 = vsel %vm172, %v369, 0
      %v378 = vsel %vm172, %v371, 0
      %v380 = vsel %vm172, %v373, 0
      %v382 = vsel %vm172, %v375, 0
      %384 = vmatprep.subr.mxu0 0.0
      %385 = vmatpush1.xpose.msra.mxu0 0.0
      %386 = vmatprep.subr.mxu0 0.0
      %387 = vmatpush1.xpose.msra.mxu0 0.0
      %388 = vmatprep.subr.mxu0 0.0
      %389 = vmatpush1.xpose.msra.mxu0 0.0
      %390 = vmatprep.subr.mxu0 0.0
      %391 = vmatpush1.xpose.msra.mxu0 0.0
      %392 = vmatprep.subr.mxu0 0.0
      %393 = vmatpush1.xpose.msra.mxu0 0.0
      %394 = vmatprep.subr.mxu0 0.0
      %395 = vmatpush1.xpose.msra.mxu0 0.0
      %396 = vmatprep.subr.mxu0 0.0
      %397 = vmatpush1.xpose.msra.mxu0 0.0
      %398 = vmatprep.subr.mxu0 0.0
      %399 = vmatpush1.xpose.msra.mxu0 0.0
      %400 = vmatprep.subr.mxu0 0.0
      %401 = vmatpush1.xpose.msra.mxu0 0.0
      %402 = vmatprep.subr.mxu0 0.0
      %403 = vmatpush1.xpose.msra.mxu0 0.0
      %404 = vmatprep.subr.mxu0 0.0
      %405 = vmatpush1.xpose.msra.mxu0 0.0
      %406 = vmatprep.subr.mxu0 0.0
      %407 = vmatpush1.xpose.msra.mxu0 0.0
      %408 = vmatprep.subr.mxu0 0.0
      %409 = vmatpush1.xpose.msra.mxu0 0.0
      %410 = vmatprep.subr.mxu0 0.0
      %411 = vmatpush1.xpose.msra.mxu0 0.0
      %412 = vmatprep.subr.mxu0 0.0
      %413 = vmatpush1.xpose.msra.mxu0 %v382
      %414 = vmatprep.subr.mxu0 0.0
      %415 = vmatpush1.xpose.msra.mxu0 %v380
      %416 = vmatprep.subr.mxu0 0.0
      %417 = vmatpush2.xpose.msra.mxu0 0.0
      %418 = vmatprep.subr.mxu0 0.0
      %419 = vmatpush2.xpose.msra.mxu0 0.0
      %420 = vmatprep.subr.mxu0 0.0
      %421 = vmatpush2.xpose.msra.mxu0 0.0
      %422 = vmatprep.subr.mxu0 0.0
      %423 = vmatpush2.xpose.msra.mxu0 0.0
      %424 = vmatprep.subr.mxu0 0.0
      %425 = vmatpush2.xpose.msra.mxu0 0.0
      %426 = vmatprep.subr.mxu0 0.0
      %427 = vmatpush2.xpose.msra.mxu0 0.0
      %428 = vmatprep.subr.mxu0 0.0
      %429 = vmatpush2.xpose.msra.mxu0 0.0
      %430 = vmatprep.subr.mxu0 0.0
      %431 = vmatpush2.xpose.msra.mxu0 0.0
      %432 = vmatprep.subr.mxu0 0.0
      %433 = vmatpush2.xpose.msra.mxu0 0.0
      %434 = vmatprep.subr.mxu0 0.0
      %435 = vmatpush2.xpose.msra.mxu0 0.0
      %436 = vmatprep.subr.mxu0 0.0
      %437 = vmatpush2.xpose.msra.mxu0 0.0
      %438 = vmatprep.subr.mxu0 0.0
      %439 = vmatpush2.xpose.msra.mxu0 0.0
      %440 = vmatprep.subr.mxu0 0.0
      %441 = vmatpush2.xpose.msra.mxu0 0.0
      %442 = vmatprep.subr.mxu0 0.0
      %443 = vmatpush2.xpose.msra.mxu0 0.0
      %444 = vmatprep.subr.mxu0 0.0
      %445 = vmatpush2.xpose.msra.mxu0 0.0
      %446 = vmatprep.subr.mxu0 0.0
      %447 = vmatpush2.xpose.msra.mxu0 0.0
      %448 = vmatprep.mubr.f32.mxu0 0.0
      %449 = vmatmul.mubr.f32.gmra.mxu0 %v376
      %v450 = vpop.f32.mrf.mxu0
      %v451 = vadd.f32 0.0, %v450
      %v452 = vpop.f32.mrf.mxu0
      %453 = vmatprep.mubr.f32.mxu0 0.0
      %454 = vmatmul.mubr.f32.gmra.mxu0 %v378
      %v455 = vpop.f32.mrf.mxu0
      %v456 = vadd.f32 0.0, %v455
      %v457 = vpop.f32.mrf.mxu0
      %458 = vdwg.mxu0
      %v459 = vmul.f32 %v451, 0.17677669
      %v460 = vmul.f32 %v456, 0.17677669
      %v461 = vadd.f32 %v459, %v170
      %v462 = vadd.f32 %v460, %v171
      %v463 = vsel %vm264, %v461, -inf
      %464 = vmax.xlane.f32.xlu0 %v463
      %v465 = vpop.xlane.xlu0 %464
      %v466 = vsel %vm264, %v462, -inf
      %467 = vmax.xlane.f32.xlu0 %v466
      %v468 = vpop.xlane.xlu0 %467
      %v469 = vsub.f32 %v461, %v465
      %v470 = vsub.f32 %v462, %v468
      %v471 = vmul.f32 %v469, 1.442695
      %v472 = vpow.pop %v471
      %v473 = vmul.f32 %v470, 1.442695
      %v474 = vpow.pop %v473
      %v475 = vsel %vm264, %v472, 0.0
      %476 = vadd.xlane.f32.xlu0 %v475
      %v477 = vpop.xlane.xlu0 %476
      %v478 = vsel %vm264, %v474, 0.0
      %479 = vadd.xlane.f32.xlu0 %v478
      %v480 = vpop.xlane.xlu0 %479
      %v481 = vrcp.pop %v477
      %v482 = vrcp.pop %v480
      %v483 = vmul.f32 %v472, %v481
      %v484 = vmul.f32 %v474, %v482
      %487 = vrot.lane.b32.xlu0 %v166, 96
      %v488 = vpop.permute.xlu0 %487
      %489 = vrot.lane.b32.xlu0 %v169, 96
      %v490 = vpop.permute.xlu0 %489
      %v494 = vsel %vm264, %v483, 0
      %v497 = vsel %vm264, %v484, 0
      %499 = vmatprep.subr.mxu0 0.0
      %500 = vmatpush1.msra.mxu0 0.0
      %501 = vmatprep.subr.mxu0 0.0
      %502 = vmatpush1.msra.mxu0 0.0
      %503 = vmatprep.subr.mxu0 0.0
      %504 = vmatpush1.msra.mxu0 0.0
      %505 = vmatprep.subr.mxu0 0.0
      %506 = vmatpush1.msra.mxu0 0.0
      %507 = vmatprep.subr.mxu0 0.0
      %508 = vmatpush1.msra.mxu0 0.0
      %509 = vmatprep.subr.mxu0 0.0
      %510 = vmatpush1.msra.mxu0 0.0
      %511 = vmatprep.subr.mxu0 0.0
      %512 = vmatpush1.msra.mxu0 0.0
      %513 = vmatprep.subr.mxu0 0.0
      %514 = vmatpush1.msra.mxu0 0.0
      %515 = vmatprep.subr.mxu0 0.0
      %516 = vmatpush1.msra.mxu0 0.0
      %517 = vmatprep.subr.mxu0 0.0
      %518 = vmatpush1.msra.mxu0 0.0
      %519 = vmatprep.subr.mxu0 0.0
      %520 = vmatpush1.msra.mxu0 0.0
      %521 = vmatprep.subr.mxu0 0.0
      %522 = vmatpush1.msra.mxu0 0.0
      %523 = vmatprep.subr.mxu0 0.0
      %524 = vmatpush1.msra.mxu0 0.0
      %525 = vmatprep.subr.mxu0 0.0
      %526 = vmatpush1.msra.mxu0 0.0
      %527 = vmatprep.subr.mxu0 0.0
      %528 = vmatpush1.msra.mxu0 %v490
      %529 = vmatprep.subr.mxu0 0.0
      %530 = vmatpush1.msra.mxu0 %v488
      %531 = vmatprep.subr.mxu0 0.0
      %532 = vmatpush2.msra.mxu0 0.0
      %533 = vmatprep.subr.mxu0 0.0
      %534 = vmatpush2.msra.mxu0 0.0
      %535 = vmatprep.subr.mxu0 0.0
      %536 = vmatpush2.msra.mxu0 0.0
      %537 = vmatprep.subr.mxu0 0.0
      %538 = vmatpush2.msra.mxu0 0.0
      %539 = vmatprep.subr.mxu0 0.0
      %540 = vmatpush2.msra.mxu0 0.0
      %541 = vmatprep.subr.mxu0 0.0
      %542 = vmatpush2.msra.mxu0 0.0
      %543 = vmatprep.subr.mxu0 0.0
      %544 = vmatpush2.msra.mxu0 0.0
      %545 = vmatprep.subr.mxu0 0.0
      %546 = vmatpush2.msra.mxu0 0.0
      %547 = vmatprep.subr.mxu0 0.0
      %548 = vmatpush2.msra.mxu0 0.0
      %549 = vmatprep.subr.mxu0 0.0
      %550 = vmatpush2.msra.mxu0 0.0
      %551 = vmatprep.subr.mxu0 0.0
      %552 = vmatpush2.msra.mxu0 0.0
      %553 = vmatprep.subr.mxu0 0.0
      %554 = vmatpush2.msra.mxu0 0.0
      %555 = vmatprep.subr.mxu0 0.0
      %556 = vmatpush2.msra.mxu0 0.0
      %557 = vmatprep.subr.mxu0 0.0
      %558 = vmatpush2.msra.mxu0 0.0
      %559 = vmatprep.subr.mxu0 0.0
      %560 = vmatpush2.msra.mxu0 0.0
      %561 = vmatprep.subr.mxu0 0.0
      %562 = vmatpush2.msra.mxu0 0.0
      %563 = vmatprep.mubr.f32.mxu0 0.0
      %564 = vmatmul.mubr.f32.gmra.mxu0 %v494
      %v565 = vpop.f32.mrf.mxu0
      %v566 = vadd.f32 0.0, %v565
      %v567 = vpop.f32.mrf.mxu0
      %568 = vmatprep.mubr.f32.mxu0 0.0
      %569 = vmatmul.mubr.f32.gmra.mxu0 %v497
      %v570 = vpop.f32.mrf.mxu0
      %v571 = vadd.f32 0.0, %v570
      %v572 = vpop.f32.mrf.mxu0
      %573 = vdwg.mxu0
      %574 = vrot.lane.b32.xlu0 %v164, 64
      %v575 = vpop.permute.xlu0 %574
      %576 = vrot.lane.b32.xlu0 %v167, 64
      %v577 = vpop.permute.xlu0 %576
      %578 = vrot.lane.b32.xlu0 %v165, 64
      %v579 = vpop.permute.xlu0 %578
      %580 = vrot.lane.b32.xlu0 %v168, 64
      %v581 = vpop.permute.xlu0 %580
      %v582 = vsel %vm172, %v575, 0
      %v584 = vsel %vm172, %v577, 0
      %v586 = vsel %vm172, %v579, 0
      %v588 = vsel %vm172, %v581, 0
      %590 = vmatprep.subr.mxu0 0.0
      %591 = vmatpush1.xpose.msra.mxu0 0.0
      %592 = vmatprep.subr.mxu0 0.0
      %593 = vmatpush1.xpose.msra.mxu0 0.0
      %594 = vmatprep.subr.mxu0 0.0
      %595 = vmatpush1.xpose.msra.mxu0 0.0
      %596 = vmatprep.subr.mxu0 0.0
      %597 = vmatpush1.xpose.msra.mxu0 0.0
      %598 = vmatprep.subr.mxu0 0.0
      %599 = vmatpush1.xpose.msra.mxu0 0.0
      %600 = vmatprep.subr.mxu0 0.0
      %601 = vmatpush1.xpose.msra.mxu0 0.0
      %602 = vmatprep.subr.mxu0 0.0
      %603 = vmatpush1.xpose.msra.mxu0 0.0
      %604 = vmatprep.subr.mxu0 0.0
      %605 = vmatpush1.xpose.msra.mxu0 0.0
      %606 = vmatprep.subr.mxu0 0.0
      %607 = vmatpush1.xpose.msra.mxu0 0.0
      %608 = vmatprep.subr.mxu0 0.0
      %609 = vmatpush1.xpose.msra.mxu0 0.0
      %610 = vmatprep.subr.mxu0 0.0
      %611 = vmatpush1.xpose.msra.mxu0 0.0
      %612 = vmatprep.subr.mxu0 0.0
      %613 = vmatpush1.xpose.msra.mxu0 0.0
      %614 = vmatprep.subr.mxu0 0.0
      %615 = vmatpush1.xpose.msra.mxu0 0.0
      %616 = vmatprep.subr.mxu0 0.0
      %617 = vmatpush1.xpose.msra.mxu0 0.0
      %618 = vmatprep.subr.mxu0 0.0
      %619 = vmatpush1.xpose.msra.mxu0 %v588
      %620 = vmatprep.subr.mxu0 0.0
      %621 = vmatpush1.xpose.msra.mxu0 %v586
      %622 = vmatprep.subr.mxu0 0.0
      %623 = vmatpush2.xpose.msra.mxu0 0.0
      %624 = vmatprep.subr.mxu0 0.0
      %625 = vmatpush2.xpose.msra.mxu0 0.0
      %626 = vmatprep.subr.mxu0 0.0
      %627 = vmatpush2.xpose.msra.mxu0 0.0
      %628 = vmatprep.subr.mxu0 0.0
      %629 = vmatpush2.xpose.msra.mxu0 0.0
      %630 = vmatprep.subr.mxu0 0.0
      %631 = vmatpush2.xpose.msra.mxu0 0.0
      %632 = vmatprep.subr.mxu0 0.0
      %633 = vmatpush2.xpose.msra.mxu0 0.0
      %634 = vmatprep.subr.mxu0 0.0
      %635 = vmatpush2.xpose.msra.mxu0 0.0
      %636 = vmatprep.subr.mxu0 0.0
      %637 = vmatpush2.xpose.msra.mxu0 0.0
      %638 = vmatprep.subr.mxu0 0.0
      %639 = vmatpush2.xpose.msra.mxu0 0.0
      %640 = vmatprep.subr.mxu0 0.0
      %641 = vmatpush2.xpose.msra.mxu0 0.0
      %642 = vmatprep.subr.mxu0 0.0
      %643 = vmatpush2.xpose.msra.mxu0 0.0
      %644 = vmatprep.subr.mxu0 0.0
      %645 = vmatpush2.xpose.msra.mxu0 0.0
      %646 = vmatprep.subr.mxu0 0.0
      %647 = vmatpush2.xpose.msra.mxu0 0.0
      %648 = vmatprep.subr.mxu0 0.0
      %649 = vmatpush2.xpose.msra.mxu0 0.0
      %650 = vmatprep.subr.mxu0 0.0
      %651 = vmatpush2.xpose.msra.mxu0 0.0
      %652 = vmatprep.subr.mxu0 0.0
      %653 = vmatpush2.xpose.msra.mxu0 0.0
      %654 = vmatprep.mubr.f32.mxu0 0.0
      %655 = vmatmul.mubr.f32.gmra.mxu0 %v582
      %v656 = vpop.f32.mrf.mxu0
      %v657 = vadd.f32 0.0, %v656
      %v658 = vpop.f32.mrf.mxu0
      %659 = vmatprep.mubr.f32.mxu0 0.0
      %660 = vmatmul.mubr.f32.gmra.mxu0 %v584
      %v661 = vpop.f32.mrf.mxu0
      %v662 = vadd.f32 0.0, %v661
      %v663 = vpop.f32.mrf.mxu0
      %664 = vdwg.mxu0
      %v665 = vmul.f32 %v657, 0.17677669
      %v666 = vmul.f32 %v662, 0.17677669
      %v667 = vadd.f32 %v665, %v170
      %v668 = vadd.f32 %v666, %v171
      %v669 = vsel %vm264, %v667, -inf
      %670 = vmax.xlane.f32.xlu0 %v669
      %v671 = vpop.xlane.xlu0 %670
      %v672 = vsel %vm264, %v668, -inf
      %673 = vmax.xlane.f32.xlu0 %v672
      %v674 = vpop.xlane.xlu0 %673
      %v675 = vsub.f32 %v667, %v671
      %v676 = vsub.f32 %v668, %v674
      %v677 = vmul.f32 %v675, 1.442695
      %v678 = vpow.pop %v677
      %v679 = vmul.f32 %v676, 1.442695
      %v680 = vpow.pop %v679
      %v681 = vsel %vm264, %v678, 0.0
      %682 = vadd.xlane.f32.xlu0 %v681
      %v683 = vpop.xlane.xlu0 %682
      %v684 = vsel %vm264, %v680, 0.0
      %685 = vadd.xlane.f32.xlu0 %v684
      %v686 = vpop.xlane.xlu0 %685
      %v687 = vrcp.pop %v683
      %v688 = vrcp.pop %v686
      %v689 = vmul.f32 %v678, %v687
      %v690 = vmul.f32 %v680, %v688
      %691 = vrot.lane.b32.xlu0 %v166, 64
      %v692 = vpop.permute.xlu0 %691
      %693 = vrot.lane.b32.xlu0 %v169, 64
      %v694 = vpop.permute.xlu0 %693
      %v698 = vsel %vm264, %v689, 0
      %v701 = vsel %vm264, %v690, 0
      %703 = vmatprep.subr.mxu0 0.0
      %704 = vmatpush1.msra.mxu0 0.0
      %705 = vmatprep.subr.mxu0 0.0
      %706 = vmatpush1.msra.mxu0 0.0
      %707 = vmatprep.subr.mxu0 0.0
      %708 = vmatpush1.msra.mxu0 0.0
      %709 = vmatprep.subr.mxu0 0.0
      %710 = vmatpush1.msra.mxu0 0.0
      %711 = vmatprep.subr.mxu0 0.0
      %712 = vmatpush1.msra.mxu0 0.0
      %713 = vmatprep.subr.mxu0 0.0
      %714 = vmatpush1.msra.mxu0 0.0
      %715 = vmatprep.subr.mxu0 0.0
      %716 = vmatpush1.msra.mxu0 0.0
      %717 = vmatprep.subr.mxu0 0.0
      %718 = vmatpush1.msra.mxu0 0.0
      %719 = vmatprep.subr.mxu0 0.0
      %720 = vmatpush1.msra.mxu0 0.0
      %721 = vmatprep.subr.mxu0 0.0
      %722 = vmatpush1.msra.mxu0 0.0
      %723 = vmatprep.subr.mxu0 0.0
      %724 = vmatpush1.msra.mxu0 0.0
      %725 = vmatprep.subr.mxu0 0.0
      %726 = vmatpush1.msra.mxu0 0.0
      %727 = vmatprep.subr.mxu0 0.0
      %728 = vmatpush1.msra.mxu0 0.0
      %729 = vmatprep.subr.mxu0 0.0
      %730 = vmatpush1.msra.mxu0 0.0
      %731 = vmatprep.subr.mxu0 0.0
      %732 = vmatpush1.msra.mxu0 %v694
      %733 = vmatprep.subr.mxu0 0.0
      %734 = vmatpush1.msra.mxu0 %v692
      %735 = vmatprep.subr.mxu0 0.0
      %736 = vmatpush2.msra.mxu0 0.0
      %737 = vmatprep.subr.mxu0 0.0
      %738 = vmatpush2.msra.mxu0 0.0
      %739 = vmatprep.subr.mxu0 0.0
      %740 = vmatpush2.msra.mxu0 0.0
      %741 = vmatprep.subr.mxu0 0.0
      %742 = vmatpush2.msra.mxu0 0.0
      %743 = vmatprep.subr.mxu0 0.0
      %744 = vmatpush2.msra.mxu0 0.0
      %745 = vmatprep.subr.mxu0 0.0
      %746 = vmatpush2.msra.mxu0 0.0
      %747 = vmatprep.subr.mxu0 0.0
      %748 = vmatpush2.msra.mxu0 0.0
      %749 = vmatprep.subr.mxu0 0.0
      %750 = vmatpush2.msra.mxu0 0.0
      %751 = vmatprep.subr.mxu0 0.0
      %752 = vmatpush2.msra.mxu0 0.0
      %753 = vmatprep.subr.mxu0 0.0
      %754 = vmatpush2.msra.mxu0 0.0
      %755 = vmatprep.subr.mxu0 0.0
      %756 = vmatpush2.msra.mxu0 0.0
      %757 = vmatprep.subr.mxu0 0.0
      %758 = vmatpush2.msra.mxu0 0.0
      %759 = vmatprep.subr.mxu0 0.0
      %760 = vmatpush2.msra.mxu0 0.0
      %761 = vmatprep.subr.mxu0 0.0
      %762 = vmatpush2.msra.mxu0 0.0
      %763 = vmatprep.subr.mxu0 0.0
      %764 = vmatpush2.msra.mxu0 0.0
      %765 = vmatprep.subr.mxu0 0.0
      %766 = vmatpush2.msra.mxu0 0.0
      %767 = vmatprep.mubr.f32.mxu0 0.0
      %768 = vmatmul.mubr.f32.gmra.mxu0 %v698
      %v769 = vpop.f32.mrf.mxu0
      %v770 = vadd.f32 0.0, %v769
      %v771 = vpop.f32.mrf.mxu0
      %772 = vmatprep.mubr.f32.mxu0 0.0
      %773 = vmatmul.mubr.f32.gmra.mxu0 %v701
      %v774 = vpop.f32.mrf.mxu0
      %v775 = vadd.f32 0.0, %v774
      %v776 = vpop.f32.mrf.mxu0
      %777 = vdwg.mxu0
      %778 = vrot.lane.b32.xlu0 %v164, 32
      %v779 = vpop.permute.xlu0 %778
      %780 = vrot.lane.b32.xlu0 %v167, 32
      %v781 = vpop.permute.xlu0 %780
      %782 = vrot.lane.b32.xlu0 %v165, 32
      %v783 = vpop.permute.xlu0 %782
      %784 = vrot.lane.b32.xlu0 %v168, 32
      %v785 = vpop.permute.xlu0 %784
      %v786 = vsel %vm172, %v779, 0
      %v788 = vsel %vm172, %v781, 0
      %v790 = vsel %vm172, %v783, 0
      %v792 = vsel %vm172, %v785, 0
      %794 = vmatprep.subr.mxu0 0.0
      %795 = vmatpush1.xpose.msra.mxu0 0.0
      %796 = vmatprep.subr.mxu0 0.0
      %797 = vmatpush1.xpose.msra.mxu0 0.0
      %798 = vmatprep.subr.mxu0 0.0
      %799 = vmatpush1.xpose.msra.mxu0 0.0
      %800 = vmatprep.subr.mxu0 0.0
      %801 = vmatpush1.xpose.msra.mxu0 0.0
      %802 = vmatprep.subr.mxu0 0.0
      %803 = vmatpush1.xpose.msra.mxu0 0.0
      %804 = vmatprep.subr.mxu0 0.0
      %805 = vmatpush1.xpose.msra.mxu0 0.0
      %806 = vmatprep.subr.mxu0 0.0
      %807 = vmatpush1.xpose.msra.mxu0 0.0
      %808 = vmatprep.subr.mxu0 0.0
      %809 = vmatpush1.xpose.msra.mxu0 0.0
      %810 = vmatprep.subr.mxu0 0.0
      %811 = vmatpush1.xpose.msra.mxu0 0.0
      %812 = vmatprep.subr.mxu0 0.0
      %813 = vmatpush1.xpose.msra.mxu0 0.0
      %814 = vmatprep.subr.mxu0 0.0
      %815 = vmatpush1.xpose.msra.mxu0 0.0
      %816 = vmatprep.subr.mxu0 0.0
      %817 = vmatpush1.xpose.msra.mxu0 0.0
      %818 = vmatprep.subr.mxu0 0.0
      %819 = vmatpush1.xpose.msra.mxu0 0.0
      %820 = vmatprep.subr.mxu0 0.0
      %821 = vmatpush1.xpose.msra.mxu0 0.0
      %822 = vmatprep.subr.mxu0 0.0
      %823 = vmatpush1.xpose.msra.mxu0 %v792
      %824 = vmatprep.subr.mxu0 0.0
      %825 = vmatpush1.xpose.msra.mxu0 %v790
      %826 = vmatprep.subr.mxu0 0.0
      %827 = vmatpush2.xpose.msra.mxu0 0.0
      %828 = vmatprep.subr.mxu0 0.0
      %829 = vmatpush2.xpose.msra.mxu0 0.0
      %830 = vmatprep.subr.mxu0 0.0
      %831 = vmatpush2.xpose.msra.mxu0 0.0
      %832 = vmatprep.subr.mxu0 0.0
      %833 = vmatpush2.xpose.msra.mxu0 0.0
      %834 = vmatprep.subr.mxu0 0.0
      %835 = vmatpush2.xpose.msra.mxu0 0.0
      %836 = vmatprep.subr.mxu0 0.0
      %837 = vmatpush2.xpose.msra.mxu0 0.0
      %838 = vmatprep.subr.mxu0 0.0
      %839 = vmatpush2.xpose.msra.mxu0 0.0
      %840 = vmatprep.subr.mxu0 0.0
      %841 = vmatpush2.xpose.msra.mxu0 0.0
      %842 = vmatprep.subr.mxu0 0.0
      %843 = vmatpush2.xpose.msra.mxu0 0.0
      %844 = vmatprep.subr.mxu0 0.0
      %845 = vmatpush2.xpose.msra.mxu0 0.0
      %846 = vmatprep.subr.mxu0 0.0
      %847 = vmatpush2.xpose.msra.mxu0 0.0
      %848 = vmatprep.subr.mxu0 0.0
      %849 = vmatpush2.xpose.msra.mxu0 0.0
      %850 = vmatprep.subr.mxu0 0.0
      %851 = vmatpush2.xpose.msra.mxu0 0.0
      %852 = vmatprep.subr.mxu0 0.0
      %853 = vmatpush2.xpose.msra.mxu0 0.0
      %854 = vmatprep.subr.mxu0 0.0
      %855 = vmatpush2.xpose.msra.mxu0 0.0
      %856 = vmatprep.subr.mxu0 0.0
      %857 = vmatpush2.xpose.msra.mxu0 0.0
      %858 = vmatprep.mubr.f32.mxu0 0.0
      %859 = vmatmul.mubr.f32.gmra.mxu0 %v786
      %v860 = vpop.f32.mrf.mxu0
      %v861 = vadd.f32 0.0, %v860
      %v862 = vpop.f32.mrf.mxu0
      %863 = vmatprep.mubr.f32.mxu0 0.0
      %864 = vmatmul.mubr.f32.gmra.mxu0 %v788
      %v865 = vpop.f32.mrf.mxu0
      %v866 = vadd.f32 0.0, %v865
      %v867 = vpop.f32.mrf.mxu0
      %868 = vdwg.mxu0
      %v869 = vmul.f32 %v861, 0.17677669
      %v870 = vmul.f32 %v866, 0.17677669
      %v871 = vadd.f32 %v869, %v170
      %v872 = vadd.f32 %v870, %v171
      %v873 = vsel %vm264, %v871, -inf
      %874 = vmax.xlane.f32.xlu0 %v873
      %v875 = vpop.xlane.xlu0 %874
      %v876 = vsel %vm264, %v872, -inf
      %877 = vmax.xlane.f32.xlu0 %v876
      %v878 = vpop.xlane.xlu0 %877
      %v879 = vsub.f32 %v871, %v875
      %v880 = vsub.f32 %v872, %v878
      %v881 = vmul.f32 %v879, 1.442695
      %v882 = vpow.pop %v881
      %v883 = vmul.f32 %v880, 1.442695
      %v884 = vpow.pop %v883
      %v885 = vsel %vm264, %v882, 0.0
      %886 = vadd.xlane.f32.xlu0 %v885
      %v887 = vpop.xlane.xlu0 %886
      %v888 = vsel %vm264, %v884, 0.0
      %889 = vadd.xlane.f32.xlu0 %v888
      %v890 = vpop.xlane.xlu0 %889
      %v891 = vrcp.pop %v887
      %v892 = vrcp.pop %v890
      %v893 = vmul.f32 %v882, %v891
      %v894 = vmul.f32 %v884, %v892
      %895 = vrot.lane.b32.xlu0 %v166, 32
      %v896 = vpop.permute.xlu0 %895
      %897 = vrot.lane.b32.xlu0 %v169, 32
      %v898 = vpop.permute.xlu0 %897
      %v902 = vsel %vm264, %v893, 0
      %v905 = vsel %vm264, %v894, 0
      %907 = vmatprep.subr.mxu0 0.0
      %908 = vmatpush1.msra.mxu0 0.0
      %909 = vmatprep.subr.mxu0 0.0
      %910 = vmatpush1.msra.mxu0 0.0
      %911 = vmatprep.subr.mxu0 0.0
      %912 = vmatpush1.msra.mxu0 0.0
      %913 = vmatprep.subr.mxu0 0.0
      %914 = vmatpush1.msra.mxu0 0.0
      %915 = vmatprep.subr.mxu0 0.0
      %916 = vmatpush1.msra.mxu0 0.0
      %917 = vmatprep.subr.mxu0 0.0
      %918 = vmatpush1.msra.mxu0 0.0
      %919 = vmatprep.subr.mxu0 0.0
      %920 = vmatpush1.msra.mxu0 0.0
      %921 = vmatprep.subr.mxu0 0.0
      %922 = vmatpush1.msra.mxu0 0.0
      %923 = vmatprep.subr.mxu0 0.0
      %924 = vmatpush1.msra.mxu0 0.0
      %925 = vmatprep.subr.mxu0 0.0
      %926 = vmatpush1.msra.mxu0 0.0
      %927 = vmatprep.subr.mxu0 0.0
      %928 = vmatpush1.msra.mxu0 0.0
      %929 = vmatprep.subr.mxu0 0.0
      %930 = vmatpush1.msra.mxu0 0.0
      %931 = vmatprep.subr.mxu0 0.0
      %932 = vmatpush1.msra.mxu0 0.0
      %933 = vmatprep.subr.mxu0 0.0
      %934 = vmatpush1.msra.mxu0 0.0
      %935 = vmatprep.subr.mxu0 0.0
      %936 = vmatpush1.msra.mxu0 %v898
      %937 = vmatprep.subr.mxu0 0.0
      %938 = vmatpush1.msra.mxu0 %v896
      %939 = vmatprep.subr.mxu0 0.0
      %940 = vmatpush2.msra.mxu0 0.0
      %941 = vmatprep.subr.mxu0 0.0
      %942 = vmatpush2.msra.mxu0 0.0
      %943 = vmatprep.subr.mxu0 0.0
      %944 = vmatpush2.msra.mxu0 0.0
      %945 = vmatprep.subr.mxu0 0.0
      %946 = vmatpush2.msra.mxu0 0.0
      %947 = vmatprep.subr.mxu0 0.0
      %948 = vmatpush2.msra.mxu0 0.0
      %949 = vmatprep.subr.mxu0 0.0
      %950 = vmatpush2.msra.mxu0 0.0
      %951 = vmatprep.subr.mxu0 0.0
      %952 = vmatpush2.msra.mxu0 0.0
      %953 = vmatprep.subr.mxu0 0.0
      %954 = vmatpush2.msra.mxu0 0.0
      %955 = vmatprep.subr.mxu0 0.0
      %956 = vmatpush2.msra.mxu0 0.0
      %957 = vmatprep.subr.mxu0 0.0
      %958 = vmatpush2.msra.mxu0 0.0
      %959 = vmatprep.subr.mxu0 0.0
      %960 = vmatpush2.msra.mxu0 0.0
      %961 = vmatprep.subr.mxu0 0.0
      %962 = vmatpush2.msra.mxu0 0.0
      %963 = vmatprep.subr.mxu0 0.0
      %964 = vmatpush2.msra.mxu0 0.0
      %965 = vmatprep.subr.mxu0 0.0
      %966 = vmatpush2.msra.mxu0 0.0
      %967 = vmatprep.subr.mxu0 0.0
      %968 = vmatpush2.msra.mxu0 0.0
      %969 = vmatprep.subr.mxu0 0.0
      %970 = vmatpush2.msra.mxu0 0.0
      %971 = vmatprep.mubr.f32.mxu0 0.0
      %972 = vmatmul.mubr.f32.gmra.mxu0 %v902
      %v973 = vpop.f32.mrf.mxu0
      %v974 = vadd.f32 0.0, %v973
      %v975 = vpop.f32.mrf.mxu0
      %976 = vmatprep.mubr.f32.mxu0 0.0
      %977 = vmatmul.mubr.f32.gmra.mxu0 %v905
      %v978 = vpop.f32.mrf.mxu0
      %v979 = vadd.f32 0.0, %v978
      %v980 = vpop.f32.mrf.mxu0
      %981 = vdwg.mxu0
      %984 = vrot.lane.b32.xlu0 %v566, 32
      %v985 = vpop.permute.xlu0 %984
      %986 = vrot.lane.b32.xlu0 %v571, 32
      %v987 = vpop.permute.xlu0 %986
      %992 = vrot.lane.b32.xlu0 %v770, 64
      %v993 = vpop.permute.xlu0 %992
      %994 = vrot.lane.b32.xlu0 %v775, 64
      %v995 = vpop.permute.xlu0 %994
      %1000 = vrot.lane.b32.xlu0 %v974, 96
      %v1001 = vpop.permute.xlu0 %1000
      %1002 = vrot.lane.b32.xlu0 %v979, 96
      %v1003 = vpop.permute.xlu0 %1002
      %v1006 = vsel %vm172, %v360, %v985
      %v1007 = vsel %vm172, %v365, %v987
      %vm1008 = vcmask 523264
      %v1009 = vsel %vm1008, %v1006, %v993
      %v1010 = vsel %vm1008, %v1007, %v995
      %vm1011 = vcmask 785408
      %v1012 = vsel %vm1011, %v1009, %v1001
      %v1013 = vsel %vm1011, %v1010, %v1003
      %1014 = vst [vmem:[%s163] sm:$0xff] %v1012
      %1015 = vst [vmem:[%s163 + $0x8] sm:$0xff] %v1013
      %p1016 = scmp.lt.s32.totalorder %s13, 1
      %s1017 = scalar_select %p1016, %s13, 1
      %s1018 = smul.addr %s1017, 2
      %s1019 = smul.addr %s1018, 8
      %s1020 = scalar_lea.vmem %s2, %s1019
      // Predicated region
      $region29: #{encoder_forward.8} parent=27 // pred_check
        %p1021 = pneg %p83
      $region30: #{encoder_forward.8} parent=27 // pred_check_branch
        %1023 = sbr.rel (%p1021) target = $region32
      $region31: #{encoder_forward.8} parent=27 // pred_region
        _
      $region32: #{encoder_forward.8} parent=27 // pred_fallthru
        _
    $region28: #{encoder_forward.8} parent=5 // pred_fallthru
      _
    %p1024 = scmp.le.s32.totalorder 2, %s8
    // Predicated region
    $region33: #{encoder_forward.8} parent=5 // pred_check
      %p1025 = pneg %p1024
    $region34: #{encoder_forward.8} parent=5 // pred_check_branch
      %1027 = sbr.rel (%p1025) target = $region36
    $region35: #{encoder_forward.8} parent=5 // pred_region
      %s1028 = ssub.s32 %s8, 2
      // Predicated region
      $region37: #{encoder_forward.8} parent=35 // pred_check
        %p1029 = pneg %p89
      $region38: #{encoder_forward.8} parent=35 // pred_check_branch
        %1031 = sbr.rel (%p1029) target = $region40
      $region39: #{encoder_forward.8} parent=35 // pred_region
        %p1032 = scmp.lt.s32.totalorder %s14, 1
        %s1033 = scalar_select %p1032, %s14, 1
        %s1034 = smul.addr %s1033, 2
        %s1035 = smul.addr %s1034, 8
        %s1036 = scalar_lea.vmem %s2, %s1035
      $region40: #{encoder_forward.8} parent=35 // pred_fallthru
        _
    $region36: #{encoder_forward.8} parent=5 // pred_fallthru
      _
  $region6: #{encoder_forward.8} parent=0 // loop_footer
    %s12 = sadd.s32 1, %s8
  $region7: #{encoder_forward.8} parent=0 // loop_footer_branch
    %7 = sbr.rel target = $region3
  $region8: #{encoder_forward.8} parent=0 // loop_exit
    _

</llo_original>
